<compile_context>
chip_gen: v7x
topology: tpu7x:2x2x1
jax: 0.10.0
libtpu: 0.0.40
codegen_flags: <defaults>
</compile_context>

<pallas_src>
import functools

import jax
import jax.numpy as jnp
from jax.experimental import pallas as pl
from jax.experimental.pallas import tpu as pltpu

LATENT_DIM = 64
IN_DIM = 28 * 28          # 784
IN_PAD = 896              # 7 * 128 -> lane-dense padded input / recon width
H1, H2 = 512, 256


def _round_up(n, m):
    return (n + m - 1) // m * m


def _mm(a, w_ref, b_ref, act=None):
    """Matmul with bf16 MXU inputs, f32 accumulation; bias/act in f32."""
    y = jnp.dot(a.astype(jnp.bfloat16), w_ref[...],
                preferred_element_type=jnp.float32) + b_ref[...]
    if act == "relu":
        y = jnp.maximum(y, 0.0)
    elif act == "sigmoid":
        y = jax.nn.sigmoid(y)
    return y


def vae_kernel(x_ref, eps_ref,
               w1_ref, b1_ref, w2_ref, b2_ref,
               wml_ref, bml_ref,
               wd1_ref, bd1_ref, wd2_ref, bd2_ref, wd3_ref, bd3_ref,
               recon_ref, mulv_ref):
    x = x_ref[...]                                        # (TM, 896) f32

    # --- encoder ---
    h = _mm(x, w1_ref, b1_ref, act="relu")                # (TM, 512)
    h = _mm(h, w2_ref, b2_ref, act="relu")                # (TM, 256)

    # --- fused mu|logvar head: one 128-lane matmul ---
    mulv = _mm(h, wml_ref, bml_ref)                       # (TM, 128)
    mu = mulv[:, :LATENT_DIM]                             # (TM, 64)
    logvar = mulv[:, LATENT_DIM:]                         # (TM, 64)

    # --- reparameterize: z = mu + eps * exp(0.5 * logvar)  (f32 VPU/EUP) ---
    z = mu + eps_ref[...] * jnp.exp(0.5 * logvar)         # (TM, 64)

    # --- decoder ---
    d = _mm(z, wd1_ref, bd1_ref, act="relu")              # (TM, 256)
    d = _mm(d, wd2_ref, bd2_ref, act="relu")              # (TM, 512)
    recon = _mm(d, wd3_ref, bd3_ref, act="sigmoid")       # (TM, 896)

    recon_ref[...] = recon
    mulv_ref[...] = mulv


def init_params(key, latent_dim=LATENT_DIM):
    """PyTorch-style uniform(+-1/sqrt(fan_in)) init.

    Weights are (in, out) = W^T, stored bf16 with lane-dense padding; biases
    stay f32, shape (1, out).
    """
    def lin(k, fan_in, fan_out):
        kw, kb = jax.random.split(k)
        bound = 1.0 / (fan_in ** 0.5)
        w = jax.random.uniform(kw, (fan_in, fan_out), jnp.float32, -bound, bound)
        b = jax.random.uniform(kb, (1, fan_out), jnp.float32, -bound, bound)
        return w, b

    ks = jax.random.split(key, 7)
    w1, b1 = lin(ks[0], IN_DIM, H1)
    w2, b2 = lin(ks[1], H1, H2)
    wmu, bmu = lin(ks[2], H2, latent_dim)
    wlv, blv = lin(ks[3], H2, latent_dim)
    wd1, bd1 = lin(ks[4], latent_dim, H2)
    wd2, bd2 = lin(ks[5], H2, H1)
    wd3, bd3 = lin(ks[6], H1, IN_DIM)

    # Pad 784 -> 896: extra w1 rows are zero (x cols are zero-padded too);
    # extra wd3 cols / bd3 entries are zero and sliced away in the wrapper.
    w1p = jnp.zeros((IN_PAD, H1), jnp.float32).at[:IN_DIM].set(w1)
    wd3p = jnp.zeros((H1, IN_PAD), jnp.float32).at[:, :IN_DIM].set(wd3)
    bd3p = jnp.zeros((1, IN_PAD), jnp.float32).at[:, :IN_DIM].set(bd3)

    # Fused mu|logvar head -> single lane-dense (256, 128) weight.
    wml = jnp.concatenate([wmu, wlv], axis=1)             # (256, 128)
    bml = jnp.concatenate([bmu, blv], axis=1)             # (1, 128)

    bf16 = jnp.bfloat16
    return {
        "w1": w1p.astype(bf16), "b1": b1,
        "w2": w2.astype(bf16), "b2": b2,
        "wml": wml.astype(bf16), "bml": bml,
        "wd1": wd1.astype(bf16), "bd1": bd1,
        "wd2": wd2.astype(bf16), "bd2": bd2,
        "wd3": wd3p.astype(bf16), "bd3": bd3p,
    }


@functools.partial(jax.jit, static_argnames=("latent_dim",))
def vae_forward(x, eps, params, latent_dim=LATENT_DIM):
    B = x.shape[0]
    x_flat = x.reshape(B, -1).astype(jnp.float32)         # (B, 784)

    # Batch tile: 256 rows fills the MXU on v6e/v7x; small batches just get
    # padded up to a single 8-aligned tile.
    TM = 256 if B >= 256 else max(8, _round_up(B, 8))
    B_pad = _round_up(B, TM)

    xp = jnp.zeros((B_pad, IN_PAD), jnp.float32).at[:B, :IN_DIM].set(x_flat)
    ep = jnp.zeros((B_pad, latent_dim), jnp.float32).at[:B].set(eps)

    def row_spec(cols):
        return pl.BlockSpec((TM, cols), lambda i: (i, 0))

    def resident(arr):
        # Full-array block, constant block index -> stays resident across grid.
        return pl.BlockSpec(arr.shape, lambda i: (0, 0))

    weight_args = (
        params["w1"], params["b1"], params["w2"], params["b2"],
        params["wml"], params["bml"],
        params["wd1"], params["bd1"], params["wd2"], params["bd2"],
        params["wd3"], params["bd3"],
    )

    in_specs = [row_spec(IN_PAD), row_spec(latent_dim)] + [
        resident(w) for w in weight_args
    ]
    out_specs = (row_spec(IN_PAD), row_spec(2 * latent_dim))
    out_shape = (
        jax.ShapeDtypeStruct((B_pad, IN_PAD), jnp.float32),        # recon (padded)
        jax.ShapeDtypeStruct((B_pad, 2 * latent_dim), jnp.float32),  # mu|logvar
    )

    recon_pad, mulv = pl.pallas_call(
        vae_kernel,
        out_shape=out_shape,
        grid=(B_pad // TM,),
        in_specs=in_specs,
        out_specs=out_specs,
        compiler_params=pltpu.CompilerParams(
            dimension_semantics=("parallel",),   # megacore-shard batch on v7x
            vmem_limit_bytes=24 << 20,           # generation-safe (v7x: 64 MiB phys)
        ),
    )(xp, ep, *weight_args)

    recon_x = recon_pad[:B, :IN_DIM].reshape(B, 1, 28, 28)
    mu = mulv[:B, :latent_dim]
    logvar = mulv[:B, latent_dim:]
    return recon_x, mu, logvar


def vae_reference(x, eps, params):
    """Pure-JAX reference with the same numerics (bf16 MXU inputs, f32 acc)."""
    B = x.shape[0]

    def mm(a, w, b, act=None):
        y = jnp.dot(a.astype(jnp.bfloat16), w,
                    preferred_element_type=jnp.float32) + b
        if act == "relu":
            y = jnp.maximum(y, 0.0)
        elif act == "sigmoid":
            y = jax.nn.sigmoid(y)
        return y

    h = jnp.pad(x.reshape(B, -1), ((0, 0), (0, IN_PAD - IN_DIM)))
    h = mm(h, params["w1"], params["b1"], "relu")
    h = mm(h, params["w2"], params["b2"], "relu")
    mulv = mm(h, params["wml"], params["bml"])
    mu, logvar = mulv[:, :LATENT_DIM], mulv[:, LATENT_DIM:]
    z = mu + eps * jnp.exp(0.5 * logvar)
    d = mm(z, params["wd1"], params["bd1"], "relu")
    d = mm(d, params["wd2"], params["bd2"], "relu")
    recon = mm(d, params["wd3"], params["bd3"], "sigmoid")
    return recon[:, :IN_DIM].reshape(B, 1, 28, 28), mu, logvar


# TODO(synk): loss_function (MSE + KL) is not part of forward(); not implemented
# as a kernel.  torch.randn_like(std) is replaced by an explicit `eps` input.

if __name__ == "__main__":
    key = jax.random.PRNGKey(0)
    k_param, k_x, k_eps = jax.random.split(key, 3)

    B = 8
    params = init_params(k_param)
    x = jax.random.uniform(k_x, (B, 1, 28, 28), jnp.float32)       # image-like
    eps = jax.random.normal(k_eps, (B, LATENT_DIM), jnp.float32)   # reparam noise

    recon_x, mu, logvar = vae_forward(x, eps, params)
    jax.block_until_ready((recon_x, mu, logvar))

    # correctness check vs pure-JAX reference (same bf16/f32 numerics)
    r_ref, mu_ref, lv_ref = vae_reference(x, eps, params)
    assert recon_x.shape == (B, 1, 28, 28)
    assert mu.shape == (B, LATENT_DIM) and logvar.shape == (B, LATENT_DIM)
    assert jnp.allclose(recon_x, r_ref, atol=2e-3, rtol=2e-3), float(
        jnp.max(jnp.abs(recon_x - r_ref)))
    assert jnp.allclose(mu, mu_ref, atol=2e-3, rtol=2e-3), float(
        jnp.max(jnp.abs(mu - mu_ref)))
    assert jnp.allclose(logvar, lv_ref, atol=2e-3, rtol=2e-3), float(
        jnp.max(jnp.abs(logvar - lv_ref)))

    print("KERNEL_OK")
</pallas_src>

<mosaic_0001>
module attributes {stable_mosaic.version = 11 : i64} {
  func.func @vae_kernel(%arg0: i32, %arg1: memref<8x896xf32, #tpu.memory_space<vmem>>, %arg2: memref<8x64xf32, #tpu.memory_space<vmem>>, %arg3: memref<896x512xbf16, #tpu.memory_space<vmem>>, %arg4: memref<1x512xf32, #tpu.memory_space<vmem>>, %arg5: memref<512x256xbf16, #tpu.memory_space<vmem>>, %arg6: memref<1x256xf32, #tpu.memory_space<vmem>>, %arg7: memref<256x128xbf16, #tpu.memory_space<vmem>>, %arg8: memref<1x128xf32, #tpu.memory_space<vmem>>, %arg9: memref<64x256xbf16, #tpu.memory_space<vmem>>, %arg10: memref<1x256xf32, #tpu.memory_space<vmem>>, %arg11: memref<256x512xbf16, #tpu.memory_space<vmem>>, %arg12: memref<1x512xf32, #tpu.memory_space<vmem>>, %arg13: memref<512x896xbf16, #tpu.memory_space<vmem>>, %arg14: memref<1x896xf32, #tpu.memory_space<vmem>>, %arg15: memref<8x896xf32, #tpu.memory_space<vmem>>, %arg16: memref<8x128xf32, #tpu.memory_space<vmem>>) attributes {dimension_semantics = [#tpu.dimension_semantics<parallel>], iteration_bounds = array<i64: 1>, scalar_prefetch = 0 : i64, scratch_operands = 0 : i64, tpu.core_type = #tpu.core_type<tc>, window_params = [{transform_indices = @transform_0, window_bounds = array<i64: 8, 896>}, {transform_indices = @transform_1, window_bounds = array<i64: 8, 64>}, {pipeline_mode = #tpu.pipeline_mode<synchronous>, transform_indices = @transform_2, window_bounds = array<i64: 896, 512>}, {pipeline_mode = #tpu.pipeline_mode<synchronous>, transform_indices = @transform_3, window_bounds = array<i64: 1, 512>}, {pipeline_mode = #tpu.pipeline_mode<synchronous>, transform_indices = @transform_4, window_bounds = array<i64: 512, 256>}, {pipeline_mode = #tpu.pipeline_mode<synchronous>, transform_indices = @transform_5, window_bounds = array<i64: 1, 256>}, {pipeline_mode = #tpu.pipeline_mode<synchronous>, transform_indices = @transform_6, window_bounds = array<i64: 256, 128>}, {pipeline_mode = #tpu.pipeline_mode<synchronous>, transform_indices = @transform_7, window_bounds = array<i64: 1, 128>}, {pipeline_mode = #tpu.pipeline_mode<synchronous>, transform_indices = @transform_8, window_bounds = array<i64: 64, 256>}, {pipeline_mode = #tpu.pipeline_mode<synchronous>, transform_indices = @transform_9, window_bounds = array<i64: 1, 256>}, {pipeline_mode = #tpu.pipeline_mode<synchronous>, transform_indices = @transform_10, window_bounds = array<i64: 256, 512>}, {pipeline_mode = #tpu.pipeline_mode<synchronous>, transform_indices = @transform_11, window_bounds = array<i64: 1, 512>}, {pipeline_mode = #tpu.pipeline_mode<synchronous>, transform_indices = @transform_12, window_bounds = array<i64: 512, 896>}, {pipeline_mode = #tpu.pipeline_mode<synchronous>, transform_indices = @transform_13, window_bounds = array<i64: 1, 896>}, {transform_indices = @transform_14, window_bounds = array<i64: 8, 896>}, {transform_indices = @transform_15, window_bounds = array<i64: 8, 128>}]} {
    %c0 = arith.constant 0 : index
    %c0_0 = arith.constant 0 : index
    %0 = vector.load %arg1[%c0, %c0_0] : memref<8x896xf32, #tpu.memory_space<vmem>>, vector<8x896xf32>
    %1 = arith.truncf %0 : vector<8x896xf32> to vector<8x896xbf16>
    %c0_1 = arith.constant 0 : index
    %c0_2 = arith.constant 0 : index
    %2 = vector.load %arg3[%c0_1, %c0_2] : memref<896x512xbf16, #tpu.memory_space<vmem>>, vector<896x512xbf16>
    %cst = arith.constant dense<0.000000e+00> : vector<8x512xf32>
    %3 = tpu.matmul %1, %2, %cst {dimension_numbers = #tpu.dot_dimension_numbers<[1], [0], [0], [1], [0, 0, 1, 1], [], []>} : vector<8x896xbf16>, vector<896x512xbf16>, vector<8x512xf32> -> vector<8x512xf32>
    %c0_3 = arith.constant 0 : index
    %c0_4 = arith.constant 0 : index
    %4 = vector.load %arg4[%c0_3, %c0_4] : memref<1x512xf32, #tpu.memory_space<vmem>>, vector<1x512xf32>
    %5 = vector.broadcast %4 : vector<1x512xf32> to vector<8x512xf32>
    %6 = arith.addf %3, %5 : vector<8x512xf32>
    %cst_5 = arith.constant 0.000000e+00 : f32
    %7 = vector.broadcast %cst_5 : f32 to vector<8x512xf32>
    %8 = arith.maximumf %6, %7 : vector<8x512xf32>
    %9 = arith.truncf %8 : vector<8x512xf32> to vector<8x512xbf16>
    %c0_6 = arith.constant 0 : index
    %c0_7 = arith.constant 0 : index
    %10 = vector.load %arg5[%c0_6, %c0_7] : memref<512x256xbf16, #tpu.memory_space<vmem>>, vector<512x256xbf16>
    %cst_8 = arith.constant dense<0.000000e+00> : vector<8x256xf32>
    %11 = tpu.matmul %9, %10, %cst_8 {dimension_numbers = #tpu.dot_dimension_numbers<[1], [0], [0], [1], [0, 0, 1, 1], [], []>} : vector<8x512xbf16>, vector<512x256xbf16>, vector<8x256xf32> -> vector<8x256xf32>
    %c0_9 = arith.constant 0 : index
    %c0_10 = arith.constant 0 : index
    %12 = vector.load %arg6[%c0_9, %c0_10] : memref<1x256xf32, #tpu.memory_space<vmem>>, vector<1x256xf32>
    %13 = vector.broadcast %12 : vector<1x256xf32> to vector<8x256xf32>
    %14 = arith.addf %11, %13 : vector<8x256xf32>
    %cst_11 = arith.constant 0.000000e+00 : f32
    %15 = vector.broadcast %cst_11 : f32 to vector<8x256xf32>
    %16 = arith.maximumf %14, %15 : vector<8x256xf32>
    %17 = arith.truncf %16 : vector<8x256xf32> to vector<8x256xbf16>
    %c0_12 = arith.constant 0 : index
    %c0_13 = arith.constant 0 : index
    %18 = vector.load %arg7[%c0_12, %c0_13] : memref<256x128xbf16, #tpu.memory_space<vmem>>, vector<256x128xbf16>
    %cst_14 = arith.constant dense<0.000000e+00> : vector<8x128xf32>
    %19 = tpu.matmul %17, %18, %cst_14 {dimension_numbers = #tpu.dot_dimension_numbers<[1], [0], [0], [1], [0, 0, 1, 1], [], []>} : vector<8x256xbf16>, vector<256x128xbf16>, vector<8x128xf32> -> vector<8x128xf32>
    %c0_15 = arith.constant 0 : index
    %c0_16 = arith.constant 0 : index
    %20 = vector.load %arg8[%c0_15, %c0_16] : memref<1x128xf32, #tpu.memory_space<vmem>>, vector<1x128xf32>
    %21 = vector.broadcast %20 : vector<1x128xf32> to vector<8x128xf32>
    %22 = arith.addf %19, %21 : vector<8x128xf32>
    %23 = vector.extract_strided_slice %22 {offsets = [0, 0], sizes = [8, 64], strides = [1, 1]} : vector<8x128xf32> to vector<8x64xf32>
    %24 = vector.extract_strided_slice %22 {offsets = [0, 64], sizes = [8, 64], strides = [1, 1]} : vector<8x128xf32> to vector<8x64xf32>
    %c0_17 = arith.constant 0 : index
    %c0_18 = arith.constant 0 : index
    %25 = vector.load %arg2[%c0_17, %c0_18] : memref<8x64xf32, #tpu.memory_space<vmem>>, vector<8x64xf32>
    %cst_19 = arith.constant 5.000000e-01 : f32
    %26 = vector.broadcast %cst_19 : f32 to vector<8x64xf32>
    %27 = arith.mulf %26, %24 : vector<8x64xf32>
    %28 = math.exp %27 : vector<8x64xf32>
    %29 = arith.mulf %25, %28 : vector<8x64xf32>
    %30 = arith.addf %23, %29 : vector<8x64xf32>
    %31 = arith.truncf %30 : vector<8x64xf32> to vector<8x64xbf16>
    %c0_20 = arith.constant 0 : index
    %c0_21 = arith.constant 0 : index
    %32 = vector.load %arg9[%c0_20, %c0_21] : memref<64x256xbf16, #tpu.memory_space<vmem>>, vector<64x256xbf16>
    %cst_22 = arith.constant dense<0.000000e+00> : vector<8x256xf32>
    %33 = tpu.matmul %31, %32, %cst_22 {dimension_numbers = #tpu.dot_dimension_numbers<[1], [0], [0], [1], [0, 0, 1, 1], [], []>} : vector<8x64xbf16>, vector<64x256xbf16>, vector<8x256xf32> -> vector<8x256xf32>
    %c0_23 = arith.constant 0 : index
    %c0_24 = arith.constant 0 : index
    %34 = vector.load %arg10[%c0_23, %c0_24] : memref<1x256xf32, #tpu.memory_space<vmem>>, vector<1x256xf32>
    %35 = vector.broadcast %34 : vector<1x256xf32> to vector<8x256xf32>
    %36 = arith.addf %33, %35 : vector<8x256xf32>
    %cst_25 = arith.constant 0.000000e+00 : f32
    %37 = vector.broadcast %cst_25 : f32 to vector<8x256xf32>
    %38 = arith.maximumf %36, %37 : vector<8x256xf32>
    %39 = arith.truncf %38 : vector<8x256xf32> to vector<8x256xbf16>
    %c0_26 = arith.constant 0 : index
    %c0_27 = arith.constant 0 : index
    %40 = vector.load %arg11[%c0_26, %c0_27] : memref<256x512xbf16, #tpu.memory_space<vmem>>, vector<256x512xbf16>
    %cst_28 = arith.constant dense<0.000000e+00> : vector<8x512xf32>
    %41 = tpu.matmul %39, %40, %cst_28 {dimension_numbers = #tpu.dot_dimension_numbers<[1], [0], [0], [1], [0, 0, 1, 1], [], []>} : vector<8x256xbf16>, vector<256x512xbf16>, vector<8x512xf32> -> vector<8x512xf32>
    %c0_29 = arith.constant 0 : index
    %c0_30 = arith.constant 0 : index
    %42 = vector.load %arg12[%c0_29, %c0_30] : memref<1x512xf32, #tpu.memory_space<vmem>>, vector<1x512xf32>
    %43 = vector.broadcast %42 : vector<1x512xf32> to vector<8x512xf32>
    %44 = arith.addf %41, %43 : vector<8x512xf32>
    %cst_31 = arith.constant 0.000000e+00 : f32
    %45 = vector.broadcast %cst_31 : f32 to vector<8x512xf32>
    %46 = arith.maximumf %44, %45 : vector<8x512xf32>
    %47 = arith.truncf %46 : vector<8x512xf32> to vector<8x512xbf16>
    %c0_32 = arith.constant 0 : index
    %c0_33 = arith.constant 0 : index
    %48 = vector.load %arg13[%c0_32, %c0_33] : memref<512x896xbf16, #tpu.memory_space<vmem>>, vector<512x896xbf16>
    %cst_34 = arith.constant dense<0.000000e+00> : vector<8x896xf32>
    %49 = tpu.matmul %47, %48, %cst_34 {dimension_numbers = #tpu.dot_dimension_numbers<[1], [0], [0], [1], [0, 0, 1, 1], [], []>} : vector<8x512xbf16>, vector<512x896xbf16>, vector<8x896xf32> -> vector<8x896xf32>
    %c0_35 = arith.constant 0 : index
    %c0_36 = arith.constant 0 : index
    %50 = vector.load %arg14[%c0_35, %c0_36] : memref<1x896xf32, #tpu.memory_space<vmem>>, vector<1x896xf32>
    %51 = vector.broadcast %50 : vector<1x896xf32> to vector<8x896xf32>
    %52 = arith.addf %49, %51 : vector<8x896xf32>
    %53 = arith.negf %52 : vector<8x896xf32>
    %54 = math.exp %53 : vector<8x896xf32>
    %cst_37 = arith.constant 1.000000e+00 : f32
    %55 = vector.broadcast %cst_37 : f32 to vector<8x896xf32>
    %56 = arith.addf %55, %54 : vector<8x896xf32>
    %57 = arith.divf %55, %56 : vector<8x896xf32>
    %c0_38 = arith.constant 0 : index
    %c0_39 = arith.constant 0 : index
    %58 = vector.load %arg15[%c0_38, %c0_39] : memref<8x896xf32, #tpu.memory_space<vmem>>, vector<8x896xf32>
    tpu.vector_store %arg15[%c0_38, %c0_39], %57 {strides = array<i32>} : memref<8x896xf32, #tpu.memory_space<vmem>>, vector<8x896xf32>,
    %c0_40 = arith.constant 0 : index
    %c0_41 = arith.constant 0 : index
    %59 = vector.load %arg16[%c0_40, %c0_41] : memref<8x128xf32, #tpu.memory_space<vmem>>, vector<8x128xf32>
    tpu.vector_store %arg16[%c0_40, %c0_41], %22 {strides = array<i32>} : memref<8x128xf32, #tpu.memory_space<vmem>>, vector<8x128xf32>,
    return
  }
  func.func @transform_0(%arg0: i32) -> (i32, i32) {
    %c0_i32 = arith.constant 0 : i32
    %c0_i32_0 = arith.constant 0 : i32
    return %arg0, %c0_i32 : i32, i32
  }
  func.func @transform_1(%arg0: i32) -> (i32, i32) {
    %c0_i32 = arith.constant 0 : i32
    %c0_i32_0 = arith.constant 0 : i32
    return %arg0, %c0_i32 : i32, i32
  }
  func.func @transform_2(%arg0: i32) -> (i32, i32) {
    %c0_i32 = arith.constant 0 : i32
    %c0_i32_0 = arith.constant 0 : i32
    %c0_i32_1 = arith.constant 0 : i32
    return %c0_i32, %c0_i32_0 : i32, i32
  }
  func.func @transform_3(%arg0: i32) -> (i32, i32) {
    %c0_i32 = arith.constant 0 : i32
    %c0_i32_0 = arith.constant 0 : i32
    %c0_i32_1 = arith.constant 0 : i32
    return %c0_i32, %c0_i32_0 : i32, i32
  }
  func.func @transform_4(%arg0: i32) -> (i32, i32) {
    %c0_i32 = arith.constant 0 : i32
    %c0_i32_0 = arith.constant 0 : i32
    %c0_i32_1 = arith.constant 0 : i32
    return %c0_i32, %c0_i32_0 : i32, i32
  }
  func.func @transform_5(%arg0: i32) -> (i32, i32) {
    %c0_i32 = arith.constant 0 : i32
    %c0_i32_0 = arith.constant 0 : i32
    %c0_i32_1 = arith.constant 0 : i32
    return %c0_i32, %c0_i32_0 : i32, i32
  }
  func.func @transform_6(%arg0: i32) -> (i32, i32) {
    %c0_i32 = arith.constant 0 : i32
    %c0_i32_0 = arith.constant 0 : i32
    %c0_i32_1 = arith.constant 0 : i32
    return %c0_i32, %c0_i32_0 : i32, i32
  }
  func.func @transform_7(%arg0: i32) -> (i32, i32) {
    %c0_i32 = arith.constant 0 : i32
    %c0_i32_0 = arith.constant 0 : i32
    %c0_i32_1 = arith.constant 0 : i32
    return %c0_i32, %c0_i32_0 : i32, i32
  }
  func.func @transform_8(%arg0: i32) -> (i32, i32) {
    %c0_i32 = arith.constant 0 : i32
    %c0_i32_0 = arith.constant 0 : i32
    %c0_i32_1 = arith.constant 0 : i32
    return %c0_i32, %c0_i32_0 : i32, i32
  }
  func.func @transform_9(%arg0: i32) -> (i32, i32) {
    %c0_i32 = arith.constant 0 : i32
    %c0_i32_0 = arith.constant 0 : i32
    %c0_i32_1 = arith.constant 0 : i32
    return %c0_i32, %c0_i32_0 : i32, i32
  }
  func.func @transform_10(%arg0: i32) -> (i32, i32) {
    %c0_i32 = arith.constant 0 : i32
    %c0_i32_0 = arith.constant 0 : i32
    %c0_i32_1 = arith.constant 0 : i32
    return %c0_i32, %c0_i32_0 : i32, i32
  }
  func.func @transform_11(%arg0: i32) -> (i32, i32) {
    %c0_i32 = arith.constant 0 : i32
    %c0_i32_0 = arith.constant 0 : i32
    %c0_i32_1 = arith.constant 0 : i32
    return %c0_i32, %c0_i32_0 : i32, i32
  }
  func.func @transform_12(%arg0: i32) -> (i32, i32) {
    %c0_i32 = arith.constant 0 : i32
    %c0_i32_0 = arith.constant 0 : i32
    %c0_i32_1 = arith.constant 0 : i32
    return %c0_i32, %c0_i32_0 : i32, i32
  }
  func.func @transform_13(%arg0: i32) -> (i32, i32) {
    %c0_i32 = arith.constant 0 : i32
    %c0_i32_0 = arith.constant 0 : i32
    %c0_i32_1 = arith.constant 0 : i32
    return %c0_i32, %c0_i32_0 : i32, i32
  }
  func.func @transform_14(%arg0: i32) -> (i32, i32) {
    %c0_i32 = arith.constant 0 : i32
    %c0_i32_0 = arith.constant 0 : i32
    return %arg0, %c0_i32 : i32, i32
  }
  func.func @transform_15(%arg0: i32) -> (i32, i32) {
    %c0_i32 = arith.constant 0 : i32
    %c0_i32_0 = arith.constant 0 : i32
    return %arg0, %c0_i32 : i32, i32
  }
}

</mosaic_0001>

<llo_original>
// kernel: vae_forward.1
$region0: #{vae_forward.1}
  #allocation0 [shape = 'u32[]', space=smem, size = 0x4, offset = 0x4, fixed_abs, tag = 'smem constant byte address 0x4 - core index']
  #allocation1 [shape = 'u32[144,128]{1,0:T(1,128)}', space=vmem, size = 0x12000, scoped, tag = 'internal scratch']
  %s0 = inlined_call_operand.vmem [shape: f32[8,896], index: 0, kind: input, shape index: {}]
  %s1 = inlined_call_operand.vmem [shape: f32[8,64], index: 1, kind: input, shape index: {}]
  %s2 = inlined_call_operand.hbm [shape: bf16[896,512], index: 2, kind: input, shape index: {}]
  %s3 = inlined_call_operand.vmem [shape: f32[1,512], index: 3, kind: input, shape index: {}]
  %s4 = inlined_call_operand.vmem [shape: bf16[512,256], index: 4, kind: input, shape index: {}]
  %s5 = inlined_call_operand.vmem [shape: f32[1,256], index: 5, kind: input, shape index: {}]
  %s6 = inlined_call_operand.vmem [shape: bf16[256,128], index: 6, kind: input, shape index: {}]
  %s7 = inlined_call_operand.vmem [shape: f32[1,128], index: 7, kind: input, shape index: {}]
  %s8 = inlined_call_operand.vmem [shape: bf16[64,256], index: 8, kind: input, shape index: {}]
  %s9 = inlined_call_operand.vmem [shape: f32[1,256], index: 9, kind: input, shape index: {}]
  %s10 = inlined_call_operand.hbm [shape: bf16[256,512], index: 10, kind: input, shape index: {}]
  %s11 = inlined_call_operand.vmem [shape: f32[1,512], index: 11, kind: input, shape index: {}]
  %s12 = inlined_call_operand.hbm [shape: bf16[512,896], index: 12, kind: input, shape index: {}]
  %s13 = inlined_call_operand.vmem [shape: f32[1,896], index: 13, kind: input, shape index: {}]
  %s14 = inlined_call_operand.vmem [shape: f32[8,896], index: 14, kind: output, shape index: {0}]
  %s15 = inlined_call_operand.vmem [shape: f32[8,128], index: 15, kind: output, shape index: {1}]
  %16 = xla_tuple %s14, %s15
  %s17 = sld [smem:[#allocation0]]
  $region86: #{vae_forward.1} parent=0
    _
  %s19 = ssub.s32 1, %s17
  %s20 = scalar_select 0, %s19, %s17
  $region1: #{vae_forward.1} parent=0
    #allocation2 [shape = 'u8[917504]{0}', space=vmem, size = 0xe0000, scoped, tag = 'input window, operand 2, single buffered']
    #allocation3 [shape = 's32[1]{0}', space=sflag, size = 0x4, scoped, tag = 'scoped memory for vae_forward.1']
    #allocation4 [shape = 'u8[262144]{0}', space=vmem, size = 0x40000, scoped, tag = 'input window, operand 10, single buffered']
    #allocation5 [shape = 's32[1]{0}', space=sflag, size = 0x4, scoped, tag = 'scoped memory for vae_forward.1']
    #allocation6 [shape = 'u8[917504]{0}', space=vmem, size = 0xe0000, scoped, tag = 'input window, operand 12, single buffered']
    %21 = vsyncpa [#allocation3], 0
    %22 = vsyncpa [#allocation5], 0
    // Predicated region
    $region2: #{vae_forward.1} parent=1 // pred_check
      _
    $region3: #{vae_forward.1} parent=1 // pred_check_branch
      %24 = sbr.rel (0) target = $region5
    $region4: #{vae_forward.1} parent=1 // pred_region
      _
    $region5: #{vae_forward.1} parent=1 // pred_fallthru
      _
    // Predicated region
    $region6: #{vae_forward.1} parent=1 // pred_check
      _
    $region7: #{vae_forward.1} parent=1 // pred_check_branch
      %26 = sbr.rel (0) target = $region9
    $region8: #{vae_forward.1} parent=1 // pred_region
      _
    $region9: #{vae_forward.1} parent=1 // pred_fallthru
      _
    // Predicated region
    $region10: #{vae_forward.1} parent=1 // pred_check
      _
    $region11: #{vae_forward.1} parent=1 // pred_check_branch
      %28 = sbr.rel (0) target = $region13
    $region12: #{vae_forward.1} parent=1 // pred_region
      %s30 = ssub.s32 28672, 28672
      %31 = vsyncadd [#allocation3], %s30
      %s32 = sshll.u32 [#allocation2], 4
      %s33 = int_to_ptr.vmem [resolvable:$true] %s32
      %38 = dma.hbm_to_vmem [thread:$0]  %s2, 28672, %s33, [#allocation3], 256, 256, 16
    $region13: #{vae_forward.1} parent=1 // pred_fallthru
      _
    // Predicated region
    $region14: #{vae_forward.1} parent=1 // pred_check
      _
    $region15: #{vae_forward.1} parent=1 // pred_check_branch
      %40 = sbr.rel (0) target = $region17
    $region16: #{vae_forward.1} parent=1 // pred_region
      _
    $region17: #{vae_forward.1} parent=1 // pred_fallthru
      _
    // Predicated region
    $region18: #{vae_forward.1} parent=1 // pred_check
      _
    $region19: #{vae_forward.1} parent=1 // pred_check_branch
      %42 = sbr.rel (0) target = $region21
    $region20: #{vae_forward.1} parent=1 // pred_region
      _
    $region21: #{vae_forward.1} parent=1 // pred_fallthru
      _
    // Predicated region
    $region22: #{vae_forward.1} parent=1 // pred_check
      _
    $region23: #{vae_forward.1} parent=1 // pred_check_branch
      %44 = sbr.rel (0) target = $region25
    $region24: #{vae_forward.1} parent=1 // pred_region
      _
    $region25: #{vae_forward.1} parent=1 // pred_fallthru
      _
    // Predicated region
    $region26: #{vae_forward.1} parent=1 // pred_check
      _
    $region27: #{vae_forward.1} parent=1 // pred_check_branch
      %46 = sbr.rel (0) target = $region29
    $region28: #{vae_forward.1} parent=1 // pred_region
      _
    $region29: #{vae_forward.1} parent=1 // pred_fallthru
      _
    // Predicated region
    $region30: #{vae_forward.1} parent=1 // pred_check
      _
    $region31: #{vae_forward.1} parent=1 // pred_check_branch
      %48 = sbr.rel (0) target = $region33
    $region32: #{vae_forward.1} parent=1 // pred_region
      _
    $region33: #{vae_forward.1} parent=1 // pred_fallthru
      _
    // Predicated region
    $region34: #{vae_forward.1} parent=1 // pred_check
      _
    $region35: #{vae_forward.1} parent=1 // pred_check_branch
      %50 = sbr.rel (0) target = $region37
    $region36: #{vae_forward.1} parent=1 // pred_region
      _
    $region37: #{vae_forward.1} parent=1 // pred_fallthru
      _
    // Predicated region
    $region38: #{vae_forward.1} parent=1 // pred_check
      _
    $region39: #{vae_forward.1} parent=1 // pred_check_branch
      %52 = sbr.rel (0) target = $region41
    $region40: #{vae_forward.1} parent=1 // pred_region
      _
    $region41: #{vae_forward.1} parent=1 // pred_fallthru
      _
    // Predicated region
    $region42: #{vae_forward.1} parent=1 // pred_check
      _
    $region43: #{vae_forward.1} parent=1 // pred_check_branch
      %54 = sbr.rel (0) target = $region45
    $region44: #{vae_forward.1} parent=1 // pred_region
      %s56 = ssub.s32 8192, 8192
      %57 = vsyncadd [#allocation5], %s56
      %s58 = sshll.u32 [#allocation4], 4
      %s59 = int_to_ptr.vmem [resolvable:$true] %s58
      %64 = dma.hbm_to_vmem [thread:$0]  %s10, 8192, %s59, [#allocation5], 256, 256, 16
    $region45: #{vae_forward.1} parent=1 // pred_fallthru
      _
    // Predicated region
    $region46: #{vae_forward.1} parent=1 // pred_check
      _
    $region47: #{vae_forward.1} parent=1 // pred_check_branch
      %66 = sbr.rel (0) target = $region49
    $region48: #{vae_forward.1} parent=1 // pred_region
      _
    $region49: #{vae_forward.1} parent=1 // pred_fallthru
      _
    // Predicated region
    $region50: #{vae_forward.1} parent=1 // pred_check
      _
    $region51: #{vae_forward.1} parent=1 // pred_check_branch
      %68 = sbr.rel (0) target = $region53
    $region52: #{vae_forward.1} parent=1 // pred_region
      %s70 = ssub.s32 28672, 28672
      %71 = vsyncadd [#allocation5], %s70
      %s72 = sshll.u32 [#allocation6], 4
      %s73 = int_to_ptr.vmem [resolvable:$true] %s72
      %78 = dma.hbm_to_vmem [thread:$0]  %s12, 28672, %s73, [#allocation5], 448, 448, 28
    $region53: #{vae_forward.1} parent=1 // pred_fallthru
      _
    // Predicated region
    $region54: #{vae_forward.1} parent=1 // pred_check
      _
    $region55: #{vae_forward.1} parent=1 // pred_check_branch
      %80 = sbr.rel (0) target = $region57
    $region56: #{vae_forward.1} parent=1 // pred_region
      _
    $region57: #{vae_forward.1} parent=1 // pred_fallthru
      _
    // Predicated region
    $region58: #{vae_forward.1} parent=1 // pred_check
      _
    $region59: #{vae_forward.1} parent=1 // pred_check_branch
      %82 = sbr.rel (0) target = $region61
    $region60: #{vae_forward.1} parent=1 // pred_region
      %83 = dma.done [#allocation3], 28672
    $region61: #{vae_forward.1} parent=1 // pred_fallthru
      _
    // Predicated region
    $region62: #{vae_forward.1} parent=1 // pred_check
      _
    $region63: #{vae_forward.1} parent=1 // pred_check_branch
      %85 = sbr.rel (0) target = $region65
    $region64: #{vae_forward.1} parent=1 // pred_region
      %86 = dma.done [#allocation5], 8192
    $region65: #{vae_forward.1} parent=1 // pred_fallthru
      _
    // Predicated region
    $region66: #{vae_forward.1} parent=1 // pred_check
      _
    $region67: #{vae_forward.1} parent=1 // pred_check_branch
      %88 = sbr.rel (0) target = $region69
    $region68: #{vae_forward.1} parent=1 // pred_region
      %89 = dma.done [#allocation5], 28672
    $region69: #{vae_forward.1} parent=1 // pred_fallthru
      _
    %v91 = vld [vmem:[%s0] sm:$0xff]
    %v92 = vld [vmem:[%s0 + $0x8] sm:$0xff]
    %v93 = vld [vmem:[%s0 + $0x10] sm:$0xff]
    %v94 = vld [vmem:[%s0 + $0x18] sm:$0xff]
    %v95 = vld [vmem:[%s0 + $0x20] sm:$0xff]
    %v96 = vld [vmem:[%s0 + $0x28] sm:$0xff]
    %v97 = vld [vmem:[%s0 + $0x30] sm:$0xff]
    %v98 = vpack.c.bf16 %v91, %v91
    %v99 = vpack.c.bf16 %v92, %v92
    %v100 = vpack.c.bf16 %v93, %v93
    %v101 = vpack.c.bf16 %v94, %v94
    %v102 = vpack.c.bf16 %v95, %v95
    %v103 = vpack.c.bf16 %v96, %v96
    %v104 = vpack.c.bf16 %v97, %v97
    %v105 = vld [vmem:[#allocation2] sm:$0xff]
    %v106 = vld [vmem:[#allocation2 + $0x8] sm:$0xff]
    %v107 = vld [vmem:[#allocation2 + $0x10] sm:$0xff]
    %v108 = vld [vmem:[#allocation2 + $0x18] sm:$0xff]
    %v109 = vld [vmem:[#allocation2 + $0x20] sm:$0xff]
    %v110 = vld [vmem:[#allocation2 + $0x28] sm:$0xff]
    %v111 = vld [vmem:[#allocation2 + $0x30] sm:$0xff]
    %v112 = vld [vmem:[#allocation2 + $0x38] sm:$0xff]
    %v113 = vld [vmem:[#allocation2 + $0x40] sm:$0xff]
    %v114 = vld [vmem:[#allocation2 + $0x48] sm:$0xff]
    %v115 = vld [vmem:[#allocation2 + $0x50] sm:$0xff]
    %v116 = vld [vmem:[#allocation2 + $0x58] sm:$0xff]
    %v117 = vld [vmem:[#allocation2 + $0x60] sm:$0xff]
    %v118 = vld [vmem:[#allocation2 + $0x68] sm:$0xff]
    %v119 = vld [vmem:[#allocation2 + $0x70] sm:$0xff]
    %v120 = vld [vmem:[#allocation2 + $0x78] sm:$0xff]
    %v121 = vld [vmem:[#allocation2 + $0x80] sm:$0xff]
    %v122 = vld [vmem:[#allocation2 + $0x88] sm:$0xff]
    %v123 = vld [vmem:[#allocation2 + $0x90] sm:$0xff]
    %v124 = vld [vmem:[#allocation2 + $0x98] sm:$0xff]
    %v125 = vld [vmem:[#allocation2 + $0xa0] sm:$0xff]
    %v126 = vld [vmem:[#allocation2 + $0xa8] sm:$0xff]
    %v127 = vld [vmem:[#allocation2 + $0xb0] sm:$0xff]
    %v128 = vld [vmem:[#allocation2 + $0xb8] sm:$0xff]
    %v129 = vld [vmem:[#allocation2 + $0xc0] sm:$0xff]
    %v130 = vld [vmem:[#allocation2 + $0xc8] sm:$0xff]
    %v131 = vld [vmem:[#allocation2 + $0xd0] sm:$0xff]
    %v132 = vld [vmem:[#allocation2 + $0xd8] sm:$0xff]
    %v133 = vld [vmem:[#allocation2 + $0xe0] sm:$0xff]
    %v134 = vld [vmem:[#allocation2 + $0xe8] sm:$0xff]
    %v135 = vld [vmem:[#allocation2 + $0xf0] sm:$0xff]
    %v136 = vld [vmem:[#allocation2 + $0xf8] sm:$0xff]
    %v137 = vld [vmem:[#allocation2 + $0x100] sm:$0xff]
    %v138 = vld [vmem:[#allocation2 + $0x108] sm:$0xff]
    %v139 = vld [vmem:[#allocation2 + $0x110] sm:$0xff]
    %v140 = vld [vmem:[#allocation2 + $0x118] sm:$0xff]
    %v141 = vld [vmem:[#allocation2 + $0x120] sm:$0xff]
    %v142 = vld [vmem:[#allocation2 + $0x128] sm:$0xff]
    %v143 = vld [vmem:[#allocation2 + $0x130] sm:$0xff]
    %v144 = vld [vmem:[#allocation2 + $0x138] sm:$0xff]
    %v145 = vld [vmem:[#allocation2 + $0x140] sm:$0xff]
    %v146 = vld [vmem:[#allocation2 + $0x148] sm:$0xff]
    %v147 = vld [vmem:[#allocation2 + $0x150] sm:$0xff]
    %v148 = vld [vmem:[#allocation2 + $0x158] sm:$0xff]
    %v149 = vld [vmem:[#allocation2 + $0x160] sm:$0xff]
    %v150 = vld [vmem:[#allocation2 + $0x168] sm:$0xff]
    %v151 = vld [vmem:[#allocation2 + $0x170] sm:$0xff]
    %v152 = vld [vmem:[#allocation2 + $0x178] sm:$0xff]
    %v153 = vld [vmem:[#allocation2 + $0x180] sm:$0xff]
    %v154 = vld [vmem:[#allocation2 + $0x188] sm:$0xff]
    %v155 = vld [vmem:[#allocation2 + $0x190] sm:$0xff]
    %v156 = vld [vmem:[#allocation2 + $0x198] sm:$0xff]
    %v157 = vld [vmem:[#allocation2 + $0x1a0] sm:$0xff]
    %v158 = vld [vmem:[#allocation2 + $0x1a8] sm:$0xff]
    %v159 = vld [vmem:[#allocation2 + $0x1b0] sm:$0xff]
    %v160 = vld [vmem:[#allocation2 + $0x1b8] sm:$0xff]
    %v161 = vld [vmem:[#allocation2 + $0x1c0] sm:$0xff]
    %v162 = vld [vmem:[#allocation2 + $0x1c8] sm:$0xff]
    %v163 = vld [vmem:[#allocation2 + $0x1d0] sm:$0xff]
    %v164 = vld [vmem:[#allocation2 + $0x1d8] sm:$0xff]
    %v165 = vld [vmem:[#allocation2 + $0x1e0] sm:$0xff]
    %v166 = vld [vmem:[#allocation2 + $0x1e8] sm:$0xff]
    %v167 = vld [vmem:[#allocation2 + $0x1f0] sm:$0xff]
    %v168 = vld [vmem:[#allocation2 + $0x1f8] sm:$0xff]
    %v169 = vld [vmem:[#allocation2 + $0x200] sm:$0xff]
    %v170 = vld [vmem:[#allocation2 + $0x208] sm:$0xff]
    %v171 = vld [vmem:[#allocation2 + $0x210] sm:$0xff]
    %v172 = vld [vmem:[#allocation2 + $0x218] sm:$0xff]
    %v173 = vld [vmem:[#allocation2 + $0x220] sm:$0xff]
    %v174 = vld [vmem:[#allocation2 + $0x228] sm:$0xff]
    %v175 = vld [vmem:[#allocation2 + $0x230] sm:$0xff]
    %v176 = vld [vmem:[#allocation2 + $0x238] sm:$0xff]
    %v177 = vld [vmem:[#allocation2 + $0x240] sm:$0xff]
    %v178 = vld [vmem:[#allocation2 + $0x248] sm:$0xff]
    %v179 = vld [vmem:[#allocation2 + $0x250] sm:$0xff]
    %v180 = vld [vmem:[#allocation2 + $0x258] sm:$0xff]
    %v181 = vld [vmem:[#allocation2 + $0x260] sm:$0xff]
    %v182 = vld [vmem:[#allocation2 + $0x268] sm:$0xff]
    %v183 = vld [vmem:[#allocation2 + $0x270] sm:$0xff]
    %v184 = vld [vmem:[#allocation2 + $0x278] sm:$0xff]
    %v185 = vld [vmem:[#allocation2 + $0x280] sm:$0xff]
    %v186 = vld [vmem:[#allocation2 + $0x288] sm:$0xff]
    %v187 = vld [vmem:[#allocation2 + $0x290] sm:$0xff]
    %v188 = vld [vmem:[#allocation2 + $0x298] sm:$0xff]
    %v189 = vld [vmem:[#allocation2 + $0x2a0] sm:$0xff]
    %v190 = vld [vmem:[#allocation2 + $0x2a8] sm:$0xff]
    %v191 = vld [vmem:[#allocation2 + $0x2b0] sm:$0xff]
    %v192 = vld [vmem:[#allocation2 + $0x2b8] sm:$0xff]
    %v193 = vld [vmem:[#allocation2 + $0x2c0] sm:$0xff]
    %v194 = vld [vmem:[#allocation2 + $0x2c8] sm:$0xff]
    %v195 = vld [vmem:[#allocation2 + $0x2d0] sm:$0xff]
    %v196 = vld [vmem:[#allocation2 + $0x2d8] sm:$0xff]
    %v197 = vld [vmem:[#allocation2 + $0x2e0] sm:$0xff]
    %v198 = vld [vmem:[#allocation2 + $0x2e8] sm:$0xff]
    %v199 = vld [vmem:[#allocation2 + $0x2f0] sm:$0xff]
    %v200 = vld [vmem:[#allocation2 + $0x2f8] sm:$0xff]
    %v201 = vld [vmem:[#allocation2 + $0x300] sm:$0xff]
    %v202 = vld [vmem:[#allocation2 + $0x308] sm:$0xff]
    %v203 = vld [vmem:[#allocation2 + $0x310] sm:$0xff]
    %v204 = vld [vmem:[#allocation2 + $0x318] sm:$0xff]
    %v205 = vld [vmem:[#allocation2 + $0x320] sm:$0xff]
    %v206 = vld [vmem:[#allocation2 + $0x328] sm:$0xff]
    %v207 = vld [vmem:[#allocation2 + $0x330] sm:$0xff]
    %v208 = vld [vmem:[#allocation2 + $0x338] sm:$0xff]
    %v209 = vld [vmem:[#allocation2 + $0x340] sm:$0xff]
    %v210 = vld [vmem:[#allocation2 + $0x348] sm:$0xff]
    %v211 = vld [vmem:[#allocation2 + $0x350] sm:$0xff]
    %v212 = vld [vmem:[#allocation2 + $0x358] sm:$0xff]
    %v213 = vld [vmem:[#allocation2 + $0x360] sm:$0xff]
    %v214 = vld [vmem:[#allocation2 + $0x368] sm:$0xff]
    %v215 = vld [vmem:[#allocation2 + $0x370] sm:$0xff]
    %v216 = vld [vmem:[#allocation2 + $0x378] sm:$0xff]
    %v217 = vld [vmem:[#allocation2 + $0x380] sm:$0xff]
    %v218 = vld [vmem:[#allocation2 + $0x388] sm:$0xff]
    %v219 = vld [vmem:[#allocation2 + $0x390] sm:$0xff]
    %v220 = vld [vmem:[#allocation2 + $0x398] sm:$0xff]
    %v221 = vld [vmem:[#allocation2 + $0x3a0] sm:$0xff]
    %v222 = vld [vmem:[#allocation2 + $0x3a8] sm:$0xff]
    %v223 = vld [vmem:[#allocation2 + $0x3b0] sm:$0xff]
    %v224 = vld [vmem:[#allocation2 + $0x3b8] sm:$0xff]
    %v225 = vld [vmem:[#allocation2 + $0x3c0] sm:$0xff]
    %v226 = vld [vmem:[#allocation2 + $0x3c8] sm:$0xff]
    %v227 = vld [vmem:[#allocation2 + $0x3d0] sm:$0xff]
    %v228 = vld [vmem:[#allocation2 + $0x3d8] sm:$0xff]
    %v229 = vld [vmem:[#allocation2 + $0x3e0] sm:$0xff]
    %v230 = vld [vmem:[#allocation2 + $0x3e8] sm:$0xff]
    %v231 = vld [vmem:[#allocation2 + $0x3f0] sm:$0xff]
    %v232 = vld [vmem:[#allocation2 + $0x3f8] sm:$0xff]
    %v233 = vld [vmem:[#allocation2 + $0x400] sm:$0xff]
    %v234 = vld [vmem:[#allocation2 + $0x408] sm:$0xff]
    %v235 = vld [vmem:[#allocation2 + $0x410] sm:$0xff]
    %v236 = vld [vmem:[#allocation2 + $0x418] sm:$0xff]
    %v237 = vld [vmem:[#allocation2 + $0x420] sm:$0xff]
    %v238 = vld [vmem:[#allocation2 + $0x428] sm:$0xff]
    %v239 = vld [vmem:[#allocation2 + $0x430] sm:$0xff]
    %v240 = vld [vmem:[#allocation2 + $0x438] sm:$0xff]
    %v241 = vld [vmem:[#allocation2 + $0x440] sm:$0xff]
    %v242 = vld [vmem:[#allocation2 + $0x448] sm:$0xff]
    %v243 = vld [vmem:[#allocation2 + $0x450] sm:$0xff]
    %v244 = vld [vmem:[#allocation2 + $0x458] sm:$0xff]
    %v245 = vld [vmem:[#allocation2 + $0x460] sm:$0xff]
    %v246 = vld [vmem:[#allocation2 + $0x468] sm:$0xff]
    %v247 = vld [vmem:[#allocation2 + $0x470] sm:$0xff]
    %v248 = vld [vmem:[#allocation2 + $0x478] sm:$0xff]
    %v249 = vld [vmem:[#allocation2 + $0x480] sm:$0xff]
    %v250 = vld [vmem:[#allocation2 + $0x488] sm:$0xff]
    %v251 = vld [vmem:[#allocation2 + $0x490] sm:$0xff]
    %v252 = vld [vmem:[#allocation2 + $0x498] sm:$0xff]
    %v253 = vld [vmem:[#allocation2 + $0x4a0] sm:$0xff]
    %v254 = vld [vmem:[#allocation2 + $0x4a8] sm:$0xff]
    %v255 = vld [vmem:[#allocation2 + $0x4b0] sm:$0xff]
    %v256 = vld [vmem:[#allocation2 + $0x4b8] sm:$0xff]
    %v257 = vld [vmem:[#allocation2 + $0x4c0] sm:$0xff]
    %v258 = vld [vmem:[#allocation2 + $0x4c8] sm:$0xff]
    %v259 = vld [vmem:[#allocation2 + $0x4d0] sm:$0xff]
    %v260 = vld [vmem:[#allocation2 + $0x4d8] sm:$0xff]
    %v261 = vld [vmem:[#allocation2 + $0x4e0] sm:$0xff]
    %v262 = vld [vmem:[#allocation2 + $0x4e8] sm:$0xff]
    %v263 = vld [vmem:[#allocation2 + $0x4f0] sm:$0xff]
    %v264 = vld [vmem:[#allocation2 + $0x4f8] sm:$0xff]
    %v265 = vld [vmem:[#allocation2 + $0x500] sm:$0xff]
    %v266 = vld [vmem:[#allocation2 + $0x508] sm:$0xff]
    %v267 = vld [vmem:[#allocation2 + $0x510] sm:$0xff]
    %v268 = vld [vmem:[#allocation2 + $0x518] sm:$0xff]
    %v269 = vld [vmem:[#allocation2 + $0x520] sm:$0xff]
    %v270 = vld [vmem:[#allocation2 + $0x528] sm:$0xff]
    %v271 = vld [vmem:[#allocation2 + $0x530] sm:$0xff]
    %v272 = vld [vmem:[#allocation2 + $0x538] sm:$0xff]
    %v273 = vld [vmem:[#allocation2 + $0x540] sm:$0xff]
    %v274 = vld [vmem:[#allocation2 + $0x548] sm:$0xff]
    %v275 = vld [vmem:[#allocation2 + $0x550] sm:$0xff]
    %v276 = vld [vmem:[#allocation2 + $0x558] sm:$0xff]
    %v277 = vld [vmem:[#allocation2 + $0x560] sm:$0xff]
    %v278 = vld [vmem:[#allocation2 + $0x568] sm:$0xff]
    %v279 = vld [vmem:[#allocation2 + $0x570] sm:$0xff]
    %v280 = vld [vmem:[#allocation2 + $0x578] sm:$0xff]
    %v281 = vld [vmem:[#allocation2 + $0x580] sm:$0xff]
    %v282 = vld [vmem:[#allocation2 + $0x588] sm:$0xff]
    %v283 = vld [vmem:[#allocation2 + $0x590] sm:$0xff]
    %v284 = vld [vmem:[#allocation2 + $0x598] sm:$0xff]
    %v285 = vld [vmem:[#allocation2 + $0x5a0] sm:$0xff]
    %v286 = vld [vmem:[#allocation2 + $0x5a8] sm:$0xff]
    %v287 = vld [vmem:[#allocation2 + $0x5b0] sm:$0xff]
    %v288 = vld [vmem:[#allocation2 + $0x5b8] sm:$0xff]
    %v289 = vld [vmem:[#allocation2 + $0x5c0] sm:$0xff]
    %v290 = vld [vmem:[#allocation2 + $0x5c8] sm:$0xff]
    %v291 = vld [vmem:[#allocation2 + $0x5d0] sm:$0xff]
    %v292 = vld [vmem:[#allocation2 + $0x5d8] sm:$0xff]
    %v293 = vld [vmem:[#allocation2 + $0x5e0] sm:$0xff]
    %v294 = vld [vmem:[#allocation2 + $0x5e8] sm:$0xff]
    %v295 = vld [vmem:[#allocation2 + $0x5f0] sm:$0xff]
    %v296 = vld [vmem:[#allocation2 + $0x5f8] sm:$0xff]
    %v297 = vld [vmem:[#allocation2 + $0x600] sm:$0xff]
    %v298 = vld [vmem:[#allocation2 + $0x608] sm:$0xff]
    %v299 = vld [vmem:[#allocation2 + $0x610] sm:$0xff]
    %v300 = vld [vmem:[#allocation2 + $0x618] sm:$0xff]
    %v301 = vld [vmem:[#allocation2 + $0x620] sm:$0xff]
    %v302 = vld [vmem:[#allocation2 + $0x628] sm:$0xff]
    %v303 = vld [vmem:[#allocation2 + $0x630] sm:$0xff]
    %v304 = vld [vmem:[#allocation2 + $0x638] sm:$0xff]
    %v305 = vld [vmem:[#allocation2 + $0x640] sm:$0xff]
    %v306 = vld [vmem:[#allocation2 + $0x648] sm:$0xff]
    %v307 = vld [vmem:[#allocation2 + $0x650] sm:$0xff]
    %v308 = vld [vmem:[#allocation2 + $0x658] sm:$0xff]
    %v309 = vld [vmem:[#allocation2 + $0x660] sm:$0xff]
    %v310 = vld [vmem:[#allocation2 + $0x668] sm:$0xff]
    %v311 = vld [vmem:[#allocation2 + $0x670] sm:$0xff]
    %v312 = vld [vmem:[#allocation2 + $0x678] sm:$0xff]
    %v313 = vld [vmem:[#allocation2 + $0x680] sm:$0xff]
    %v314 = vld [vmem:[#allocation2 + $0x688] sm:$0xff]
    %v315 = vld [vmem:[#allocation2 + $0x690] sm:$0xff]
    %v316 = vld [vmem:[#allocation2 + $0x698] sm:$0xff]
    %v317 = vld [vmem:[#allocation2 + $0x6a0] sm:$0xff]
    %v318 = vld [vmem:[#allocation2 + $0x6a8] sm:$0xff]
    %v319 = vld [vmem:[#allocation2 + $0x6b0] sm:$0xff]
    %v320 = vld [vmem:[#allocation2 + $0x6b8] sm:$0xff]
    %v321 = vld [vmem:[#allocation2 + $0x6c0] sm:$0xff]
    %v322 = vld [vmem:[#allocation2 + $0x6c8] sm:$0xff]
    %v323 = vld [vmem:[#allocation2 + $0x6d0] sm:$0xff]
    %v324 = vld [vmem:[#allocation2 + $0x6d8] sm:$0xff]
    %v325 = vld [vmem:[#allocation2 + $0x6e0] sm:$0xff]
    %v326 = vld [vmem:[#allocation2 + $0x6e8] sm:$0xff]
    %v327 = vld [vmem:[#allocation2 + $0x6f0] sm:$0xff]
    %v328 = vld [vmem:[#allocation2 + $0x6f8] sm:$0xff]
    %v329 = vld [vmem:[%s3] sm:$0xf]
    %v331 = vlaneseq
    %v332 = vshrl.u32 %v331, 7
    %v333 = vsub.s32 0, %v332
    %v334 = vrot.slane %v329, %v333
    %v335 = vlaneseq
    %v336 = vshrl.u32 %v335, 7
    %v337 = vsub.s32 1, %v336
    %v338 = vrot.slane %v329, %v337
    %v339 = vlaneseq
    %v340 = vshrl.u32 %v339, 7
    %v341 = vsub.s32 2, %v340
    %v342 = vrot.slane %v329, %v341
    %v343 = vlaneseq
    %v344 = vshrl.u32 %v343, 7
    %v345 = vsub.s32 3, %v344
    %v346 = vrot.slane %v329, %v345
    %v575 = vunpack.c.l.b16 %v105
    %v576 = vunpack.c.h.b16 %v105
    %v577 = vunpack.c.l.b16 %v106
    %v578 = vunpack.c.h.b16 %v106
    %v579 = vunpack.c.l.b16 %v107
    %v580 = vunpack.c.h.b16 %v107
    %v581 = vunpack.c.l.b16 %v108
    %v582 = vunpack.c.h.b16 %v108
    %v583 = vunpack.c.l.b16 %v109
    %v584 = vunpack.c.h.b16 %v109
    %v585 = vunpack.c.l.b16 %v110
    %v586 = vunpack.c.h.b16 %v110
    %v587 = vunpack.c.l.b16 %v111
    %v588 = vunpack.c.h.b16 %v111
    %v589 = vunpack.c.l.b16 %v112
    %v590 = vunpack.c.h.b16 %v112
    %v591 = vunpack.c.l.b16 %v113
    %v592 = vunpack.c.h.b16 %v113
    %v593 = vunpack.c.l.b16 %v114
    %v594 = vunpack.c.h.b16 %v114
    %v595 = vunpack.c.l.b16 %v115
    %v596 = vunpack.c.h.b16 %v115
    %v597 = vunpack.c.l.b16 %v116
    %v598 = vunpack.c.h.b16 %v116
    %v599 = vunpack.c.l.b16 %v117
    %v600 = vunpack.c.h.b16 %v117
    %v601 = vunpack.c.l.b16 %v118
    %v602 = vunpack.c.h.b16 %v118
    %v603 = vunpack.c.l.b16 %v119
    %v604 = vunpack.c.h.b16 %v119
    %v605 = vunpack.c.l.b16 %v120
    %v606 = vunpack.c.h.b16 %v120
    %v607 = vunpack.c.l.b16 %v121
    %v608 = vunpack.c.h.b16 %v121
    %v609 = vunpack.c.l.b16 %v122
    %v610 = vunpack.c.h.b16 %v122
    %v611 = vunpack.c.l.b16 %v123
    %v612 = vunpack.c.h.b16 %v123
    %v613 = vunpack.c.l.b16 %v124
    %v614 = vunpack.c.h.b16 %v124
    %v615 = vunpack.c.l.b16 %v125
    %v616 = vunpack.c.h.b16 %v125
    %v617 = vunpack.c.l.b16 %v126
    %v618 = vunpack.c.h.b16 %v126
    %v619 = vunpack.c.l.b16 %v127
    %v620 = vunpack.c.h.b16 %v127
    %v621 = vunpack.c.l.b16 %v128
    %v622 = vunpack.c.h.b16 %v128
    %v623 = vunpack.c.l.b16 %v129
    %v624 = vunpack.c.h.b16 %v129
    %v625 = vunpack.c.l.b16 %v130
    %v626 = vunpack.c.h.b16 %v130
    %v627 = vunpack.c.l.b16 %v131
    %v628 = vunpack.c.h.b16 %v131
    %v629 = vunpack.c.l.b16 %v132
    %v630 = vunpack.c.h.b16 %v132
    %v631 = vunpack.c.l.b16 %v133
    %v632 = vunpack.c.h.b16 %v133
    %v633 = vunpack.c.l.b16 %v134
    %v634 = vunpack.c.h.b16 %v134
    %v635 = vunpack.c.l.b16 %v135
    %v636 = vunpack.c.h.b16 %v135
    %v637 = vunpack.c.l.b16 %v136
    %v638 = vunpack.c.h.b16 %v136
    %v639 = vunpack.c.l.b16 %v137
    %v640 = vunpack.c.h.b16 %v137
    %v641 = vunpack.c.l.b16 %v138
    %v642 = vunpack.c.h.b16 %v138
    %v643 = vunpack.c.l.b16 %v139
    %v644 = vunpack.c.h.b16 %v139
    %v645 = vunpack.c.l.b16 %v140
    %v646 = vunpack.c.h.b16 %v140
    %v647 = vunpack.c.l.b16 %v141
    %v648 = vunpack.c.h.b16 %v141
    %v649 = vunpack.c.l.b16 %v142
    %v650 = vunpack.c.h.b16 %v142
    %v651 = vunpack.c.l.b16 %v143
    %v652 = vunpack.c.h.b16 %v143
    %v653 = vunpack.c.l.b16 %v144
    %v654 = vunpack.c.h.b16 %v144
    %v655 = vunpack.c.l.b16 %v145
    %v656 = vunpack.c.h.b16 %v145
    %v657 = vunpack.c.l.b16 %v146
    %v658 = vunpack.c.h.b16 %v146
    %v659 = vunpack.c.l.b16 %v147
    %v660 = vunpack.c.h.b16 %v147
    %v661 = vunpack.c.l.b16 %v148
    %v662 = vunpack.c.h.b16 %v148
    %v663 = vunpack.c.l.b16 %v149
    %v664 = vunpack.c.h.b16 %v149
    %v665 = vunpack.c.l.b16 %v150
    %v666 = vunpack.c.h.b16 %v150
    %v667 = vunpack.c.l.b16 %v151
    %v668 = vunpack.c.h.b16 %v151
    %v669 = vunpack.c.l.b16 %v152
    %v670 = vunpack.c.h.b16 %v152
    %v671 = vunpack.c.l.b16 %v153
    %v672 = vunpack.c.h.b16 %v153
    %v673 = vunpack.c.l.b16 %v154
    %v674 = vunpack.c.h.b16 %v154
    %v675 = vunpack.c.l.b16 %v155
    %v676 = vunpack.c.h.b16 %v155
    %v677 = vunpack.c.l.b16 %v156
    %v678 = vunpack.c.h.b16 %v156
    %v679 = vunpack.c.l.b16 %v157
    %v680 = vunpack.c.h.b16 %v157
    %v681 = vunpack.c.l.b16 %v158
    %v682 = vunpack.c.h.b16 %v158
    %v683 = vunpack.c.l.b16 %v159
    %v684 = vunpack.c.h.b16 %v159
    %v685 = vunpack.c.l.b16 %v160
    %v686 = vunpack.c.h.b16 %v160
    %v687 = vunpack.c.l.b16 %v161
    %v688 = vunpack.c.h.b16 %v161
    %v689 = vunpack.c.l.b16 %v162
    %v690 = vunpack.c.h.b16 %v162
    %v691 = vunpack.c.l.b16 %v163
    %v692 = vunpack.c.h.b16 %v163
    %v693 = vunpack.c.l.b16 %v164
    %v694 = vunpack.c.h.b16 %v164
    %v695 = vunpack.c.l.b16 %v165
    %v696 = vunpack.c.h.b16 %v165
    %v697 = vunpack.c.l.b16 %v166
    %v698 = vunpack.c.h.b16 %v166
    %v699 = vunpack.c.l.b16 %v167
    %v700 = vunpack.c.h.b16 %v167
    %v701 = vunpack.c.l.b16 %v168
    %v702 = vunpack.c.h.b16 %v168
    %v703 = vunpack.c.l.b16 %v169
    %v704 = vunpack.c.h.b16 %v169
    %v705 = vunpack.c.l.b16 %v170
    %v706 = vunpack.c.h.b16 %v170
    %v707 = vunpack.c.l.b16 %v171
    %v708 = vunpack.c.h.b16 %v171
    %v709 = vunpack.c.l.b16 %v172
    %v710 = vunpack.c.h.b16 %v172
    %v711 = vunpack.c.l.b16 %v173
    %v712 = vunpack.c.h.b16 %v173
    %v713 = vunpack.c.l.b16 %v174
    %v714 = vunpack.c.h.b16 %v174
    %v715 = vunpack.c.l.b16 %v175
    %v716 = vunpack.c.h.b16 %v175
    %v717 = vunpack.c.l.b16 %v176
    %v718 = vunpack.c.h.b16 %v176
    %v719 = vunpack.c.l.b16 %v177
    %v720 = vunpack.c.h.b16 %v177
    %v721 = vunpack.c.l.b16 %v178
    %v722 = vunpack.c.h.b16 %v178
    %v723 = vunpack.c.l.b16 %v179
    %v724 = vunpack.c.h.b16 %v179
    %v725 = vunpack.c.l.b16 %v180
    %v726 = vunpack.c.h.b16 %v180
    %v727 = vunpack.c.l.b16 %v181
    %v728 = vunpack.c.h.b16 %v181
    %v729 = vunpack.c.l.b16 %v182
    %v730 = vunpack.c.h.b16 %v182
    %v731 = vunpack.c.l.b16 %v183
    %v732 = vunpack.c.h.b16 %v183
    %v733 = vunpack.c.l.b16 %v184
    %v734 = vunpack.c.h.b16 %v184
    %v735 = vunpack.c.l.b16 %v185
    %v736 = vunpack.c.h.b16 %v185
    %v737 = vunpack.c.l.b16 %v186
    %v738 = vunpack.c.h.b16 %v186
    %v739 = vunpack.c.l.b16 %v187
    %v740 = vunpack.c.h.b16 %v187
    %v741 = vunpack.c.l.b16 %v188
    %v742 = vunpack.c.h.b16 %v188
    %v743 = vunpack.c.l.b16 %v189
    %v744 = vunpack.c.h.b16 %v189
    %v745 = vunpack.c.l.b16 %v190
    %v746 = vunpack.c.h.b16 %v190
    %v747 = vunpack.c.l.b16 %v191
    %v748 = vunpack.c.h.b16 %v191
    %v749 = vunpack.c.l.b16 %v192
    %v750 = vunpack.c.h.b16 %v192
    %v751 = vunpack.c.l.b16 %v193
    %v752 = vunpack.c.h.b16 %v193
    %v753 = vunpack.c.l.b16 %v194
    %v754 = vunpack.c.h.b16 %v194
    %v755 = vunpack.c.l.b16 %v195
    %v756 = vunpack.c.h.b16 %v195
    %v757 = vunpack.c.l.b16 %v196
    %v758 = vunpack.c.h.b16 %v196
    %v759 = vunpack.c.l.b16 %v197
    %v760 = vunpack.c.h.b16 %v197
    %v761 = vunpack.c.l.b16 %v198
    %v762 = vunpack.c.h.b16 %v198
    %v763 = vunpack.c.l.b16 %v199
    %v764 = vunpack.c.h.b16 %v199
    %v765 = vunpack.c.l.b16 %v200
    %v766 = vunpack.c.h.b16 %v200
    %v767 = vunpack.c.l.b16 %v201
    %v768 = vunpack.c.h.b16 %v201
    %v769 = vunpack.c.l.b16 %v202
    %v770 = vunpack.c.h.b16 %v202
    %v771 = vunpack.c.l.b16 %v203
    %v772 = vunpack.c.h.b16 %v203
    %v773 = vunpack.c.l.b16 %v204
    %v774 = vunpack.c.h.b16 %v204
    %v775 = vunpack.c.l.b16 %v205
    %v776 = vunpack.c.h.b16 %v205
    %v777 = vunpack.c.l.b16 %v206
    %v778 = vunpack.c.h.b16 %v206
    %v779 = vunpack.c.l.b16 %v207
    %v780 = vunpack.c.h.b16 %v207
    %v781 = vunpack.c.l.b16 %v208
    %v782 = vunpack.c.h.b16 %v208
    %v783 = vunpack.c.l.b16 %v209
    %v784 = vunpack.c.h.b16 %v209
    %v785 = vunpack.c.l.b16 %v210
    %v786 = vunpack.c.h.b16 %v210
    %v787 = vunpack.c.l.b16 %v211
    %v788 = vunpack.c.h.b16 %v211
    %v789 = vunpack.c.l.b16 %v212
    %v790 = vunpack.c.h.b16 %v212
    %v791 = vunpack.c.l.b16 %v213
    %v792 = vunpack.c.h.b16 %v213
    %v793 = vunpack.c.l.b16 %v214
    %v794 = vunpack.c.h.b16 %v214
    %v795 = vunpack.c.l.b16 %v215
    %v796 = vunpack.c.h.b16 %v215
    %v797 = vunpack.c.l.b16 %v216
    %v798 = vunpack.c.h.b16 %v216
    %v799 = vunpack.c.l.b16 %v217
    %v800 = vunpack.c.h.b16 %v217
    %v801 = vunpack.c.l.b16 %v218
    %v802 = vunpack.c.h.b16 %v218
    %v803 = vunpack.c.l.b16 %v219
    %v804 = vunpack.c.h.b16 %v219
    %v805 = vunpack.c.l.b16 %v220
    %v806 = vunpack.c.h.b16 %v220
    %v807 = vunpack.c.l.b16 %v221
    %v808 = vunpack.c.h.b16 %v221
    %v809 = vunpack.c.l.b16 %v222
    %v810 = vunpack.c.h.b16 %v222
    %v811 = vunpack.c.l.b16 %v223
    %v812 = vunpack.c.h.b16 %v223
    %v813 = vunpack.c.l.b16 %v224
    %v814 = vunpack.c.h.b16 %v224
    %v815 = vunpack.c.l.b16 %v225
    %v816 = vunpack.c.h.b16 %v225
    %v817 = vunpack.c.l.b16 %v226
    %v818 = vunpack.c.h.b16 %v226
    %v819 = vunpack.c.l.b16 %v227
    %v820 = vunpack.c.h.b16 %v227
    %v821 = vunpack.c.l.b16 %v228
    %v822 = vunpack.c.h.b16 %v228
    %v823 = vunpack.c.l.b16 %v229
    %v824 = vunpack.c.h.b16 %v229
    %v825 = vunpack.c.l.b16 %v230
    %v826 = vunpack.c.h.b16 %v230
    %v827 = vunpack.c.l.b16 %v231
    %v828 = vunpack.c.h.b16 %v231
    %v829 = vunpack.c.l.b16 %v232
    %v830 = vunpack.c.h.b16 %v232
    %v831 = vunpack.c.l.b16 %v233
    %v832 = vunpack.c.h.b16 %v233
    %v833 = vunpack.c.l.b16 %v234
    %v834 = vunpack.c.h.b16 %v234
    %v835 = vunpack.c.l.b16 %v235
    %v836 = vunpack.c.h.b16 %v235
    %v837 = vunpack.c.l.b16 %v236
    %v838 = vunpack.c.h.b16 %v236
    %v839 = vunpack.c.l.b16 %v237
    %v840 = vunpack.c.h.b16 %v237
    %v841 = vunpack.c.l.b16 %v238
    %v842 = vunpack.c.h.b16 %v238
    %v843 = vunpack.c.l.b16 %v239
    %v844 = vunpack.c.h.b16 %v239
    %v845 = vunpack.c.l.b16 %v240
    %v846 = vunpack.c.h.b16 %v240
    %v847 = vunpack.c.l.b16 %v241
    %v848 = vunpack.c.h.b16 %v241
    %v849 = vunpack.c.l.b16 %v242
    %v850 = vunpack.c.h.b16 %v242
    %v851 = vunpack.c.l.b16 %v243
    %v852 = vunpack.c.h.b16 %v243
    %v853 = vunpack.c.l.b16 %v244
    %v854 = vunpack.c.h.b16 %v244
    %v855 = vunpack.c.l.b16 %v245
    %v856 = vunpack.c.h.b16 %v245
    %v857 = vunpack.c.l.b16 %v246
    %v858 = vunpack.c.h.b16 %v246
    %v859 = vunpack.c.l.b16 %v247
    %v860 = vunpack.c.h.b16 %v247
    %v861 = vunpack.c.l.b16 %v248
    %v862 = vunpack.c.h.b16 %v248
    %v863 = vunpack.c.l.b16 %v249
    %v864 = vunpack.c.h.b16 %v249
    %v865 = vunpack.c.l.b16 %v250
    %v866 = vunpack.c.h.b16 %v250
    %v867 = vunpack.c.l.b16 %v251
    %v868 = vunpack.c.h.b16 %v251
    %v869 = vunpack.c.l.b16 %v252
    %v870 = vunpack.c.h.b16 %v252
    %v871 = vunpack.c.l.b16 %v253
    %v872 = vunpack.c.h.b16 %v253
    %v873 = vunpack.c.l.b16 %v254
    %v874 = vunpack.c.h.b16 %v254
    %v875 = vunpack.c.l.b16 %v255
    %v876 = vunpack.c.h.b16 %v255
    %v877 = vunpack.c.l.b16 %v256
    %v878 = vunpack.c.h.b16 %v256
    %v879 = vunpack.c.l.b16 %v257
    %v880 = vunpack.c.h.b16 %v257
    %v881 = vunpack.c.l.b16 %v258
    %v882 = vunpack.c.h.b16 %v258
    %v883 = vunpack.c.l.b16 %v259
    %v884 = vunpack.c.h.b16 %v259
    %v885 = vunpack.c.l.b16 %v260
    %v886 = vunpack.c.h.b16 %v260
    %v887 = vunpack.c.l.b16 %v261
    %v888 = vunpack.c.h.b16 %v261
    %v889 = vunpack.c.l.b16 %v262
    %v890 = vunpack.c.h.b16 %v262
    %v891 = vunpack.c.l.b16 %v263
    %v892 = vunpack.c.h.b16 %v263
    %v893 = vunpack.c.l.b16 %v264
    %v894 = vunpack.c.h.b16 %v264
    %v895 = vunpack.c.l.b16 %v265
    %v896 = vunpack.c.h.b16 %v265
    %v897 = vunpack.c.l.b16 %v266
    %v898 = vunpack.c.h.b16 %v266
    %v899 = vunpack.c.l.b16 %v267
    %v900 = vunpack.c.h.b16 %v267
    %v901 = vunpack.c.l.b16 %v268
    %v902 = vunpack.c.h.b16 %v268
    %v903 = vunpack.c.l.b16 %v269
    %v904 = vunpack.c.h.b16 %v269
    %v905 = vunpack.c.l.b16 %v270
    %v906 = vunpack.c.h.b16 %v270
    %v907 = vunpack.c.l.b16 %v271
    %v908 = vunpack.c.h.b16 %v271
    %v909 = vunpack.c.l.b16 %v272
    %v910 = vunpack.c.h.b16 %v272
    %v911 = vunpack.c.l.b16 %v273
    %v912 = vunpack.c.h.b16 %v273
    %v913 = vunpack.c.l.b16 %v274
    %v914 = vunpack.c.h.b16 %v274
    %v915 = vunpack.c.l.b16 %v275
    %v916 = vunpack.c.h.b16 %v275
    %v917 = vunpack.c.l.b16 %v276
    %v918 = vunpack.c.h.b16 %v276
    %v919 = vunpack.c.l.b16 %v277
    %v920 = vunpack.c.h.b16 %v277
    %v921 = vunpack.c.l.b16 %v278
    %v922 = vunpack.c.h.b16 %v278
    %v923 = vunpack.c.l.b16 %v279
    %v924 = vunpack.c.h.b16 %v279
    %v925 = vunpack.c.l.b16 %v280
    %v926 = vunpack.c.h.b16 %v280
    %v927 = vunpack.c.l.b16 %v281
    %v928 = vunpack.c.h.b16 %v281
    %v929 = vunpack.c.l.b16 %v282
    %v930 = vunpack.c.h.b16 %v282
    %v931 = vunpack.c.l.b16 %v283
    %v932 = vunpack.c.h.b16 %v283
    %v933 = vunpack.c.l.b16 %v284
    %v934 = vunpack.c.h.b16 %v284
    %v935 = vunpack.c.l.b16 %v285
    %v936 = vunpack.c.h.b16 %v285
    %v937 = vunpack.c.l.b16 %v286
    %v938 = vunpack.c.h.b16 %v286
    %v939 = vunpack.c.l.b16 %v287
    %v940 = vunpack.c.h.b16 %v287
    %v941 = vunpack.c.l.b16 %v288
    %v942 = vunpack.c.h.b16 %v288
    %v943 = vunpack.c.l.b16 %v289
    %v944 = vunpack.c.h.b16 %v289
    %v945 = vunpack.c.l.b16 %v290
    %v946 = vunpack.c.h.b16 %v290
    %v947 = vunpack.c.l.b16 %v291
    %v948 = vunpack.c.h.b16 %v291
    %v949 = vunpack.c.l.b16 %v292
    %v950 = vunpack.c.h.b16 %v292
    %v951 = vunpack.c.l.b16 %v293
    %v952 = vunpack.c.h.b16 %v293
    %v953 = vunpack.c.l.b16 %v294
    %v954 = vunpack.c.h.b16 %v294
    %v955 = vunpack.c.l.b16 %v295
    %v956 = vunpack.c.h.b16 %v295
    %v957 = vunpack.c.l.b16 %v296
    %v958 = vunpack.c.h.b16 %v296
    %v959 = vunpack.c.l.b16 %v297
    %v960 = vunpack.c.h.b16 %v297
    %v961 = vunpack.c.l.b16 %v298
    %v962 = vunpack.c.h.b16 %v298
    %v963 = vunpack.c.l.b16 %v299
    %v964 = vunpack.c.h.b16 %v299
    %v965 = vunpack.c.l.b16 %v300
    %v966 = vunpack.c.h.b16 %v300
    %v967 = vunpack.c.l.b16 %v301
    %v968 = vunpack.c.h.b16 %v301
    %v969 = vunpack.c.l.b16 %v302
    %v970 = vunpack.c.h.b16 %v302
    %v971 = vunpack.c.l.b16 %v303
    %v972 = vunpack.c.h.b16 %v303
    %v973 = vunpack.c.l.b16 %v304
    %v974 = vunpack.c.h.b16 %v304
    %v975 = vunpack.c.l.b16 %v305
    %v976 = vunpack.c.h.b16 %v305
    %v977 = vunpack.c.l.b16 %v306
    %v978 = vunpack.c.h.b16 %v306
    %v979 = vunpack.c.l.b16 %v307
    %v980 = vunpack.c.h.b16 %v307
    %v981 = vunpack.c.l.b16 %v308
    %v982 = vunpack.c.h.b16 %v308
    %v983 = vunpack.c.l.b16 %v309
    %v984 = vunpack.c.h.b16 %v309
    %v985 = vunpack.c.l.b16 %v310
    %v986 = vunpack.c.h.b16 %v310
    %v987 = vunpack.c.l.b16 %v311
    %v988 = vunpack.c.h.b16 %v311
    %v989 = vunpack.c.l.b16 %v312
    %v990 = vunpack.c.h.b16 %v312
    %v991 = vunpack.c.l.b16 %v313
    %v992 = vunpack.c.h.b16 %v313
    %v993 = vunpack.c.l.b16 %v314
    %v994 = vunpack.c.h.b16 %v314
    %v995 = vunpack.c.l.b16 %v315
    %v996 = vunpack.c.h.b16 %v315
    %v997 = vunpack.c.l.b16 %v316
    %v998 = vunpack.c.h.b16 %v316
    %v999 = vunpack.c.l.b16 %v317
    %v1000 = vunpack.c.h.b16 %v317
    %v1001 = vunpack.c.l.b16 %v318
    %v1002 = vunpack.c.h.b16 %v318
    %v1003 = vunpack.c.l.b16 %v319
    %v1004 = vunpack.c.h.b16 %v319
    %v1005 = vunpack.c.l.b16 %v320
    %v1006 = vunpack.c.h.b16 %v320
    %v1007 = vunpack.c.l.b16 %v321
    %v1008 = vunpack.c.h.b16 %v321
    %v1009 = vunpack.c.l.b16 %v322
    %v1010 = vunpack.c.h.b16 %v322
    %v1011 = vunpack.c.l.b16 %v323
    %v1012 = vunpack.c.h.b16 %v323
    %v1013 = vunpack.c.l.b16 %v324
    %v1014 = vunpack.c.h.b16 %v324
    %v1015 = vunpack.c.l.b16 %v325
    %v1016 = vunpack.c.h.b16 %v325
    %v1017 = vunpack.c.l.b16 %v326
    %v1018 = vunpack.c.h.b16 %v326
    %v1019 = vunpack.c.l.b16 %v327
    %v1020 = vunpack.c.h.b16 %v327
    %v1021 = vunpack.c.l.b16 %v328
    %v1022 = vunpack.c.h.b16 %v328
    %v1023 = vpack.c.b16 %v579, %v575
    %v1024 = vpack.c.b16 %v580, %v576
    %v1025 = vpack.c.b16 %v581, %v577
    %v1026 = vpack.c.b16 %v582, %v578
    %v1027 = vpack.c.b16 %v587, %v583
    %v1028 = vpack.c.b16 %v588, %v584
    %v1029 = vpack.c.b16 %v589, %v585
    %v1030 = vpack.c.b16 %v590, %v586
    %v1031 = vpack.c.b16 %v595, %v591
    %v1032 = vpack.c.b16 %v596, %v592
    %v1033 = vpack.c.b16 %v597, %v593
    %v1034 = vpack.c.b16 %v598, %v594
    %v1035 = vpack.c.b16 %v603, %v599
    %v1036 = vpack.c.b16 %v604, %v600
    %v1037 = vpack.c.b16 %v605, %v601
    %v1038 = vpack.c.b16 %v606, %v602
    %v1039 = vpack.c.b16 %v611, %v607
    %v1040 = vpack.c.b16 %v612, %v608
    %v1041 = vpack.c.b16 %v613, %v609
    %v1042 = vpack.c.b16 %v614, %v610
    %v1043 = vpack.c.b16 %v619, %v615
    %v1044 = vpack.c.b16 %v620, %v616
    %v1045 = vpack.c.b16 %v621, %v617
    %v1046 = vpack.c.b16 %v622, %v618
    %v1047 = vpack.c.b16 %v627, %v623
    %v1048 = vpack.c.b16 %v628, %v624
    %v1049 = vpack.c.b16 %v629, %v625
    %v1050 = vpack.c.b16 %v630, %v626
    %v1051 = vpack.c.b16 %v635, %v631
    %v1052 = vpack.c.b16 %v636, %v632
    %v1053 = vpack.c.b16 %v637, %v633
    %v1054 = vpack.c.b16 %v638, %v634
    %v1055 = vpack.c.b16 %v643, %v639
    %v1056 = vpack.c.b16 %v644, %v640
    %v1057 = vpack.c.b16 %v645, %v641
    %v1058 = vpack.c.b16 %v646, %v642
    %v1059 = vpack.c.b16 %v651, %v647
    %v1060 = vpack.c.b16 %v652, %v648
    %v1061 = vpack.c.b16 %v653, %v649
    %v1062 = vpack.c.b16 %v654, %v650
    %v1063 = vpack.c.b16 %v659, %v655
    %v1064 = vpack.c.b16 %v660, %v656
    %v1065 = vpack.c.b16 %v661, %v657
    %v1066 = vpack.c.b16 %v662, %v658
    %v1067 = vpack.c.b16 %v667, %v663
    %v1068 = vpack.c.b16 %v668, %v664
    %v1069 = vpack.c.b16 %v669, %v665
    %v1070 = vpack.c.b16 %v670, %v666
    %v1071 = vpack.c.b16 %v675, %v671
    %v1072 = vpack.c.b16 %v676, %v672
    %v1073 = vpack.c.b16 %v677, %v673
    %v1074 = vpack.c.b16 %v678, %v674
    %v1075 = vpack.c.b16 %v683, %v679
    %v1076 = vpack.c.b16 %v684, %v680
    %v1077 = vpack.c.b16 %v685, %v681
    %v1078 = vpack.c.b16 %v686, %v682
    %v1079 = vpack.c.b16 %v691, %v687
    %v1080 = vpack.c.b16 %v692, %v688
    %v1081 = vpack.c.b16 %v693, %v689
    %v1082 = vpack.c.b16 %v694, %v690
    %v1083 = vpack.c.b16 %v699, %v695
    %v1084 = vpack.c.b16 %v700, %v696
    %v1085 = vpack.c.b16 %v701, %v697
    %v1086 = vpack.c.b16 %v702, %v698
    %v1087 = vpack.c.b16 %v707, %v703
    %v1088 = vpack.c.b16 %v708, %v704
    %v1089 = vpack.c.b16 %v709, %v705
    %v1090 = vpack.c.b16 %v710, %v706
    %v1091 = vpack.c.b16 %v715, %v711
    %v1092 = vpack.c.b16 %v716, %v712
    %v1093 = vpack.c.b16 %v717, %v713
    %v1094 = vpack.c.b16 %v718, %v714
    %v1095 = vpack.c.b16 %v723, %v719
    %v1096 = vpack.c.b16 %v724, %v720
    %v1097 = vpack.c.b16 %v725, %v721
    %v1098 = vpack.c.b16 %v726, %v722
    %v1099 = vpack.c.b16 %v731, %v727
    %v1100 = vpack.c.b16 %v732, %v728
    %v1101 = vpack.c.b16 %v733, %v729
    %v1102 = vpack.c.b16 %v734, %v730
    %v1103 = vpack.c.b16 %v739, %v735
    %v1104 = vpack.c.b16 %v740, %v736
    %v1105 = vpack.c.b16 %v741, %v737
    %v1106 = vpack.c.b16 %v742, %v738
    %v1107 = vpack.c.b16 %v747, %v743
    %v1108 = vpack.c.b16 %v748, %v744
    %v1109 = vpack.c.b16 %v749, %v745
    %v1110 = vpack.c.b16 %v750, %v746
    %v1111 = vpack.c.b16 %v755, %v751
    %v1112 = vpack.c.b16 %v756, %v752
    %v1113 = vpack.c.b16 %v757, %v753
    %v1114 = vpack.c.b16 %v758, %v754
    %v1115 = vpack.c.b16 %v763, %v759
    %v1116 = vpack.c.b16 %v764, %v760
    %v1117 = vpack.c.b16 %v765, %v761
    %v1118 = vpack.c.b16 %v766, %v762
    %v1119 = vpack.c.b16 %v771, %v767
    %v1120 = vpack.c.b16 %v772, %v768
    %v1121 = vpack.c.b16 %v773, %v769
    %v1122 = vpack.c.b16 %v774, %v770
    %v1123 = vpack.c.b16 %v779, %v775
    %v1124 = vpack.c.b16 %v780, %v776
    %v1125 = vpack.c.b16 %v781, %v777
    %v1126 = vpack.c.b16 %v782, %v778
    %v1127 = vpack.c.b16 %v787, %v783
    %v1128 = vpack.c.b16 %v788, %v784
    %v1129 = vpack.c.b16 %v789, %v785
    %v1130 = vpack.c.b16 %v790, %v786
    %v1131 = vpack.c.b16 %v795, %v791
    %v1132 = vpack.c.b16 %v796, %v792
    %v1133 = vpack.c.b16 %v797, %v793
    %v1134 = vpack.c.b16 %v798, %v794
    %v1135 = vpack.c.b16 %v803, %v799
    %v1136 = vpack.c.b16 %v804, %v800
    %v1137 = vpack.c.b16 %v805, %v801
    %v1138 = vpack.c.b16 %v806, %v802
    %v1139 = vpack.c.b16 %v811, %v807
    %v1140 = vpack.c.b16 %v812, %v808
    %v1141 = vpack.c.b16 %v813, %v809
    %v1142 = vpack.c.b16 %v814, %v810
    %v1143 = vpack.c.b16 %v819, %v815
    %v1144 = vpack.c.b16 %v820, %v816
    %v1145 = vpack.c.b16 %v821, %v817
    %v1146 = vpack.c.b16 %v822, %v818
    %v1147 = vpack.c.b16 %v827, %v823
    %v1148 = vpack.c.b16 %v828, %v824
    %v1149 = vpack.c.b16 %v829, %v825
    %v1150 = vpack.c.b16 %v830, %v826
    %v1151 = vpack.c.b16 %v835, %v831
    %v1152 = vpack.c.b16 %v836, %v832
    %v1153 = vpack.c.b16 %v837, %v833
    %v1154 = vpack.c.b16 %v838, %v834
    %v1155 = vpack.c.b16 %v843, %v839
    %v1156 = vpack.c.b16 %v844, %v840
    %v1157 = vpack.c.b16 %v845, %v841
    %v1158 = vpack.c.b16 %v846, %v842
    %v1159 = vpack.c.b16 %v851, %v847
    %v1160 = vpack.c.b16 %v852, %v848
    %v1161 = vpack.c.b16 %v853, %v849
    %v1162 = vpack.c.b16 %v854, %v850
    %v1163 = vpack.c.b16 %v859, %v855
    %v1164 = vpack.c.b16 %v860, %v856
    %v1165 = vpack.c.b16 %v861, %v857
    %v1166 = vpack.c.b16 %v862, %v858
    %v1167 = vpack.c.b16 %v867, %v863
    %v1168 = vpack.c.b16 %v868, %v864
    %v1169 = vpack.c.b16 %v869, %v865
    %v1170 = vpack.c.b16 %v870, %v866
    %v1171 = vpack.c.b16 %v875, %v871
    %v1172 = vpack.c.b16 %v876, %v872
    %v1173 = vpack.c.b16 %v877, %v873
    %v1174 = vpack.c.b16 %v878, %v874
    %v1175 = vpack.c.b16 %v883, %v879
    %v1176 = vpack.c.b16 %v884, %v880
    %v1177 = vpack.c.b16 %v885, %v881
    %v1178 = vpack.c.b16 %v886, %v882
    %v1179 = vpack.c.b16 %v891, %v887
    %v1180 = vpack.c.b16 %v892, %v888
    %v1181 = vpack.c.b16 %v893, %v889
    %v1182 = vpack.c.b16 %v894, %v890
    %v1183 = vpack.c.b16 %v899, %v895
    %v1184 = vpack.c.b16 %v900, %v896
    %v1185 = vpack.c.b16 %v901, %v897
    %v1186 = vpack.c.b16 %v902, %v898
    %v1187 = vpack.c.b16 %v907, %v903
    %v1188 = vpack.c.b16 %v908, %v904
    %v1189 = vpack.c.b16 %v909, %v905
    %v1190 = vpack.c.b16 %v910, %v906
    %v1191 = vpack.c.b16 %v915, %v911
    %v1192 = vpack.c.b16 %v916, %v912
    %v1193 = vpack.c.b16 %v917, %v913
    %v1194 = vpack.c.b16 %v918, %v914
    %v1195 = vpack.c.b16 %v923, %v919
    %v1196 = vpack.c.b16 %v924, %v920
    %v1197 = vpack.c.b16 %v925, %v921
    %v1198 = vpack.c.b16 %v926, %v922
    %v1199 = vpack.c.b16 %v931, %v927
    %v1200 = vpack.c.b16 %v932, %v928
    %v1201 = vpack.c.b16 %v933, %v929
    %v1202 = vpack.c.b16 %v934, %v930
    %v1203 = vpack.c.b16 %v939, %v935
    %v1204 = vpack.c.b16 %v940, %v936
    %v1205 = vpack.c.b16 %v941, %v937
    %v1206 = vpack.c.b16 %v942, %v938
    %v1207 = vpack.c.b16 %v947, %v943
    %v1208 = vpack.c.b16 %v948, %v944
    %v1209 = vpack.c.b16 %v949, %v945
    %v1210 = vpack.c.b16 %v950, %v946
    %v1211 = vpack.c.b16 %v955, %v951
    %v1212 = vpack.c.b16 %v956, %v952
    %v1213 = vpack.c.b16 %v957, %v953
    %v1214 = vpack.c.b16 %v958, %v954
    %v1215 = vpack.c.b16 %v963, %v959
    %v1216 = vpack.c.b16 %v964, %v960
    %v1217 = vpack.c.b16 %v965, %v961
    %v1218 = vpack.c.b16 %v966, %v962
    %v1219 = vpack.c.b16 %v971, %v967
    %v1220 = vpack.c.b16 %v972, %v968
    %v1221 = vpack.c.b16 %v973, %v969
    %v1222 = vpack.c.b16 %v974, %v970
    %v1223 = vpack.c.b16 %v979, %v975
    %v1224 = vpack.c.b16 %v980, %v976
    %v1225 = vpack.c.b16 %v981, %v977
    %v1226 = vpack.c.b16 %v982, %v978
    %v1227 = vpack.c.b16 %v987, %v983
    %v1228 = vpack.c.b16 %v988, %v984
    %v1229 = vpack.c.b16 %v989, %v985
    %v1230 = vpack.c.b16 %v990, %v986
    %v1231 = vpack.c.b16 %v995, %v991
    %v1232 = vpack.c.b16 %v996, %v992
    %v1233 = vpack.c.b16 %v997, %v993
    %v1234 = vpack.c.b16 %v998, %v994
    %v1235 = vpack.c.b16 %v1003, %v999
    %v1236 = vpack.c.b16 %v1004, %v1000
    %v1237 = vpack.c.b16 %v1005, %v1001
    %v1238 = vpack.c.b16 %v1006, %v1002
    %v1239 = vpack.c.b16 %v1011, %v1007
    %v1240 = vpack.c.b16 %v1012, %v1008
    %v1241 = vpack.c.b16 %v1013, %v1009
    %v1242 = vpack.c.b16 %v1014, %v1010
    %v1243 = vpack.c.b16 %v1019, %v1015
    %v1244 = vpack.c.b16 %v1020, %v1016
    %v1245 = vpack.c.b16 %v1021, %v1017
    %v1246 = vpack.c.b16 %v1022, %v1018
    %1471 = vmatprep.subr.bf16.mxu0 %v1024
    %1472 = vmatpush1.bf16.msra.mxu0 %v1023
    %1473 = vmatprep.subr.bf16.mxu0 %v1028
    %1474 = vmatpush1.bf16.msra.mxu0 %v1027
    %1475 = vmatprep.subr.bf16.mxu0 %v1032
    %1476 = vmatpush1.bf16.msra.mxu0 %v1031
    %1477 = vmatprep.subr.bf16.mxu0 %v1036
    %1478 = vmatpush1.bf16.msra.mxu0 %v1035
    %1479 = vmatprep.subr.bf16.mxu0 %v1040
    %1480 = vmatpush1.bf16.msra.mxu0 %v1039
    %1481 = vmatprep.subr.bf16.mxu0 %v1044
    %1482 = vmatpush1.bf16.msra.mxu0 %v1043
    %1483 = vmatprep.subr.bf16.mxu0 %v1048
    %1484 = vmatpush1.bf16.msra.mxu0 %v1047
    %1485 = vmatprep.subr.bf16.mxu0 %v1052
    %1486 = vmatpush1.bf16.msra.mxu0 %v1051
    %1487 = vmatprep.subr.bf16.mxu0 %v1056
    %1488 = vmatpush1.bf16.msra.mxu0 %v1055
    %1489 = vmatprep.subr.bf16.mxu0 %v1060
    %1490 = vmatpush1.bf16.msra.mxu0 %v1059
    %1491 = vmatprep.subr.bf16.mxu0 %v1064
    %1492 = vmatpush1.bf16.msra.mxu0 %v1063
    %1493 = vmatprep.subr.bf16.mxu0 %v1068
    %1494 = vmatpush1.bf16.msra.mxu0 %v1067
    %1495 = vmatprep.subr.bf16.mxu0 %v1072
    %1496 = vmatpush1.bf16.msra.mxu0 %v1071
    %1497 = vmatprep.subr.bf16.mxu0 %v1076
    %1498 = vmatpush1.bf16.msra.mxu0 %v1075
    %1499 = vmatprep.subr.bf16.mxu0 %v1080
    %1500 = vmatpush1.bf16.msra.mxu0 %v1079
    %1501 = vmatprep.subr.bf16.mxu0 %v1084
    %1502 = vmatpush1.bf16.msra.mxu0 %v1083
    %1503 = vmatprep.mubr.bf16.mxu0 %v99
    %1504 = vmatmul.mubr.bf16.gmra.mrb[0].mxu0 %v98
    %v1505 = vpop.f32.mrb[0].mxu0
    %v1506 = vadd.f32 %v334, %v1505
    %v1507 = vpop.f32.mrb[0].mxu0
    %v1508 = vadd.f32 %v338, %v1507
    %v1509 = vpop.f32.mrb[0].mxu0
    %v1510 = vpop.f32.mrb[0].mxu0
    %1511 = vdwg.mxu0
    %1512 = vmatprep.subr.bf16.mxu0 %v1088
    %1513 = vmatpush1.bf16.msra.mxu0 %v1087
    %1514 = vmatprep.subr.bf16.mxu0 %v1092
    %1515 = vmatpush1.bf16.msra.mxu0 %v1091
    %1516 = vmatprep.subr.bf16.mxu0 %v1096
    %1517 = vmatpush1.bf16.msra.mxu0 %v1095
    %1518 = vmatprep.subr.bf16.mxu0 %v1100
    %1519 = vmatpush1.bf16.msra.mxu0 %v1099
    %1520 = vmatprep.subr.bf16.mxu0 %v1104
    %1521 = vmatpush1.bf16.msra.mxu0 %v1103
    %1522 = vmatprep.subr.bf16.mxu0 %v1108
    %1523 = vmatpush1.bf16.msra.mxu0 %v1107
    %1524 = vmatprep.subr.bf16.mxu0 %v1112
    %1525 = vmatpush1.bf16.msra.mxu0 %v1111
    %1526 = vmatprep.subr.bf16.mxu0 %v1116
    %1527 = vmatpush1.bf16.msra.mxu0 %v1115
    %1528 = vmatprep.subr.bf16.mxu0 %v1120
    %1529 = vmatpush1.bf16.msra.mxu0 %v1119
    %1530 = vmatprep.subr.bf16.mxu0 %v1124
    %1531 = vmatpush1.bf16.msra.mxu0 %v1123
    %1532 = vmatprep.subr.bf16.mxu0 %v1128
    %1533 = vmatpush1.bf16.msra.mxu0 %v1127
    %1534 = vmatprep.subr.bf16.mxu0 %v1132
    %1535 = vmatpush1.bf16.msra.mxu0 %v1131
    %1536 = vmatprep.subr.bf16.mxu0 %v1136
    %1537 = vmatpush1.bf16.msra.mxu0 %v1135
    %1538 = vmatprep.subr.bf16.mxu0 %v1140
    %1539 = vmatpush1.bf16.msra.mxu0 %v1139
    %1540 = vmatprep.subr.bf16.mxu0 %v1144
    %1541 = vmatpush1.bf16.msra.mxu0 %v1143
    %1542 = vmatprep.subr.bf16.mxu0 %v1148
    %1543 = vmatpush1.bf16.msra.mxu0 %v1147
    %1544 = vmatprep.mubr.bf16.mxu0 %v101
    %1545 = vmatmul.mubr.bf16.gmra.mrb[0].mxu0 %v100
    %v1546 = vpop.f32.mrb[0].mxu0
    %v1547 = vadd.f32 %v1506, %v1546
    %v1548 = vpop.f32.mrb[0].mxu0
    %v1549 = vadd.f32 %v1508, %v1548
    %v1550 = vpop.f32.mrb[0].mxu0
    %v1551 = vpop.f32.mrb[0].mxu0
    %1552 = vdwg.mxu0
    %1553 = vmatprep.subr.bf16.mxu0 %v1152
    %1554 = vmatpush1.bf16.msra.mxu0 %v1151
    %1555 = vmatprep.subr.bf16.mxu0 %v1156
    %1556 = vmatpush1.bf16.msra.mxu0 %v1155
    %1557 = vmatprep.subr.bf16.mxu0 %v1160
    %1558 = vmatpush1.bf16.msra.mxu0 %v1159
    %1559 = vmatprep.subr.bf16.mxu0 %v1164
    %1560 = vmatpush1.bf16.msra.mxu0 %v1163
    %1561 = vmatprep.subr.bf16.mxu0 %v1168
    %1562 = vmatpush1.bf16.msra.mxu0 %v1167
    %1563 = vmatprep.subr.bf16.mxu0 %v1172
    %1564 = vmatpush1.bf16.msra.mxu0 %v1171
    %1565 = vmatprep.subr.bf16.mxu0 %v1176
    %1566 = vmatpush1.bf16.msra.mxu0 %v1175
    %1567 = vmatprep.subr.bf16.mxu0 %v1180
    %1568 = vmatpush1.bf16.msra.mxu0 %v1179
    %1569 = vmatprep.subr.bf16.mxu0 %v1184
    %1570 = vmatpush1.bf16.msra.mxu0 %v1183
    %1571 = vmatprep.subr.bf16.mxu0 %v1188
    %1572 = vmatpush1.bf16.msra.mxu0 %v1187
    %1573 = vmatprep.subr.bf16.mxu0 %v1192
    %1574 = vmatpush1.bf16.msra.mxu0 %v1191
    %1575 = vmatprep.subr.bf16.mxu0 %v1196
    %1576 = vmatpush1.bf16.msra.mxu0 %v1195
    %1577 = vmatprep.subr.bf16.mxu0 %v1200
    %1578 = vmatpush1.bf16.msra.mxu0 %v1199
    %1579 = vmatprep.subr.bf16.mxu0 %v1204
    %1580 = vmatpush1.bf16.msra.mxu0 %v1203
    %1581 = vmatprep.subr.bf16.mxu0 %v1208
    %1582 = vmatpush1.bf16.msra.mxu0 %v1207
    %1583 = vmatprep.subr.bf16.mxu0 %v1212
    %1584 = vmatpush1.bf16.msra.mxu0 %v1211
    %1585 = vmatprep.mubr.bf16.mxu0 %v103
    %1586 = vmatmul.mubr.bf16.gmra.mrb[0].mxu0 %v102
    %v1587 = vpop.f32.mrb[0].mxu0
    %v1588 = vadd.f32 %v1547, %v1587
    %v1589 = vpop.f32.mrb[0].mxu0
    %v1590 = vadd.f32 %v1549, %v1589
    %v1591 = vpop.f32.mrb[0].mxu0
    %v1592 = vpop.f32.mrb[0].mxu0
    %1593 = vdwg.mxu0
    %1594 = vmatprep.subr.bf16.mxu0 %v1216
    %1595 = vmatpush1.bf16.msra.mxu0 %v1215
    %1596 = vmatprep.subr.bf16.mxu0 %v1220
    %1597 = vmatpush1.bf16.msra.mxu0 %v1219
    %1598 = vmatprep.subr.bf16.mxu0 %v1224
    %1599 = vmatpush1.bf16.msra.mxu0 %v1223
    %1600 = vmatprep.subr.bf16.mxu0 %v1228
    %1601 = vmatpush1.bf16.msra.mxu0 %v1227
    %1602 = vmatprep.subr.bf16.mxu0 %v1232
    %1603 = vmatpush1.bf16.msra.mxu0 %v1231
    %1604 = vmatprep.subr.bf16.mxu0 %v1236
    %1605 = vmatpush1.bf16.msra.mxu0 %v1235
    %1606 = vmatprep.subr.bf16.mxu0 %v1240
    %1607 = vmatpush1.bf16.msra.mxu0 %v1239
    %1608 = vmatprep.subr.bf16.mxu0 %v1244
    %1609 = vmatpush1.bf16.msra.mxu0 %v1243
    %1610 = vmatprep.subr.bf16.mxu0 0
    %1611 = vmatpush1.bf16.msra.mxu0 0
    %1612 = vmatprep.subr.bf16.mxu0 0
    %1613 = vmatpush1.bf16.msra.mxu0 0
    %1614 = vmatprep.subr.bf16.mxu0 0
    %1615 = vmatpush1.bf16.msra.mxu0 0
    %1616 = vmatprep.subr.bf16.mxu0 0
    %1617 = vmatpush1.bf16.msra.mxu0 0
    %1618 = vmatprep.subr.bf16.mxu0 0
    %1619 = vmatpush1.bf16.msra.mxu0 0
    %1620 = vmatprep.subr.bf16.mxu0 0
    %1621 = vmatpush1.bf16.msra.mxu0 0
    %1622 = vmatprep.subr.bf16.mxu0 0
    %1623 = vmatpush1.bf16.msra.mxu0 0
    %1624 = vmatprep.subr.bf16.mxu0 0
    %1625 = vmatpush1.bf16.msra.mxu0 0
    %1626 = vmatprep.mubr.bf16.mxu0 0
    %1627 = vmatmul.mubr.bf16.gmra.mrb[0].mxu0 %v104
    %v1628 = vpop.f32.mrb[0].mxu0
    %v1629 = vadd.f32 %v1588, %v1628
    %v1630 = vpop.f32.mrb[0].mxu0
    %v1631 = vadd.f32 %v1590, %v1630
    %v1632 = vpop.f32.mrb[0].mxu0
    %v1633 = vpop.f32.mrb[0].mxu0
    %1634 = vdwg.mxu0
    %1635 = vmatprep.subr.bf16.mxu0 %v1026
    %1636 = vmatpush1.bf16.msra.mxu0 %v1025
    %1637 = vmatprep.subr.bf16.mxu0 %v1030
    %1638 = vmatpush1.bf16.msra.mxu0 %v1029
    %1639 = vmatprep.subr.bf16.mxu0 %v1034
    %1640 = vmatpush1.bf16.msra.mxu0 %v1033
    %1641 = vmatprep.subr.bf16.mxu0 %v1038
    %1642 = vmatpush1.bf16.msra.mxu0 %v1037
    %1643 = vmatprep.subr.bf16.mxu0 %v1042
    %1644 = vmatpush1.bf16.msra.mxu0 %v1041
    %1645 = vmatprep.subr.bf16.mxu0 %v1046
    %1646 = vmatpush1.bf16.msra.mxu0 %v1045
    %1647 = vmatprep.subr.bf16.mxu0 %v1050
    %1648 = vmatpush1.bf16.msra.mxu0 %v1049
    %1649 = vmatprep.subr.bf16.mxu0 %v1054
    %1650 = vmatpush1.bf16.msra.mxu0 %v1053
    %1651 = vmatprep.subr.bf16.mxu0 %v1058
    %1652 = vmatpush1.bf16.msra.mxu0 %v1057
    %1653 = vmatprep.subr.bf16.mxu0 %v1062
    %1654 = vmatpush1.bf16.msra.mxu0 %v1061
    %1655 = vmatprep.subr.bf16.mxu0 %v1066
    %1656 = vmatpush1.bf16.msra.mxu0 %v1065
    %1657 = vmatprep.subr.bf16.mxu0 %v1070
    %1658 = vmatpush1.bf16.msra.mxu0 %v1069
    %1659 = vmatprep.subr.bf16.mxu0 %v1074
    %1660 = vmatpush1.bf16.msra.mxu0 %v1073
    %1661 = vmatprep.subr.bf16.mxu0 %v1078
    %1662 = vmatpush1.bf16.msra.mxu0 %v1077
    %1663 = vmatprep.subr.bf16.mxu0 %v1082
    %1664 = vmatpush1.bf16.msra.mxu0 %v1081
    %1665 = vmatprep.subr.bf16.mxu0 %v1086
    %1666 = vmatpush1.bf16.msra.mxu0 %v1085
    %1667 = vmatprep.mubr.bf16.mxu0 %v99
    %1668 = vmatmul.mubr.bf16.gmra.mrb[0].mxu0 %v98
    %v1669 = vpop.f32.mrb[0].mxu0
    %v1670 = vadd.f32 %v342, %v1669
    %v1671 = vpop.f32.mrb[0].mxu0
    %v1672 = vadd.f32 %v346, %v1671
    %v1673 = vpop.f32.mrb[0].mxu0
    %v1674 = vpop.f32.mrb[0].mxu0
    %1675 = vdwg.mxu0
    %1676 = vmatprep.subr.bf16.mxu0 %v1090
    %1677 = vmatpush1.bf16.msra.mxu0 %v1089
    %1678 = vmatprep.subr.bf16.mxu0 %v1094
    %1679 = vmatpush1.bf16.msra.mxu0 %v1093
    %1680 = vmatprep.subr.bf16.mxu0 %v1098
    %1681 = vmatpush1.bf16.msra.mxu0 %v1097
    %1682 = vmatprep.subr.bf16.mxu0 %v1102
    %1683 = vmatpush1.bf16.msra.mxu0 %v1101
    %1684 = vmatprep.subr.bf16.mxu0 %v1106
    %1685 = vmatpush1.bf16.msra.mxu0 %v1105
    %1686 = vmatprep.subr.bf16.mxu0 %v1110
    %1687 = vmatpush1.bf16.msra.mxu0 %v1109
    %1688 = vmatprep.subr.bf16.mxu0 %v1114
    %1689 = vmatpush1.bf16.msra.mxu0 %v1113
    %1690 = vmatprep.subr.bf16.mxu0 %v1118
    %1691 = vmatpush1.bf16.msra.mxu0 %v1117
    %1692 = vmatprep.subr.bf16.mxu0 %v1122
    %1693 = vmatpush1.bf16.msra.mxu0 %v1121
    %1694 = vmatprep.subr.bf16.mxu0 %v1126
    %1695 = vmatpush1.bf16.msra.mxu0 %v1125
    %1696 = vmatprep.subr.bf16.mxu0 %v1130
    %1697 = vmatpush1.bf16.msra.mxu0 %v1129
    %1698 = vmatprep.subr.bf16.mxu0 %v1134
    %1699 = vmatpush1.bf16.msra.mxu0 %v1133
    %1700 = vmatprep.subr.bf16.mxu0 %v1138
    %1701 = vmatpush1.bf16.msra.mxu0 %v1137
    %1702 = vmatprep.subr.bf16.mxu0 %v1142
    %1703 = vmatpush1.bf16.msra.mxu0 %v1141
    %1704 = vmatprep.subr.bf16.mxu0 %v1146
    %1705 = vmatpush1.bf16.msra.mxu0 %v1145
    %1706 = vmatprep.subr.bf16.mxu0 %v1150
    %1707 = vmatpush1.bf16.msra.mxu0 %v1149
    %1708 = vmatprep.mubr.bf16.mxu0 %v101
    %1709 = vmatmul.mubr.bf16.gmra.mrb[0].mxu0 %v100
    %v1710 = vpop.f32.mrb[0].mxu0
    %v1711 = vadd.f32 %v1670, %v1710
    %v1712 = vpop.f32.mrb[0].mxu0
    %v1713 = vadd.f32 %v1672, %v1712
    %v1714 = vpop.f32.mrb[0].mxu0
    %v1715 = vpop.f32.mrb[0].mxu0
    %1716 = vdwg.mxu0
    %1717 = vmatprep.subr.bf16.mxu0 %v1154
    %1718 = vmatpush1.bf16.msra.mxu0 %v1153
    %1719 = vmatprep.subr.bf16.mxu0 %v1158
    %1720 = vmatpush1.bf16.msra.mxu0 %v1157
    %1721 = vmatprep.subr.bf16.mxu0 %v1162
    %1722 = vmatpush1.bf16.msra.mxu0 %v1161
    %1723 = vmatprep.subr.bf16.mxu0 %v1166
    %1724 = vmatpush1.bf16.msra.mxu0 %v1165
    %1725 = vmatprep.subr.bf16.mxu0 %v1170
    %1726 = vmatpush1.bf16.msra.mxu0 %v1169
    %1727 = vmatprep.subr.bf16.mxu0 %v1174
    %1728 = vmatpush1.bf16.msra.mxu0 %v1173
    %1729 = vmatprep.subr.bf16.mxu0 %v1178
    %1730 = vmatpush1.bf16.msra.mxu0 %v1177
    %1731 = vmatprep.subr.bf16.mxu0 %v1182
    %1732 = vmatpush1.bf16.msra.mxu0 %v1181
    %1733 = vmatprep.subr.bf16.mxu0 %v1186
    %1734 = vmatpush1.bf16.msra.mxu0 %v1185
    %1735 = vmatprep.subr.bf16.mxu0 %v1190
    %1736 = vmatpush1.bf16.msra.mxu0 %v1189
    %1737 = vmatprep.subr.bf16.mxu0 %v1194
    %1738 = vmatpush1.bf16.msra.mxu0 %v1193
    %1739 = vmatprep.subr.bf16.mxu0 %v1198
    %1740 = vmatpush1.bf16.msra.mxu0 %v1197
    %1741 = vmatprep.subr.bf16.mxu0 %v1202
    %1742 = vmatpush1.bf16.msra.mxu0 %v1201
    %1743 = vmatprep.subr.bf16.mxu0 %v1206
    %1744 = vmatpush1.bf16.msra.mxu0 %v1205
    %1745 = vmatprep.subr.bf16.mxu0 %v1210
    %1746 = vmatpush1.bf16.msra.mxu0 %v1209
    %1747 = vmatprep.subr.bf16.mxu0 %v1214
    %1748 = vmatpush1.bf16.msra.mxu0 %v1213
    %1749 = vmatprep.mubr.bf16.mxu0 %v103
    %1750 = vmatmul.mubr.bf16.gmra.mrb[0].mxu0 %v102
    %v1751 = vpop.f32.mrb[0].mxu0
    %v1752 = vadd.f32 %v1711, %v1751
    %v1753 = vpop.f32.mrb[0].mxu0
    %v1754 = vadd.f32 %v1713, %v1753
    %v1755 = vpop.f32.mrb[0].mxu0
    %v1756 = vpop.f32.mrb[0].mxu0
    %1757 = vdwg.mxu0
    %1758 = vmatprep.subr.bf16.mxu0 %v1218
    %1759 = vmatpush1.bf16.msra.mxu0 %v1217
    %1760 = vmatprep.subr.bf16.mxu0 %v1222
    %1761 = vmatpush1.bf16.msra.mxu0 %v1221
    %1762 = vmatprep.subr.bf16.mxu0 %v1226
    %1763 = vmatpush1.bf16.msra.mxu0 %v1225
    %1764 = vmatprep.subr.bf16.mxu0 %v1230
    %1765 = vmatpush1.bf16.msra.mxu0 %v1229
    %1766 = vmatprep.subr.bf16.mxu0 %v1234
    %1767 = vmatpush1.bf16.msra.mxu0 %v1233
    %1768 = vmatprep.subr.bf16.mxu0 %v1238
    %1769 = vmatpush1.bf16.msra.mxu0 %v1237
    %1770 = vmatprep.subr.bf16.mxu0 %v1242
    %1771 = vmatpush1.bf16.msra.mxu0 %v1241
    %1772 = vmatprep.subr.bf16.mxu0 %v1246
    %1773 = vmatpush1.bf16.msra.mxu0 %v1245
    %1774 = vmatprep.subr.bf16.mxu0 0
    %1775 = vmatpush1.bf16.msra.mxu0 0
    %1776 = vmatprep.subr.bf16.mxu0 0
    %1777 = vmatpush1.bf16.msra.mxu0 0
    %1778 = vmatprep.subr.bf16.mxu0 0
    %1779 = vmatpush1.bf16.msra.mxu0 0
    %1780 = vmatprep.subr.bf16.mxu0 0
    %1781 = vmatpush1.bf16.msra.mxu0 0
    %1782 = vmatprep.subr.bf16.mxu0 0
    %1783 = vmatpush1.bf16.msra.mxu0 0
    %1784 = vmatprep.subr.bf16.mxu0 0
    %1785 = vmatpush1.bf16.msra.mxu0 0
    %1786 = vmatprep.subr.bf16.mxu0 0
    %1787 = vmatpush1.bf16.msra.mxu0 0
    %1788 = vmatprep.subr.bf16.mxu0 0
    %1789 = vmatpush1.bf16.msra.mxu0 0
    %1790 = vmatprep.mubr.bf16.mxu0 0
    %1791 = vmatmul.mubr.bf16.gmra.mrb[0].mxu0 %v104
    %v1792 = vpop.f32.mrb[0].mxu0
    %v1793 = vadd.f32 %v1752, %v1792
    %v1794 = vpop.f32.mrb[0].mxu0
    %v1795 = vadd.f32 %v1754, %v1794
    %v1796 = vpop.f32.mrb[0].mxu0
    %v1797 = vpop.f32.mrb[0].mxu0
    %1798 = vdwg.mxu0
    %v1799 = vmax.f32 %v1629, 0.0
    %v1800 = vmax.f32 %v1631, 0.0
    %v1801 = vmax.f32 %v1793, 0.0
    %v1802 = vmax.f32 %v1795, 0.0
    %v1803 = vpack.c.bf16 %v1799, %v1799
    %v1804 = vpack.c.bf16 %v1800, %v1800
    %v1805 = vpack.c.bf16 %v1801, %v1801
    %v1806 = vpack.c.bf16 %v1802, %v1802
    %v1807 = vld [vmem:[%s4] sm:$0xff]
    %v1808 = vld [vmem:[%s4 + $0x8] sm:$0xff]
    %v1809 = vld [vmem:[%s4 + $0x10] sm:$0xff]
    %v1810 = vld [vmem:[%s4 + $0x18] sm:$0xff]
    %v1811 = vld [vmem:[%s4 + $0x20] sm:$0xff]
    %v1812 = vld [vmem:[%s4 + $0x28] sm:$0xff]
    %v1813 = vld [vmem:[%s4 + $0x30] sm:$0xff]
    %v1814 = vld [vmem:[%s4 + $0x38] sm:$0xff]
    %v1815 = vld [vmem:[%s4 + $0x40] sm:$0xff]
    %v1816 = vld [vmem:[%s4 + $0x48] sm:$0xff]
    %v1817 = vld [vmem:[%s4 + $0x50] sm:$0xff]
    %v1818 = vld [vmem:[%s4 + $0x58] sm:$0xff]
    %v1819 = vld [vmem:[%s4 + $0x60] sm:$0xff]
    %v1820 = vld [vmem:[%s4 + $0x68] sm:$0xff]
    %v1821 = vld [vmem:[%s4 + $0x70] sm:$0xff]
    %v1822 = vld [vmem:[%s4 + $0x78] sm:$0xff]
    %v1823 = vld [vmem:[%s4 + $0x80] sm:$0xff]
    %v1824 = vld [vmem:[%s4 + $0x88] sm:$0xff]
    %v1825 = vld [vmem:[%s4 + $0x90] sm:$0xff]
    %v1826 = vld [vmem:[%s4 + $0x98] sm:$0xff]
    %v1827 = vld [vmem:[%s4 + $0xa0] sm:$0xff]
    %v1828 = vld [vmem:[%s4 + $0xa8] sm:$0xff]
    %v1829 = vld [vmem:[%s4 + $0xb0] sm:$0xff]
    %v1830 = vld [vmem:[%s4 + $0xb8] sm:$0xff]
    %v1831 = vld [vmem:[%s4 + $0xc0] sm:$0xff]
    %v1832 = vld [vmem:[%s4 + $0xc8] sm:$0xff]
    %v1833 = vld [vmem:[%s4 + $0xd0] sm:$0xff]
    %v1834 = vld [vmem:[%s4 + $0xd8] sm:$0xff]
    %v1835 = vld [vmem:[%s4 + $0xe0] sm:$0xff]
    %v1836 = vld [vmem:[%s4 + $0xe8] sm:$0xff]
    %v1837 = vld [vmem:[%s4 + $0xf0] sm:$0xff]
    %v1838 = vld [vmem:[%s4 + $0xf8] sm:$0xff]
    %v1839 = vld [vmem:[%s4 + $0x100] sm:$0xff]
    %v1840 = vld [vmem:[%s4 + $0x108] sm:$0xff]
    %v1841 = vld [vmem:[%s4 + $0x110] sm:$0xff]
    %v1842 = vld [vmem:[%s4 + $0x118] sm:$0xff]
    %v1843 = vld [vmem:[%s4 + $0x120] sm:$0xff]
    %v1844 = vld [vmem:[%s4 + $0x128] sm:$0xff]
    %v1845 = vld [vmem:[%s4 + $0x130] sm:$0xff]
    %v1846 = vld [vmem:[%s4 + $0x138] sm:$0xff]
    %v1847 = vld [vmem:[%s4 + $0x140] sm:$0xff]
    %v1848 = vld [vmem:[%s4 + $0x148] sm:$0xff]
    %v1849 = vld [vmem:[%s4 + $0x150] sm:$0xff]
    %v1850 = vld [vmem:[%s4 + $0x158] sm:$0xff]
    %v1851 = vld [vmem:[%s4 + $0x160] sm:$0xff]
    %v1852 = vld [vmem:[%s4 + $0x168] sm:$0xff]
    %v1853 = vld [vmem:[%s4 + $0x170] sm:$0xff]
    %v1854 = vld [vmem:[%s4 + $0x178] sm:$0xff]
    %v1855 = vld [vmem:[%s4 + $0x180] sm:$0xff]
    %v1856 = vld [vmem:[%s4 + $0x188] sm:$0xff]
    %v1857 = vld [vmem:[%s4 + $0x190] sm:$0xff]
    %v1858 = vld [vmem:[%s4 + $0x198] sm:$0xff]
    %v1859 = vld [vmem:[%s4 + $0x1a0] sm:$0xff]
    %v1860 = vld [vmem:[%s4 + $0x1a8] sm:$0xff]
    %v1861 = vld [vmem:[%s4 + $0x1b0] sm:$0xff]
    %v1862 = vld [vmem:[%s4 + $0x1b8] sm:$0xff]
    %v1863 = vld [vmem:[%s4 + $0x1c0] sm:$0xff]
    %v1864 = vld [vmem:[%s4 + $0x1c8] sm:$0xff]
    %v1865 = vld [vmem:[%s4 + $0x1d0] sm:$0xff]
    %v1866 = vld [vmem:[%s4 + $0x1d8] sm:$0xff]
    %v1867 = vld [vmem:[%s4 + $0x1e0] sm:$0xff]
    %v1868 = vld [vmem:[%s4 + $0x1e8] sm:$0xff]
    %v1869 = vld [vmem:[%s4 + $0x1f0] sm:$0xff]
    %v1870 = vld [vmem:[%s4 + $0x1f8] sm:$0xff]
    %v1871 = vld [vmem:[%s5] sm:$0x3]
    %v1873 = vlaneseq
    %v1874 = vshrl.u32 %v1873, 7
    %v1875 = vsub.s32 0, %v1874
    %v1876 = vrot.slane %v1871, %v1875
    %v1877 = vlaneseq
    %v1878 = vshrl.u32 %v1877, 7
    %v1879 = vsub.s32 1, %v1878
    %v1880 = vrot.slane %v1871, %v1879
    %v1947 = vunpack.c.l.b16 %v1807
    %v1948 = vunpack.c.h.b16 %v1807
    %v1949 = vunpack.c.l.b16 %v1808
    %v1950 = vunpack.c.h.b16 %v1808
    %v1951 = vunpack.c.l.b16 %v1809
    %v1952 = vunpack.c.h.b16 %v1809
    %v1953 = vunpack.c.l.b16 %v1810
    %v1954 = vunpack.c.h.b16 %v1810
    %v1955 = vunpack.c.l.b16 %v1811
    %v1956 = vunpack.c.h.b16 %v1811
    %v1957 = vunpack.c.l.b16 %v1812
    %v1958 = vunpack.c.h.b16 %v1812
    %v1959 = vunpack.c.l.b16 %v1813
    %v1960 = vunpack.c.h.b16 %v1813
    %v1961 = vunpack.c.l.b16 %v1814
    %v1962 = vunpack.c.h.b16 %v1814
    %v1963 = vunpack.c.l.b16 %v1815
    %v1964 = vunpack.c.h.b16 %v1815
    %v1965 = vunpack.c.l.b16 %v1816
    %v1966 = vunpack.c.h.b16 %v1816
    %v1967 = vunpack.c.l.b16 %v1817
    %v1968 = vunpack.c.h.b16 %v1817
    %v1969 = vunpack.c.l.b16 %v1818
    %v1970 = vunpack.c.h.b16 %v1818
    %v1971 = vunpack.c.l.b16 %v1819
    %v1972 = vunpack.c.h.b16 %v1819
    %v1973 = vunpack.c.l.b16 %v1820
    %v1974 = vunpack.c.h.b16 %v1820
    %v1975 = vunpack.c.l.b16 %v1821
    %v1976 = vunpack.c.h.b16 %v1821
    %v1977 = vunpack.c.l.b16 %v1822
    %v1978 = vunpack.c.h.b16 %v1822
    %v1979 = vunpack.c.l.b16 %v1823
    %v1980 = vunpack.c.h.b16 %v1823
    %v1981 = vunpack.c.l.b16 %v1824
    %v1982 = vunpack.c.h.b16 %v1824
    %v1983 = vunpack.c.l.b16 %v1825
    %v1984 = vunpack.c.h.b16 %v1825
    %v1985 = vunpack.c.l.b16 %v1826
    %v1986 = vunpack.c.h.b16 %v1826
    %v1987 = vunpack.c.l.b16 %v1827
    %v1988 = vunpack.c.h.b16 %v1827
    %v1989 = vunpack.c.l.b16 %v1828
    %v1990 = vunpack.c.h.b16 %v1828
    %v1991 = vunpack.c.l.b16 %v1829
    %v1992 = vunpack.c.h.b16 %v1829
    %v1993 = vunpack.c.l.b16 %v1830
    %v1994 = vunpack.c.h.b16 %v1830
    %v1995 = vunpack.c.l.b16 %v1831
    %v1996 = vunpack.c.h.b16 %v1831
    %v1997 = vunpack.c.l.b16 %v1832
    %v1998 = vunpack.c.h.b16 %v1832
    %v1999 = vunpack.c.l.b16 %v1833
    %v2000 = vunpack.c.h.b16 %v1833
    %v2001 = vunpack.c.l.b16 %v1834
    %v2002 = vunpack.c.h.b16 %v1834
    %v2003 = vunpack.c.l.b16 %v1835
    %v2004 = vunpack.c.h.b16 %v1835
    %v2005 = vunpack.c.l.b16 %v1836
    %v2006 = vunpack.c.h.b16 %v1836
    %v2007 = vunpack.c.l.b16 %v1837
    %v2008 = vunpack.c.h.b16 %v1837
    %v2009 = vunpack.c.l.b16 %v1838
    %v2010 = vunpack.c.h.b16 %v1838
    %v2011 = vunpack.c.l.b16 %v1839
    %v2012 = vunpack.c.h.b16 %v1839
    %v2013 = vunpack.c.l.b16 %v1840
    %v2014 = vunpack.c.h.b16 %v1840
    %v2015 = vunpack.c.l.b16 %v1841
    %v2016 = vunpack.c.h.b16 %v1841
    %v2017 = vunpack.c.l.b16 %v1842
    %v2018 = vunpack.c.h.b16 %v1842
    %v2019 = vunpack.c.l.b16 %v1843
    %v2020 = vunpack.c.h.b16 %v1843
    %v2021 = vunpack.c.l.b16 %v1844
    %v2022 = vunpack.c.h.b16 %v1844
    %v2023 = vunpack.c.l.b16 %v1845
    %v2024 = vunpack.c.h.b16 %v1845
    %v2025 = vunpack.c.l.b16 %v1846
    %v2026 = vunpack.c.h.b16 %v1846
    %v2027 = vunpack.c.l.b16 %v1847
    %v2028 = vunpack.c.h.b16 %v1847
    %v2029 = vunpack.c.l.b16 %v1848
    %v2030 = vunpack.c.h.b16 %v1848
    %v2031 = vunpack.c.l.b16 %v1849
    %v2032 = vunpack.c.h.b16 %v1849
    %v2033 = vunpack.c.l.b16 %v1850
    %v2034 = vunpack.c.h.b16 %v1850
    %v2035 = vunpack.c.l.b16 %v1851
    %v2036 = vunpack.c.h.b16 %v1851
    %v2037 = vunpack.c.l.b16 %v1852
    %v2038 = vunpack.c.h.b16 %v1852
    %v2039 = vunpack.c.l.b16 %v1853
    %v2040 = vunpack.c.h.b16 %v1853
    %v2041 = vunpack.c.l.b16 %v1854
    %v2042 = vunpack.c.h.b16 %v1854
    %v2043 = vunpack.c.l.b16 %v1855
    %v2044 = vunpack.c.h.b16 %v1855
    %v2045 = vunpack.c.l.b16 %v1856
    %v2046 = vunpack.c.h.b16 %v1856
    %v2047 = vunpack.c.l.b16 %v1857
    %v2048 = vunpack.c.h.b16 %v1857
    %v2049 = vunpack.c.l.b16 %v1858
    %v2050 = vunpack.c.h.b16 %v1858
    %v2051 = vunpack.c.l.b16 %v1859
    %v2052 = vunpack.c.h.b16 %v1859
    %v2053 = vunpack.c.l.b16 %v1860
    %v2054 = vunpack.c.h.b16 %v1860
    %v2055 = vunpack.c.l.b16 %v1861
    %v2056 = vunpack.c.h.b16 %v1861
    %v2057 = vunpack.c.l.b16 %v1862
    %v2058 = vunpack.c.h.b16 %v1862
    %v2059 = vunpack.c.l.b16 %v1863
    %v2060 = vunpack.c.h.b16 %v1863
    %v2061 = vunpack.c.l.b16 %v1864
    %v2062 = vunpack.c.h.b16 %v1864
    %v2063 = vunpack.c.l.b16 %v1865
    %v2064 = vunpack.c.h.b16 %v1865
    %v2065 = vunpack.c.l.b16 %v1866
    %v2066 = vunpack.c.h.b16 %v1866
    %v2067 = vunpack.c.l.b16 %v1867
    %v2068 = vunpack.c.h.b16 %v1867
    %v2069 = vunpack.c.l.b16 %v1868
    %v2070 = vunpack.c.h.b16 %v1868
    %v2071 = vunpack.c.l.b16 %v1869
    %v2072 = vunpack.c.h.b16 %v1869
    %v2073 = vunpack.c.l.b16 %v1870
    %v2074 = vunpack.c.h.b16 %v1870
    %v2075 = vpack.c.b16 %v1949, %v1947
    %v2076 = vpack.c.b16 %v1950, %v1948
    %v2077 = vpack.c.b16 %v1953, %v1951
    %v2078 = vpack.c.b16 %v1954, %v1952
    %v2079 = vpack.c.b16 %v1957, %v1955
    %v2080 = vpack.c.b16 %v1958, %v1956
    %v2081 = vpack.c.b16 %v1961, %v1959
    %v2082 = vpack.c.b16 %v1962, %v1960
    %v2083 = vpack.c.b16 %v1965, %v1963
    %v2084 = vpack.c.b16 %v1966, %v1964
    %v2085 = vpack.c.b16 %v1969, %v1967
    %v2086 = vpack.c.b16 %v1970, %v1968
    %v2087 = vpack.c.b16 %v1973, %v1971
    %v2088 = vpack.c.b16 %v1974, %v1972
    %v2089 = vpack.c.b16 %v1977, %v1975
    %v2090 = vpack.c.b16 %v1978, %v1976
    %v2091 = vpack.c.b16 %v1981, %v1979
    %v2092 = vpack.c.b16 %v1982, %v1980
    %v2093 = vpack.c.b16 %v1985, %v1983
    %v2094 = vpack.c.b16 %v1986, %v1984
    %v2095 = vpack.c.b16 %v1989, %v1987
    %v2096 = vpack.c.b16 %v1990, %v1988
    %v2097 = vpack.c.b16 %v1993, %v1991
    %v2098 = vpack.c.b16 %v1994, %v1992
    %v2099 = vpack.c.b16 %v1997, %v1995
    %v2100 = vpack.c.b16 %v1998, %v1996
    %v2101 = vpack.c.b16 %v2001, %v1999
    %v2102 = vpack.c.b16 %v2002, %v2000
    %v2103 = vpack.c.b16 %v2005, %v2003
    %v2104 = vpack.c.b16 %v2006, %v2004
    %v2105 = vpack.c.b16 %v2009, %v2007
    %v2106 = vpack.c.b16 %v2010, %v2008
    %v2107 = vpack.c.b16 %v2013, %v2011
    %v2108 = vpack.c.b16 %v2014, %v2012
    %v2109 = vpack.c.b16 %v2017, %v2015
    %v2110 = vpack.c.b16 %v2018, %v2016
    %v2111 = vpack.c.b16 %v2021, %v2019
    %v2112 = vpack.c.b16 %v2022, %v2020
    %v2113 = vpack.c.b16 %v2025, %v2023
    %v2114 = vpack.c.b16 %v2026, %v2024
    %v2115 = vpack.c.b16 %v2029, %v2027
    %v2116 = vpack.c.b16 %v2030, %v2028
    %v2117 = vpack.c.b16 %v2033, %v2031
    %v2118 = vpack.c.b16 %v2034, %v2032
    %v2119 = vpack.c.b16 %v2037, %v2035
    %v2120 = vpack.c.b16 %v2038, %v2036
    %v2121 = vpack.c.b16 %v2041, %v2039
    %v2122 = vpack.c.b16 %v2042, %v2040
    %v2123 = vpack.c.b16 %v2045, %v2043
    %v2124 = vpack.c.b16 %v2046, %v2044
    %v2125 = vpack.c.b16 %v2049, %v2047
    %v2126 = vpack.c.b16 %v2050, %v2048
    %v2127 = vpack.c.b16 %v2053, %v2051
    %v2128 = vpack.c.b16 %v2054, %v2052
    %v2129 = vpack.c.b16 %v2057, %v2055
    %v2130 = vpack.c.b16 %v2058, %v2056
    %v2131 = vpack.c.b16 %v2061, %v2059
    %v2132 = vpack.c.b16 %v2062, %v2060
    %v2133 = vpack.c.b16 %v2065, %v2063
    %v2134 = vpack.c.b16 %v2066, %v2064
    %v2135 = vpack.c.b16 %v2069, %v2067
    %v2136 = vpack.c.b16 %v2070, %v2068
    %v2137 = vpack.c.b16 %v2073, %v2071
    %v2138 = vpack.c.b16 %v2074, %v2072
    %2203 = vmatprep.subr.bf16.mxu0 %v2076
    %2204 = vmatpush1.bf16.msra.mxu0 %v2075
    %2205 = vmatprep.subr.bf16.mxu0 %v2078
    %2206 = vmatpush1.bf16.msra.mxu0 %v2077
    %2207 = vmatprep.subr.bf16.mxu0 %v2080
    %2208 = vmatpush1.bf16.msra.mxu0 %v2079
    %2209 = vmatprep.subr.bf16.mxu0 %v2082
    %2210 = vmatpush1.bf16.msra.mxu0 %v2081
    %2211 = vmatprep.subr.bf16.mxu0 %v2084
    %2212 = vmatpush1.bf16.msra.mxu0 %v2083
    %2213 = vmatprep.subr.bf16.mxu0 %v2086
    %2214 = vmatpush1.bf16.msra.mxu0 %v2085
    %2215 = vmatprep.subr.bf16.mxu0 %v2088
    %2216 = vmatpush1.bf16.msra.mxu0 %v2087
    %2217 = vmatprep.subr.bf16.mxu0 %v2090
    %2218 = vmatpush1.bf16.msra.mxu0 %v2089
    %2219 = vmatprep.subr.bf16.mxu0 %v2092
    %2220 = vmatpush1.bf16.msra.mxu0 %v2091
    %2221 = vmatprep.subr.bf16.mxu0 %v2094
    %2222 = vmatpush1.bf16.msra.mxu0 %v2093
    %2223 = vmatprep.subr.bf16.mxu0 %v2096
    %2224 = vmatpush1.bf16.msra.mxu0 %v2095
    %2225 = vmatprep.subr.bf16.mxu0 %v2098
    %2226 = vmatpush1.bf16.msra.mxu0 %v2097
    %2227 = vmatprep.subr.bf16.mxu0 %v2100
    %2228 = vmatpush1.bf16.msra.mxu0 %v2099
    %2229 = vmatprep.subr.bf16.mxu0 %v2102
    %2230 = vmatpush1.bf16.msra.mxu0 %v2101
    %2231 = vmatprep.subr.bf16.mxu0 %v2104
    %2232 = vmatpush1.bf16.msra.mxu0 %v2103
    %2233 = vmatprep.subr.bf16.mxu0 %v2106
    %2234 = vmatpush1.bf16.msra.mxu0 %v2105
    %2235 = vmatprep.mubr.bf16.mxu0 %v1804
    %2236 = vmatmul.mubr.bf16.gmra.mrb[0].mxu0 %v1803
    %v2237 = vpop.f32.mrb[0].mxu0
    %v2238 = vadd.f32 %v1876, %v2237
    %v2239 = vpop.f32.mrb[0].mxu0
    %v2240 = vadd.f32 %v1880, %v2239
    %v2241 = vpop.f32.mrb[0].mxu0
    %v2242 = vpop.f32.mrb[0].mxu0
    %2243 = vdwg.mxu0
    %2244 = vmatprep.subr.bf16.mxu0 %v2108
    %2245 = vmatpush1.bf16.msra.mxu0 %v2107
    %2246 = vmatprep.subr.bf16.mxu0 %v2110
    %2247 = vmatpush1.bf16.msra.mxu0 %v2109
    %2248 = vmatprep.subr.bf16.mxu0 %v2112
    %2249 = vmatpush1.bf16.msra.mxu0 %v2111
    %2250 = vmatprep.subr.bf16.mxu0 %v2114
    %2251 = vmatpush1.bf16.msra.mxu0 %v2113
    %2252 = vmatprep.subr.bf16.mxu0 %v2116
    %2253 = vmatpush1.bf16.msra.mxu0 %v2115
    %2254 = vmatprep.subr.bf16.mxu0 %v2118
    %2255 = vmatpush1.bf16.msra.mxu0 %v2117
    %2256 = vmatprep.subr.bf16.mxu0 %v2120
    %2257 = vmatpush1.bf16.msra.mxu0 %v2119
    %2258 = vmatprep.subr.bf16.mxu0 %v2122
    %2259 = vmatpush1.bf16.msra.mxu0 %v2121
    %2260 = vmatprep.subr.bf16.mxu0 %v2124
    %2261 = vmatpush1.bf16.msra.mxu0 %v2123
    %2262 = vmatprep.subr.bf16.mxu0 %v2126
    %2263 = vmatpush1.bf16.msra.mxu0 %v2125
    %2264 = vmatprep.subr.bf16.mxu0 %v2128
    %2265 = vmatpush1.bf16.msra.mxu0 %v2127
    %2266 = vmatprep.subr.bf16.mxu0 %v2130
    %2267 = vmatpush1.bf16.msra.mxu0 %v2129
    %2268 = vmatprep.subr.bf16.mxu0 %v2132
    %2269 = vmatpush1.bf16.msra.mxu0 %v2131
    %2270 = vmatprep.subr.bf16.mxu0 %v2134
    %2271 = vmatpush1.bf16.msra.mxu0 %v2133
    %2272 = vmatprep.subr.bf16.mxu0 %v2136
    %2273 = vmatpush1.bf16.msra.mxu0 %v2135
    %2274 = vmatprep.subr.bf16.mxu0 %v2138
    %2275 = vmatpush1.bf16.msra.mxu0 %v2137
    %2276 = vmatprep.mubr.bf16.mxu0 %v1806
    %2277 = vmatmul.mubr.bf16.gmra.mrb[0].mxu0 %v1805
    %v2278 = vpop.f32.mrb[0].mxu0
    %v2279 = vadd.f32 %v2238, %v2278
    %v2280 = vpop.f32.mrb[0].mxu0
    %v2281 = vadd.f32 %v2240, %v2280
    %v2282 = vpop.f32.mrb[0].mxu0
    %v2283 = vpop.f32.mrb[0].mxu0
    %2284 = vdwg.mxu0
    %v2285 = vmax.f32 %v2279, 0.0
    %v2286 = vmax.f32 %v2281, 0.0
    %v2287 = vpack.c.bf16 %v2285, %v2285
    %v2288 = vpack.c.bf16 %v2286, %v2286
    %v2289 = vld [vmem:[%s6] sm:$0xf]
    %v2290 = vld [vmem:[%s6 + $0x4] sm:$0xf]
    %v2291 = vld [vmem:[%s6 + $0x8] sm:$0xf]
    %v2292 = vld [vmem:[%s6 + $0xc] sm:$0xf]
    %v2293 = vld [vmem:[%s6 + $0x10] sm:$0xf]
    %v2294 = vld [vmem:[%s6 + $0x14] sm:$0xf]
    %v2295 = vld [vmem:[%s6 + $0x18] sm:$0xf]
    %v2296 = vld [vmem:[%s6 + $0x1c] sm:$0xf]
    %v2297 = vld [vmem:[%s6 + $0x20] sm:$0xf]
    %v2298 = vld [vmem:[%s6 + $0x24] sm:$0xf]
    %v2299 = vld [vmem:[%s6 + $0x28] sm:$0xf]
    %v2300 = vld [vmem:[%s6 + $0x2c] sm:$0xf]
    %v2301 = vld [vmem:[%s6 + $0x30] sm:$0xf]
    %v2302 = vld [vmem:[%s6 + $0x34] sm:$0xf]
    %v2303 = vld [vmem:[%s6 + $0x38] sm:$0xf]
    %v2304 = vld [vmem:[%s6 + $0x3c] sm:$0xf]
    %v2305 = vld [vmem:[%s6 + $0x40] sm:$0xf]
    %v2306 = vld [vmem:[%s6 + $0x44] sm:$0xf]
    %v2307 = vld [vmem:[%s6 + $0x48] sm:$0xf]
    %v2308 = vld [vmem:[%s6 + $0x4c] sm:$0xf]
    %v2309 = vld [vmem:[%s6 + $0x50] sm:$0xf]
    %v2310 = vld [vmem:[%s6 + $0x54] sm:$0xf]
    %v2311 = vld [vmem:[%s6 + $0x58] sm:$0xf]
    %v2312 = vld [vmem:[%s6 + $0x5c] sm:$0xf]
    %v2313 = vld [vmem:[%s6 + $0x60] sm:$0xf]
    %v2314 = vld [vmem:[%s6 + $0x64] sm:$0xf]
    %v2315 = vld [vmem:[%s6 + $0x68] sm:$0xf]
    %v2316 = vld [vmem:[%s6 + $0x6c] sm:$0xf]
    %v2317 = vld [vmem:[%s6 + $0x70] sm:$0xf]
    %v2318 = vld [vmem:[%s6 + $0x74] sm:$0xf]
    %v2319 = vld [vmem:[%s6 + $0x78] sm:$0xf]
    %v2320 = vld [vmem:[%s6 + $0x7c] sm:$0xf]
    %v2321 = vld [vmem:[%s7] sm:$0x1]
    %v2323 = vlaneseq
    %v2324 = vshrl.u32 %v2323, 7
    %v2325 = vsub.s32 0, %v2324
    %v2326 = vrot.slane %v2321, %v2325
    %v2360 = vunpack.c.l.b16 %v2289
    %v2361 = vunpack.c.l.b16 %v2290
    %v2362 = vunpack.c.l.b16 %v2291
    %v2363 = vunpack.c.l.b16 %v2292
    %v2364 = vunpack.c.l.b16 %v2293
    %v2365 = vunpack.c.l.b16 %v2294
    %v2366 = vunpack.c.l.b16 %v2295
    %v2367 = vunpack.c.l.b16 %v2296
    %v2368 = vunpack.c.l.b16 %v2297
    %v2369 = vunpack.c.l.b16 %v2298
    %v2370 = vunpack.c.l.b16 %v2299
    %v2371 = vunpack.c.l.b16 %v2300
    %v2372 = vunpack.c.l.b16 %v2301
    %v2373 = vunpack.c.l.b16 %v2302
    %v2374 = vunpack.c.l.b16 %v2303
    %v2375 = vunpack.c.l.b16 %v2304
    %v2376 = vunpack.c.l.b16 %v2305
    %v2377 = vunpack.c.l.b16 %v2306
    %v2378 = vunpack.c.l.b16 %v2307
    %v2379 = vunpack.c.l.b16 %v2308
    %v2380 = vunpack.c.l.b16 %v2309
    %v2381 = vunpack.c.l.b16 %v2310
    %v2382 = vunpack.c.l.b16 %v2311
    %v2383 = vunpack.c.l.b16 %v2312
    %v2384 = vunpack.c.l.b16 %v2313
    %v2385 = vunpack.c.l.b16 %v2314
    %v2386 = vunpack.c.l.b16 %v2315
    %v2387 = vunpack.c.l.b16 %v2316
    %v2388 = vunpack.c.l.b16 %v2317
    %v2389 = vunpack.c.l.b16 %v2318
    %v2390 = vunpack.c.l.b16 %v2319
    %v2391 = vunpack.c.l.b16 %v2320
    %v2392 = vpack.c.b16 %v2361, %v2360
    %v2393 = vpack.c.b16 %v2363, %v2362
    %v2394 = vpack.c.b16 %v2365, %v2364
    %v2395 = vpack.c.b16 %v2367, %v2366
    %v2396 = vpack.c.b16 %v2369, %v2368
    %v2397 = vpack.c.b16 %v2371, %v2370
    %v2398 = vpack.c.b16 %v2373, %v2372
    %v2399 = vpack.c.b16 %v2375, %v2374
    %v2400 = vpack.c.b16 %v2377, %v2376
    %v2401 = vpack.c.b16 %v2379, %v2378
    %v2402 = vpack.c.b16 %v2381, %v2380
    %v2403 = vpack.c.b16 %v2383, %v2382
    %v2404 = vpack.c.b16 %v2385, %v2384
    %v2405 = vpack.c.b16 %v2387, %v2386
    %v2406 = vpack.c.b16 %v2389, %v2388
    %v2407 = vpack.c.b16 %v2391, %v2390
    %2424 = vmatprep.subr.bf16.mxu0 0
    %2425 = vmatpush1.bf16.msra.mxu0 %v2392
    %2426 = vmatprep.subr.bf16.mxu0 0
    %2427 = vmatpush1.bf16.msra.mxu0 %v2393
    %2428 = vmatprep.subr.bf16.mxu0 0
    %2429 = vmatpush1.bf16.msra.mxu0 %v2394
    %2430 = vmatprep.subr.bf16.mxu0 0
    %2431 = vmatpush1.bf16.msra.mxu0 %v2395
    %2432 = vmatprep.subr.bf16.mxu0 0
    %2433 = vmatpush1.bf16.msra.mxu0 %v2396
    %2434 = vmatprep.subr.bf16.mxu0 0
    %2435 = vmatpush1.bf16.msra.mxu0 %v2397
    %2436 = vmatprep.subr.bf16.mxu0 0
    %2437 = vmatpush1.bf16.msra.mxu0 %v2398
    %2438 = vmatprep.subr.bf16.mxu0 0
    %2439 = vmatpush1.bf16.msra.mxu0 %v2399
    %2440 = vmatprep.subr.bf16.mxu0 0
    %2441 = vmatpush1.bf16.msra.mxu0 %v2400
    %2442 = vmatprep.subr.bf16.mxu0 0
    %2443 = vmatpush1.bf16.msra.mxu0 %v2401
    %2444 = vmatprep.subr.bf16.mxu0 0
    %2445 = vmatpush1.bf16.msra.mxu0 %v2402
    %2446 = vmatprep.subr.bf16.mxu0 0
    %2447 = vmatpush1.bf16.msra.mxu0 %v2403
    %2448 = vmatprep.subr.bf16.mxu0 0
    %2449 = vmatpush1.bf16.msra.mxu0 %v2404
    %2450 = vmatprep.subr.bf16.mxu0 0
    %2451 = vmatpush1.bf16.msra.mxu0 %v2405
    %2452 = vmatprep.subr.bf16.mxu0 0
    %2453 = vmatpush1.bf16.msra.mxu0 %v2406
    %2454 = vmatprep.subr.bf16.mxu0 0
    %2455 = vmatpush1.bf16.msra.mxu0 %v2407
    %2456 = vmatprep.mubr.bf16.mxu0 %v2288
    %2457 = vmatmul.mubr.bf16.gmra.mrb[0].mxu0 %v2287
    %v2458 = vpop.f32.mrb[0].mxu0
    %v2459 = vadd.f32 %v2326, %v2458
    %v2460 = vpop.f32.mrb[0].mxu0
    %v2461 = vpop.f32.mrb[0].mxu0
    %v2462 = vpop.f32.mrb[0].mxu0
    %2463 = vdwg.mxu0
    %v2464 = vld [vmem:[%s1] sm:$0xff]
    %v2465 = vmul.f32 %v2459, 0.5
    %v2466 = vmul.f32 %v2465, 1.442695
    %v2467 = vpow.pop %v2466
    %2469 = vrot.lane.b32.xlu0 %v2467, 64
    %v2470 = vpop.permute.xlu0 %2469
    %v2472 = vmul.f32 %v2464, %v2470
    %v2473 = vadd.f32 %v2459, %v2472
    %v2474 = vpack.c.bf16 %v2473, %v2473
    %v2475 = vld [vmem:[%s8] sm:$0xff]
    %v2476 = vld [vmem:[%s8 + $0x8] sm:$0xff]
    %v2477 = vld [vmem:[%s8 + $0x10] sm:$0xff]
    %v2478 = vld [vmem:[%s8 + $0x18] sm:$0xff]
    %v2479 = vld [vmem:[%s8 + $0x20] sm:$0xff]
    %v2480 = vld [vmem:[%s8 + $0x28] sm:$0xff]
    %v2481 = vld [vmem:[%s8 + $0x30] sm:$0xff]
    %v2482 = vld [vmem:[%s8 + $0x38] sm:$0xff]
    %v2483 = vld [vmem:[%s9] sm:$0x3]
    %v2485 = vlaneseq
    %v2486 = vshrl.u32 %v2485, 7
    %v2487 = vsub.s32 0, %v2486
    %v2488 = vrot.slane %v2483, %v2487
    %v2489 = vlaneseq
    %v2490 = vshrl.u32 %v2489, 7
    %v2491 = vsub.s32 1, %v2490
    %v2492 = vrot.slane %v2483, %v2491
    %v2503 = vunpack.c.l.b16 %v2475
    %v2504 = vunpack.c.h.b16 %v2475
    %v2505 = vunpack.c.l.b16 %v2476
    %v2506 = vunpack.c.h.b16 %v2476
    %v2507 = vunpack.c.l.b16 %v2477
    %v2508 = vunpack.c.h.b16 %v2477
    %v2509 = vunpack.c.l.b16 %v2478
    %v2510 = vunpack.c.h.b16 %v2478
    %v2511 = vunpack.c.l.b16 %v2479
    %v2512 = vunpack.c.h.b16 %v2479
    %v2513 = vunpack.c.l.b16 %v2480
    %v2514 = vunpack.c.h.b16 %v2480
    %v2515 = vunpack.c.l.b16 %v2481
    %v2516 = vunpack.c.h.b16 %v2481
    %v2517 = vunpack.c.l.b16 %v2482
    %v2518 = vunpack.c.h.b16 %v2482
    %v2519 = vpack.c.b16 %v2505, %v2503
    %v2520 = vpack.c.b16 %v2506, %v2504
    %v2521 = vpack.c.b16 %v2509, %v2507
    %v2522 = vpack.c.b16 %v2510, %v2508
    %v2523 = vpack.c.b16 %v2513, %v2511
    %v2524 = vpack.c.b16 %v2514, %v2512
    %v2525 = vpack.c.b16 %v2517, %v2515
    %v2526 = vpack.c.b16 %v2518, %v2516
    %vm2535 = vcmask 523264
    %v2537 = vsel %vm2535, %v2474, 0
    %2539 = vmatprep.subr.bf16.mxu0 %v2520
    %2540 = vmatpush1.bf16.msra.mxu0 %v2519
    %2541 = vmatprep.subr.bf16.mxu0 %v2522
    %2542 = vmatpush1.bf16.msra.mxu0 %v2521
    %2543 = vmatprep.subr.bf16.mxu0 %v2524
    %2544 = vmatpush1.bf16.msra.mxu0 %v2523
    %2545 = vmatprep.subr.bf16.mxu0 %v2526
    %2546 = vmatpush1.bf16.msra.mxu0 %v2525
    %2547 = vmatprep.subr.bf16.mxu0 0
    %2548 = vmatpush1.bf16.msra.mxu0 0
    %2549 = vmatprep.subr.bf16.mxu0 0
    %2550 = vmatpush1.bf16.msra.mxu0 0
    %2551 = vmatprep.subr.bf16.mxu0 0
    %2552 = vmatpush1.bf16.msra.mxu0 0
    %2553 = vmatprep.subr.bf16.mxu0 0
    %2554 = vmatpush1.bf16.msra.mxu0 0
    %2555 = vmatprep.subr.bf16.mxu0 0
    %2556 = vmatpush1.bf16.msra.mxu0 0
    %2557 = vmatprep.subr.bf16.mxu0 0
    %2558 = vmatpush1.bf16.msra.mxu0 0
    %2559 = vmatprep.subr.bf16.mxu0 0
    %2560 = vmatpush1.bf16.msra.mxu0 0
    %2561 = vmatprep.subr.bf16.mxu0 0
    %2562 = vmatpush1.bf16.msra.mxu0 0
    %2563 = vmatprep.subr.bf16.mxu0 0
    %2564 = vmatpush1.bf16.msra.mxu0 0
    %2565 = vmatprep.subr.bf16.mxu0 0
    %2566 = vmatpush1.bf16.msra.mxu0 0
    %2567 = vmatprep.subr.bf16.mxu0 0
    %2568 = vmatpush1.bf16.msra.mxu0 0
    %2569 = vmatprep.subr.bf16.mxu0 0
    %2570 = vmatpush1.bf16.msra.mxu0 0
    %2571 = vmatprep.mubr.bf16.mxu0 0
    %2572 = vmatmul.mubr.bf16.gmra.mrb[0].mxu0 %v2537
    %v2573 = vpop.f32.mrb[0].mxu0
    %v2574 = vadd.f32 %v2488, %v2573
    %v2575 = vpop.f32.mrb[0].mxu0
    %v2576 = vadd.f32 %v2492, %v2575
    %v2577 = vpop.f32.mrb[0].mxu0
    %v2578 = vpop.f32.mrb[0].mxu0
    %2579 = vdwg.mxu0
    %v2580 = vmax.f32 %v2574, 0.0
    %v2581 = vmax.f32 %v2576, 0.0
    %v2582 = vpack.c.bf16 %v2580, %v2580
    %v2583 = vpack.c.bf16 %v2581, %v2581
    %v2584 = vld [vmem:[#allocation4] sm:$0xff]
    %v2585 = vld [vmem:[#allocation4 + $0x8] sm:$0xff]
    %v2586 = vld [vmem:[#allocation4 + $0x10] sm:$0xff]
    %v2587 = vld [vmem:[#allocation4 + $0x18] sm:$0xff]
    %v2588 = vld [vmem:[#allocation4 + $0x20] sm:$0xff]
    %v2589 = vld [vmem:[#allocation4 + $0x28] sm:$0xff]
    %v2590 = vld [vmem:[#allocation4 + $0x30] sm:$0xff]
    %v2591 = vld [vmem:[#allocation4 + $0x38] sm:$0xff]
    %v2592 = vld [vmem:[#allocation4 + $0x40] sm:$0xff]
    %v2593 = vld [vmem:[#allocation4 + $0x48] sm:$0xff]
    %v2594 = vld [vmem:[#allocation4 + $0x50] sm:$0xff]
    %v2595 = vld [vmem:[#allocation4 + $0x58] sm:$0xff]
    %v2596 = vld [vmem:[#allocation4 + $0x60] sm:$0xff]
    %v2597 = vld [vmem:[#allocation4 + $0x68] sm:$0xff]
    %v2598 = vld [vmem:[#allocation4 + $0x70] sm:$0xff]
    %v2599 = vld [vmem:[#allocation4 + $0x78] sm:$0xff]
    %v2600 = vld [vmem:[#allocation4 + $0x80] sm:$0xff]
    %v2601 = vld [vmem:[#allocation4 + $0x88] sm:$0xff]
    %v2602 = vld [vmem:[#allocation4 + $0x90] sm:$0xff]
    %v2603 = vld [vmem:[#allocation4 + $0x98] sm:$0xff]
    %v2604 = vld [vmem:[#allocation4 + $0xa0] sm:$0xff]
    %v2605 = vld [vmem:[#allocation4 + $0xa8] sm:$0xff]
    %v2606 = vld [vmem:[#allocation4 + $0xb0] sm:$0xff]
    %v2607 = vld [vmem:[#allocation4 + $0xb8] sm:$0xff]
    %v2608 = vld [vmem:[#allocation4 + $0xc0] sm:$0xff]
    %v2609 = vld [vmem:[#allocation4 + $0xc8] sm:$0xff]
    %v2610 = vld [vmem:[#allocation4 + $0xd0] sm:$0xff]
    %v2611 = vld [vmem:[#allocation4 + $0xd8] sm:$0xff]
    %v2612 = vld [vmem:[#allocation4 + $0xe0] sm:$0xff]
    %v2613 = vld [vmem:[#allocation4 + $0xe8] sm:$0xff]
    %v2614 = vld [vmem:[#allocation4 + $0xf0] sm:$0xff]
    %v2615 = vld [vmem:[#allocation4 + $0xf8] sm:$0xff]
    %v2616 = vld [vmem:[#allocation4 + $0x100] sm:$0xff]
    %v2617 = vld [vmem:[#allocation4 + $0x108] sm:$0xff]
    %v2618 = vld [vmem:[#allocation4 + $0x110] sm:$0xff]
    %v2619 = vld [vmem:[#allocation4 + $0x118] sm:$0xff]
    %v2620 = vld [vmem:[#allocation4 + $0x120] sm:$0xff]
    %v2621 = vld [vmem:[#allocation4 + $0x128] sm:$0xff]
    %v2622 = vld [vmem:[#allocation4 + $0x130] sm:$0xff]
    %v2623 = vld [vmem:[#allocation4 + $0x138] sm:$0xff]
    %v2624 = vld [vmem:[#allocation4 + $0x140] sm:$0xff]
    %v2625 = vld [vmem:[#allocation4 + $0x148] sm:$0xff]
    %v2626 = vld [vmem:[#allocation4 + $0x150] sm:$0xff]
    %v2627 = vld [vmem:[#allocation4 + $0x158] sm:$0xff]
    %v2628 = vld [vmem:[#allocation4 + $0x160] sm:$0xff]
    %v2629 = vld [vmem:[#allocation4 + $0x168] sm:$0xff]
    %v2630 = vld [vmem:[#allocation4 + $0x170] sm:$0xff]
    %v2631 = vld [vmem:[#allocation4 + $0x178] sm:$0xff]
    %v2632 = vld [vmem:[#allocation4 + $0x180] sm:$0xff]
    %v2633 = vld [vmem:[#allocation4 + $0x188] sm:$0xff]
    %v2634 = vld [vmem:[#allocation4 + $0x190] sm:$0xff]
    %v2635 = vld [vmem:[#allocation4 + $0x198] sm:$0xff]
    %v2636 = vld [vmem:[#allocation4 + $0x1a0] sm:$0xff]
    %v2637 = vld [vmem:[#allocation4 + $0x1a8] sm:$0xff]
    %v2638 = vld [vmem:[#allocation4 + $0x1b0] sm:$0xff]
    %v2639 = vld [vmem:[#allocation4 + $0x1b8] sm:$0xff]
    %v2640 = vld [vmem:[#allocation4 + $0x1c0] sm:$0xff]
    %v2641 = vld [vmem:[#allocation4 + $0x1c8] sm:$0xff]
    %v2642 = vld [vmem:[#allocation4 + $0x1d0] sm:$0xff]
    %v2643 = vld [vmem:[#allocation4 + $0x1d8] sm:$0xff]
    %v2644 = vld [vmem:[#allocation4 + $0x1e0] sm:$0xff]
    %v2645 = vld [vmem:[#allocation4 + $0x1e8] sm:$0xff]
    %v2646 = vld [vmem:[#allocation4 + $0x1f0] sm:$0xff]
    %v2647 = vld [vmem:[#allocation4 + $0x1f8] sm:$0xff]
    %v2648 = vld [vmem:[%s11] sm:$0xf]
    %v2650 = vlaneseq
    %v2651 = vshrl.u32 %v2650, 7
    %v2652 = vsub.s32 0, %v2651
    %v2653 = vrot.slane %v2648, %v2652
    %v2654 = vlaneseq
    %v2655 = vshrl.u32 %v2654, 7
    %v2656 = vsub.s32 1, %v2655
    %v2657 = vrot.slane %v2648, %v2656
    %v2658 = vlaneseq
    %v2659 = vshrl.u32 %v2658, 7
    %v2660 = vsub.s32 2, %v2659
    %v2661 = vrot.slane %v2648, %v2660
    %v2662 = vlaneseq
    %v2663 = vshrl.u32 %v2662, 7
    %v2664 = vsub.s32 3, %v2663
    %v2665 = vrot.slane %v2648, %v2664
    %v2734 = vunpack.c.l.b16 %v2584
    %v2735 = vunpack.c.h.b16 %v2584
    %v2736 = vunpack.c.l.b16 %v2585
    %v2737 = vunpack.c.h.b16 %v2585
    %v2738 = vunpack.c.l.b16 %v2586
    %v2739 = vunpack.c.h.b16 %v2586
    %v2740 = vunpack.c.l.b16 %v2587
    %v2741 = vunpack.c.h.b16 %v2587
    %v2742 = vunpack.c.l.b16 %v2588
    %v2743 = vunpack.c.h.b16 %v2588
    %v2744 = vunpack.c.l.b16 %v2589
    %v2745 = vunpack.c.h.b16 %v2589
    %v2746 = vunpack.c.l.b16 %v2590
    %v2747 = vunpack.c.h.b16 %v2590
    %v2748 = vunpack.c.l.b16 %v2591
    %v2749 = vunpack.c.h.b16 %v2591
    %v2750 = vunpack.c.l.b16 %v2592
    %v2751 = vunpack.c.h.b16 %v2592
    %v2752 = vunpack.c.l.b16 %v2593
    %v2753 = vunpack.c.h.b16 %v2593
    %v2754 = vunpack.c.l.b16 %v2594
    %v2755 = vunpack.c.h.b16 %v2594
    %v2756 = vunpack.c.l.b16 %v2595
    %v2757 = vunpack.c.h.b16 %v2595
    %v2758 = vunpack.c.l.b16 %v2596
    %v2759 = vunpack.c.h.b16 %v2596
    %v2760 = vunpack.c.l.b16 %v2597
    %v2761 = vunpack.c.h.b16 %v2597
    %v2762 = vunpack.c.l.b16 %v2598
    %v2763 = vunpack.c.h.b16 %v2598
    %v2764 = vunpack.c.l.b16 %v2599
    %v2765 = vunpack.c.h.b16 %v2599
    %v2766 = vunpack.c.l.b16 %v2600
    %v2767 = vunpack.c.h.b16 %v2600
    %v2768 = vunpack.c.l.b16 %v2601
    %v2769 = vunpack.c.h.b16 %v2601
    %v2770 = vunpack.c.l.b16 %v2602
    %v2771 = vunpack.c.h.b16 %v2602
    %v2772 = vunpack.c.l.b16 %v2603
    %v2773 = vunpack.c.h.b16 %v2603
    %v2774 = vunpack.c.l.b16 %v2604
    %v2775 = vunpack.c.h.b16 %v2604
    %v2776 = vunpack.c.l.b16 %v2605
    %v2777 = vunpack.c.h.b16 %v2605
    %v2778 = vunpack.c.l.b16 %v2606
    %v2779 = vunpack.c.h.b16 %v2606
    %v2780 = vunpack.c.l.b16 %v2607
    %v2781 = vunpack.c.h.b16 %v2607
    %v2782 = vunpack.c.l.b16 %v2608
    %v2783 = vunpack.c.h.b16 %v2608
    %v2784 = vunpack.c.l.b16 %v2609
    %v2785 = vunpack.c.h.b16 %v2609
    %v2786 = vunpack.c.l.b16 %v2610
    %v2787 = vunpack.c.h.b16 %v2610
    %v2788 = vunpack.c.l.b16 %v2611
    %v2789 = vunpack.c.h.b16 %v2611
    %v2790 = vunpack.c.l.b16 %v2612
    %v2791 = vunpack.c.h.b16 %v2612
    %v2792 = vunpack.c.l.b16 %v2613
    %v2793 = vunpack.c.h.b16 %v2613
    %v2794 = vunpack.c.l.b16 %v2614
    %v2795 = vunpack.c.h.b16 %v2614
    %v2796 = vunpack.c.l.b16 %v2615
    %v2797 = vunpack.c.h.b16 %v2615
    %v2798 = vunpack.c.l.b16 %v2616
    %v2799 = vunpack.c.h.b16 %v2616
    %v2800 = vunpack.c.l.b16 %v2617
    %v2801 = vunpack.c.h.b16 %v2617
    %v2802 = vunpack.c.l.b16 %v2618
    %v2803 = vunpack.c.h.b16 %v2618
    %v2804 = vunpack.c.l.b16 %v2619
    %v2805 = vunpack.c.h.b16 %v2619
    %v2806 = vunpack.c.l.b16 %v2620
    %v2807 = vunpack.c.h.b16 %v2620
    %v2808 = vunpack.c.l.b16 %v2621
    %v2809 = vunpack.c.h.b16 %v2621
    %v2810 = vunpack.c.l.b16 %v2622
    %v2811 = vunpack.c.h.b16 %v2622
    %v2812 = vunpack.c.l.b16 %v2623
    %v2813 = vunpack.c.h.b16 %v2623
    %v2814 = vunpack.c.l.b16 %v2624
    %v2815 = vunpack.c.h.b16 %v2624
    %v2816 = vunpack.c.l.b16 %v2625
    %v2817 = vunpack.c.h.b16 %v2625
    %v2818 = vunpack.c.l.b16 %v2626
    %v2819 = vunpack.c.h.b16 %v2626
    %v2820 = vunpack.c.l.b16 %v2627
    %v2821 = vunpack.c.h.b16 %v2627
    %v2822 = vunpack.c.l.b16 %v2628
    %v2823 = vunpack.c.h.b16 %v2628
    %v2824 = vunpack.c.l.b16 %v2629
    %v2825 = vunpack.c.h.b16 %v2629
    %v2826 = vunpack.c.l.b16 %v2630
    %v2827 = vunpack.c.h.b16 %v2630
    %v2828 = vunpack.c.l.b16 %v2631
    %v2829 = vunpack.c.h.b16 %v2631
    %v2830 = vunpack.c.l.b16 %v2632
    %v2831 = vunpack.c.h.b16 %v2632
    %v2832 = vunpack.c.l.b16 %v2633
    %v2833 = vunpack.c.h.b16 %v2633
    %v2834 = vunpack.c.l.b16 %v2634
    %v2835 = vunpack.c.h.b16 %v2634
    %v2836 = vunpack.c.l.b16 %v2635
    %v2837 = vunpack.c.h.b16 %v2635
    %v2838 = vunpack.c.l.b16 %v2636
    %v2839 = vunpack.c.h.b16 %v2636
    %v2840 = vunpack.c.l.b16 %v2637
    %v2841 = vunpack.c.h.b16 %v2637
    %v2842 = vunpack.c.l.b16 %v2638
    %v2843 = vunpack.c.h.b16 %v2638
    %v2844 = vunpack.c.l.b16 %v2639
    %v2845 = vunpack.c.h.b16 %v2639
    %v2846 = vunpack.c.l.b16 %v2640
    %v2847 = vunpack.c.h.b16 %v2640
    %v2848 = vunpack.c.l.b16 %v2641
    %v2849 = vunpack.c.h.b16 %v2641
    %v2850 = vunpack.c.l.b16 %v2642
    %v2851 = vunpack.c.h.b16 %v2642
    %v2852 = vunpack.c.l.b16 %v2643
    %v2853 = vunpack.c.h.b16 %v2643
    %v2854 = vunpack.c.l.b16 %v2644
    %v2855 = vunpack.c.h.b16 %v2644
    %v2856 = vunpack.c.l.b16 %v2645
    %v2857 = vunpack.c.h.b16 %v2645
    %v2858 = vunpack.c.l.b16 %v2646
    %v2859 = vunpack.c.h.b16 %v2646
    %v2860 = vunpack.c.l.b16 %v2647
    %v2861 = vunpack.c.h.b16 %v2647
    %v2862 = vpack.c.b16 %v2738, %v2734
    %v2863 = vpack.c.b16 %v2739, %v2735
    %v2864 = vpack.c.b16 %v2740, %v2736
    %v2865 = vpack.c.b16 %v2741, %v2737
    %v2866 = vpack.c.b16 %v2746, %v2742
    %v2867 = vpack.c.b16 %v2747, %v2743
    %v2868 = vpack.c.b16 %v2748, %v2744
    %v2869 = vpack.c.b16 %v2749, %v2745
    %v2870 = vpack.c.b16 %v2754, %v2750
    %v2871 = vpack.c.b16 %v2755, %v2751
    %v2872 = vpack.c.b16 %v2756, %v2752
    %v2873 = vpack.c.b16 %v2757, %v2753
    %v2874 = vpack.c.b16 %v2762, %v2758
    %v2875 = vpack.c.b16 %v2763, %v2759
    %v2876 = vpack.c.b16 %v2764, %v2760
    %v2877 = vpack.c.b16 %v2765, %v2761
    %v2878 = vpack.c.b16 %v2770, %v2766
    %v2879 = vpack.c.b16 %v2771, %v2767
    %v2880 = vpack.c.b16 %v2772, %v2768
    %v2881 = vpack.c.b16 %v2773, %v2769
    %v2882 = vpack.c.b16 %v2778, %v2774
    %v2883 = vpack.c.b16 %v2779, %v2775
    %v2884 = vpack.c.b16 %v2780, %v2776
    %v2885 = vpack.c.b16 %v2781, %v2777
    %v2886 = vpack.c.b16 %v2786, %v2782
    %v2887 = vpack.c.b16 %v2787, %v2783
    %v2888 = vpack.c.b16 %v2788, %v2784
    %v2889 = vpack.c.b16 %v2789, %v2785
    %v2890 = vpack.c.b16 %v2794, %v2790
    %v2891 = vpack.c.b16 %v2795, %v2791
    %v2892 = vpack.c.b16 %v2796, %v2792
    %v2893 = vpack.c.b16 %v2797, %v2793
    %v2894 = vpack.c.b16 %v2802, %v2798
    %v2895 = vpack.c.b16 %v2803, %v2799
    %v2896 = vpack.c.b16 %v2804, %v2800
    %v2897 = vpack.c.b16 %v2805, %v2801
    %v2898 = vpack.c.b16 %v2810, %v2806
    %v2899 = vpack.c.b16 %v2811, %v2807
    %v2900 = vpack.c.b16 %v2812, %v2808
    %v2901 = vpack.c.b16 %v2813, %v2809
    %v2902 = vpack.c.b16 %v2818, %v2814
    %v2903 = vpack.c.b16 %v2819, %v2815
    %v2904 = vpack.c.b16 %v2820, %v2816
    %v2905 = vpack.c.b16 %v2821, %v2817
    %v2906 = vpack.c.b16 %v2826, %v2822
    %v2907 = vpack.c.b16 %v2827, %v2823
    %v2908 = vpack.c.b16 %v2828, %v2824
    %v2909 = vpack.c.b16 %v2829, %v2825
    %v2910 = vpack.c.b16 %v2834, %v2830
    %v2911 = vpack.c.b16 %v2835, %v2831
    %v2912 = vpack.c.b16 %v2836, %v2832
    %v2913 = vpack.c.b16 %v2837, %v2833
    %v2914 = vpack.c.b16 %v2842, %v2838
    %v2915 = vpack.c.b16 %v2843, %v2839
    %v2916 = vpack.c.b16 %v2844, %v2840
    %v2917 = vpack.c.b16 %v2845, %v2841
    %v2918 = vpack.c.b16 %v2850, %v2846
    %v2919 = vpack.c.b16 %v2851, %v2847
    %v2920 = vpack.c.b16 %v2852, %v2848
    %v2921 = vpack.c.b16 %v2853, %v2849
    %v2922 = vpack.c.b16 %v2858, %v2854
    %v2923 = vpack.c.b16 %v2859, %v2855
    %v2924 = vpack.c.b16 %v2860, %v2856
    %v2925 = vpack.c.b16 %v2861, %v2857
    %2990 = vmatprep.subr.bf16.mxu0 %v2863
    %2991 = vmatpush1.bf16.msra.mxu0 %v2862
    %2992 = vmatprep.subr.bf16.mxu0 %v2867
    %2993 = vmatpush1.bf16.msra.mxu0 %v2866
    %2994 = vmatprep.subr.bf16.mxu0 %v2871
    %2995 = vmatpush1.bf16.msra.mxu0 %v2870
    %2996 = vmatprep.subr.bf16.mxu0 %v2875
    %2997 = vmatpush1.bf16.msra.mxu0 %v2874
    %2998 = vmatprep.subr.bf16.mxu0 %v2879
    %2999 = vmatpush1.bf16.msra.mxu0 %v2878
    %3000 = vmatprep.subr.bf16.mxu0 %v2883
    %3001 = vmatpush1.bf16.msra.mxu0 %v2882
    %3002 = vmatprep.subr.bf16.mxu0 %v2887
    %3003 = vmatpush1.bf16.msra.mxu0 %v2886
    %3004 = vmatprep.subr.bf16.mxu0 %v2891
    %3005 = vmatpush1.bf16.msra.mxu0 %v2890
    %3006 = vmatprep.subr.bf16.mxu0 %v2895
    %3007 = vmatpush1.bf16.msra.mxu0 %v2894
    %3008 = vmatprep.subr.bf16.mxu0 %v2899
    %3009 = vmatpush1.bf16.msra.mxu0 %v2898
    %3010 = vmatprep.subr.bf16.mxu0 %v2903
    %3011 = vmatpush1.bf16.msra.mxu0 %v2902
    %3012 = vmatprep.subr.bf16.mxu0 %v2907
    %3013 = vmatpush1.bf16.msra.mxu0 %v2906
    %3014 = vmatprep.subr.bf16.mxu0 %v2911
    %3015 = vmatpush1.bf16.msra.mxu0 %v2910
    %3016 = vmatprep.subr.bf16.mxu0 %v2915
    %3017 = vmatpush1.bf16.msra.mxu0 %v2914
    %3018 = vmatprep.subr.bf16.mxu0 %v2919
    %3019 = vmatpush1.bf16.msra.mxu0 %v2918
    %3020 = vmatprep.subr.bf16.mxu0 %v2923
    %3021 = vmatpush1.bf16.msra.mxu0 %v2922
    %3022 = vmatprep.mubr.bf16.mxu0 %v2583
    %3023 = vmatmul.mubr.bf16.gmra.mrb[0].mxu0 %v2582
    %v3024 = vpop.f32.mrb[0].mxu0
    %v3025 = vadd.f32 %v2653, %v3024
    %v3026 = vpop.f32.mrb[0].mxu0
    %v3027 = vadd.f32 %v2657, %v3026
    %v3028 = vpop.f32.mrb[0].mxu0
    %v3029 = vpop.f32.mrb[0].mxu0
    %3030 = vdwg.mxu0
    %3031 = vmatprep.subr.bf16.mxu0 %v2865
    %3032 = vmatpush1.bf16.msra.mxu0 %v2864
    %3033 = vmatprep.subr.bf16.mxu0 %v2869
    %3034 = vmatpush1.bf16.msra.mxu0 %v2868
    %3035 = vmatprep.subr.bf16.mxu0 %v2873
    %3036 = vmatpush1.bf16.msra.mxu0 %v2872
    %3037 = vmatprep.subr.bf16.mxu0 %v2877
    %3038 = vmatpush1.bf16.msra.mxu0 %v2876
    %3039 = vmatprep.subr.bf16.mxu0 %v2881
    %3040 = vmatpush1.bf16.msra.mxu0 %v2880
    %3041 = vmatprep.subr.bf16.mxu0 %v2885
    %3042 = vmatpush1.bf16.msra.mxu0 %v2884
    %3043 = vmatprep.subr.bf16.mxu0 %v2889
    %3044 = vmatpush1.bf16.msra.mxu0 %v2888
    %3045 = vmatprep.subr.bf16.mxu0 %v2893
    %3046 = vmatpush1.bf16.msra.mxu0 %v2892
    %3047 = vmatprep.subr.bf16.mxu0 %v2897
    %3048 = vmatpush1.bf16.msra.mxu0 %v2896
    %3049 = vmatprep.subr.bf16.mxu0 %v2901
    %3050 = vmatpush1.bf16.msra.mxu0 %v2900
    %3051 = vmatprep.subr.bf16.mxu0 %v2905
    %3052 = vmatpush1.bf16.msra.mxu0 %v2904
    %3053 = vmatprep.subr.bf16.mxu0 %v2909
    %3054 = vmatpush1.bf16.msra.mxu0 %v2908
    %3055 = vmatprep.subr.bf16.mxu0 %v2913
    %3056 = vmatpush1.bf16.msra.mxu0 %v2912
    %3057 = vmatprep.subr.bf16.mxu0 %v2917
    %3058 = vmatpush1.bf16.msra.mxu0 %v2916
    %3059 = vmatprep.subr.bf16.mxu0 %v2921
    %3060 = vmatpush1.bf16.msra.mxu0 %v2920
    %3061 = vmatprep.subr.bf16.mxu0 %v2925
    %3062 = vmatpush1.bf16.msra.mxu0 %v2924
    %3063 = vmatprep.mubr.bf16.mxu0 %v2583
    %3064 = vmatmul.mubr.bf16.gmra.mrb[0].mxu0 %v2582
    %v3065 = vpop.f32.mrb[0].mxu0
    %v3066 = vadd.f32 %v2661, %v3065
    %v3067 = vpop.f32.mrb[0].mxu0
    %v3068 = vadd.f32 %v2665, %v3067
    %v3069 = vpop.f32.mrb[0].mxu0
    %v3070 = vpop.f32.mrb[0].mxu0
    %3071 = vdwg.mxu0
    %v3072 = vmax.f32 %v3025, 0.0
    %v3073 = vmax.f32 %v3027, 0.0
    %v3074 = vmax.f32 %v3066, 0.0
    %v3075 = vmax.f32 %v3068, 0.0
    %v3076 = vpack.c.bf16 %v3072, %v3072
    %v3077 = vpack.c.bf16 %v3073, %v3073
    %v3078 = vpack.c.bf16 %v3074, %v3074
    %v3079 = vpack.c.bf16 %v3075, %v3075
    %v3080 = vld [vmem:[#allocation6] sm:$0xff]
    %v3081 = vld [vmem:[#allocation6 + $0x8] sm:$0xff]
    %v3082 = vld [vmem:[#allocation6 + $0x10] sm:$0xff]
    %v3083 = vld [vmem:[#allocation6 + $0x18] sm:$0xf]
    %v3084 = vld [vmem:[#allocation6 + $0x1c] sm:$0xff]
    %v3085 = vld [vmem:[#allocation6 + $0x24] sm:$0xff]
    %v3086 = vld [vmem:[#allocation6 + $0x2c] sm:$0xff]
    %v3087 = vld [vmem:[#allocation6 + $0x34] sm:$0xf]
    %v3088 = vld [vmem:[#allocation6 + $0x38] sm:$0xff]
    %v3089 = vld [vmem:[#allocation6 + $0x40] sm:$0xff]
    %v3090 = vld [vmem:[#allocation6 + $0x48] sm:$0xff]
    %v3091 = vld [vmem:[#allocation6 + $0x50] sm:$0xf]
    %v3092 = vld [vmem:[#allocation6 + $0x54] sm:$0xff]
    %v3093 = vld [vmem:[#allocation6 + $0x5c] sm:$0xff]
    %v3094 = vld [vmem:[#allocation6 + $0x64] sm:$0xff]
    %v3095 = vld [vmem:[#allocation6 + $0x6c] sm:$0xf]
    %v3096 = vld [vmem:[#allocation6 + $0x70] sm:$0xff]
    %v3097 = vld [vmem:[#allocation6 + $0x78] sm:$0xff]
    %v3098 = vld [vmem:[#allocation6 + $0x80] sm:$0xff]
    %v3099 = vld [vmem:[#allocation6 + $0x88] sm:$0xf]
    %v3100 = vld [vmem:[#allocation6 + $0x8c] sm:$0xff]
    %v3101 = vld [vmem:[#allocation6 + $0x94] sm:$0xff]
    %v3102 = vld [vmem:[#allocation6 + $0x9c] sm:$0xff]
    %v3103 = vld [vmem:[#allocation6 + $0xa4] sm:$0xf]
    %v3104 = vld [vmem:[#allocation6 + $0xa8] sm:$0xff]
    %v3105 = vld [vmem:[#allocation6 + $0xb0] sm:$0xff]
    %v3106 = vld [vmem:[#allocation6 + $0xb8] sm:$0xff]
    %v3107 = vld [vmem:[#allocation6 + $0xc0] sm:$0xf]
    %v3108 = vld [vmem:[#allocation6 + $0xc4] sm:$0xff]
    %v3109 = vld [vmem:[#allocation6 + $0xcc] sm:$0xff]
    %v3110 = vld [vmem:[#allocation6 + $0xd4] sm:$0xff]
    %v3111 = vld [vmem:[#allocation6 + $0xdc] sm:$0xf]
    %v3112 = vld [vmem:[#allocation6 + $0xe0] sm:$0xff]
    %v3113 = vld [vmem:[#allocation6 + $0xe8] sm:$0xff]
    %v3114 = vld [vmem:[#allocation6 + $0xf0] sm:$0xff]
    %v3115 = vld [vmem:[#allocation6 + $0xf8] sm:$0xf]
    %v3116 = vld [vmem:[#allocation6 + $0xfc] sm:$0xff]
    %v3117 = vld [vmem:[#allocation6 + $0x104] sm:$0xff]
    %v3118 = vld [vmem:[#allocation6 + $0x10c] sm:$0xff]
    %v3119 = vld [vmem:[#allocation6 + $0x114] sm:$0xf]
    %v3120 = vld [vmem:[#allocation6 + $0x118] sm:$0xff]
    %v3121 = vld [vmem:[#allocation6 + $0x120] sm:$0xff]
    %v3122 = vld [vmem:[#allocation6 + $0x128] sm:$0xff]
    %v3123 = vld [vmem:[#allocation6 + $0x130] sm:$0xf]
    %v3124 = vld [vmem:[#allocation6 + $0x134] sm:$0xff]
    %v3125 = vld [vmem:[#allocation6 + $0x13c] sm:$0xff]
    %v3126 = vld [vmem:[#allocation6 + $0x144] sm:$0xff]
    %v3127 = vld [vmem:[#allocation6 + $0x14c] sm:$0xf]
    %v3128 = vld [vmem:[#allocation6 + $0x150] sm:$0xff]
    %v3129 = vld [vmem:[#allocation6 + $0x158] sm:$0xff]
    %v3130 = vld [vmem:[#allocation6 + $0x160] sm:$0xff]
    %v3131 = vld [vmem:[#allocation6 + $0x168] sm:$0xf]
    %v3132 = vld [vmem:[#allocation6 + $0x16c] sm:$0xff]
    %v3133 = vld [vmem:[#allocation6 + $0x174] sm:$0xff]
    %v3134 = vld [vmem:[#allocation6 + $0x17c] sm:$0xff]
    %v3135 = vld [vmem:[#allocation6 + $0x184] sm:$0xf]
    %v3136 = vld [vmem:[#allocation6 + $0x188] sm:$0xff]
    %v3137 = vld [vmem:[#allocation6 + $0x190] sm:$0xff]
    %v3138 = vld [vmem:[#allocation6 + $0x198] sm:$0xff]
    %v3139 = vld [vmem:[#allocation6 + $0x1a0] sm:$0xf]
    %v3140 = vld [vmem:[#allocation6 + $0x1a4] sm:$0xff]
    %v3141 = vld [vmem:[#allocation6 + $0x1ac] sm:$0xff]
    %v3142 = vld [vmem:[#allocation6 + $0x1b4] sm:$0xff]
    %v3143 = vld [vmem:[#allocation6 + $0x1bc] sm:$0xf]
    %v3144 = vld [vmem:[#allocation6 + $0x1c0] sm:$0xff]
    %v3145 = vld [vmem:[#allocation6 + $0x1c8] sm:$0xff]
    %v3146 = vld [vmem:[#allocation6 + $0x1d0] sm:$0xff]
    %v3147 = vld [vmem:[#allocation6 + $0x1d8] sm:$0xf]
    %v3148 = vld [vmem:[#allocation6 + $0x1dc] sm:$0xff]
    %v3149 = vld [vmem:[#allocation6 + $0x1e4] sm:$0xff]
    %v3150 = vld [vmem:[#allocation6 + $0x1ec] sm:$0xff]
    %v3151 = vld [vmem:[#allocation6 + $0x1f4] sm:$0xf]
    %v3152 = vld [vmem:[#allocation6 + $0x1f8] sm:$0xff]
    %v3153 = vld [vmem:[#allocation6 + $0x200] sm:$0xff]
    %v3154 = vld [vmem:[#allocation6 + $0x208] sm:$0xff]
    %v3155 = vld [vmem:[#allocation6 + $0x210] sm:$0xf]
    %v3156 = vld [vmem:[#allocation6 + $0x214] sm:$0xff]
    %v3157 = vld [vmem:[#allocation6 + $0x21c] sm:$0xff]
    %v3158 = vld [vmem:[#allocation6 + $0x224] sm:$0xff]
    %v3159 = vld [vmem:[#allocation6 + $0x22c] sm:$0xf]
    %v3160 = vld [vmem:[#allocation6 + $0x230] sm:$0xff]
    %v3161 = vld [vmem:[#allocation6 + $0x238] sm:$0xff]
    %v3162 = vld [vmem:[#allocation6 + $0x240] sm:$0xff]
    %v3163 = vld [vmem:[#allocation6 + $0x248] sm:$0xf]
    %v3164 = vld [vmem:[#allocation6 + $0x24c] sm:$0xff]
    %v3165 = vld [vmem:[#allocation6 + $0x254] sm:$0xff]
    %v3166 = vld [vmem:[#allocation6 + $0x25c] sm:$0xff]
    %v3167 = vld [vmem:[#allocation6 + $0x264] sm:$0xf]
    %v3168 = vld [vmem:[#allocation6 + $0x268] sm:$0xff]
    %v3169 = vld [vmem:[#allocation6 + $0x270] sm:$0xff]
    %v3170 = vld [vmem:[#allocation6 + $0x278] sm:$0xff]
    %v3171 = vld [vmem:[#allocation6 + $0x280] sm:$0xf]
    %v3172 = vld [vmem:[#allocation6 + $0x284] sm:$0xff]
    %v3173 = vld [vmem:[#allocation6 + $0x28c] sm:$0xff]
    %v3174 = vld [vmem:[#allocation6 + $0x294] sm:$0xff]
    %v3175 = vld [vmem:[#allocation6 + $0x29c] sm:$0xf]
    %v3176 = vld [vmem:[#allocation6 + $0x2a0] sm:$0xff]
    %v3177 = vld [vmem:[#allocation6 + $0x2a8] sm:$0xff]
    %v3178 = vld [vmem:[#allocation6 + $0x2b0] sm:$0xff]
    %v3179 = vld [vmem:[#allocation6 + $0x2b8] sm:$0xf]
    %v3180 = vld [vmem:[#allocation6 + $0x2bc] sm:$0xff]
    %v3181 = vld [vmem:[#allocation6 + $0x2c4] sm:$0xff]
    %v3182 = vld [vmem:[#allocation6 + $0x2cc] sm:$0xff]
    %v3183 = vld [vmem:[#allocation6 + $0x2d4] sm:$0xf]
    %v3184 = vld [vmem:[#allocation6 + $0x2d8] sm:$0xff]
    %v3185 = vld [vmem:[#allocation6 + $0x2e0] sm:$0xff]
    %v3186 = vld [vmem:[#allocation6 + $0x2e8] sm:$0xff]
    %v3187 = vld [vmem:[#allocation6 + $0x2f0] sm:$0xf]
    %v3188 = vld [vmem:[#allocation6 + $0x2f4] sm:$0xff]
    %v3189 = vld [vmem:[#allocation6 + $0x2fc] sm:$0xff]
    %v3190 = vld [vmem:[#allocation6 + $0x304] sm:$0xff]
    %v3191 = vld [vmem:[#allocation6 + $0x30c] sm:$0xf]
    %v3192 = vld [vmem:[#allocation6 + $0x310] sm:$0xff]
    %v3193 = vld [vmem:[#allocation6 + $0x318] sm:$0xff]
    %v3194 = vld [vmem:[#allocation6 + $0x320] sm:$0xff]
    %v3195 = vld [vmem:[#allocation6 + $0x328] sm:$0xf]
    %v3196 = vld [vmem:[#allocation6 + $0x32c] sm:$0xff]
    %v3197 = vld [vmem:[#allocation6 + $0x334] sm:$0xff]
    %v3198 = vld [vmem:[#allocation6 + $0x33c] sm:$0xff]
    %v3199 = vld [vmem:[#allocation6 + $0x344] sm:$0xf]
    %v3200 = vld [vmem:[#allocation6 + $0x348] sm:$0xff]
    %v3201 = vld [vmem:[#allocation6 + $0x350] sm:$0xff]
    %v3202 = vld [vmem:[#allocation6 + $0x358] sm:$0xff]
    %v3203 = vld [vmem:[#allocation6 + $0x360] sm:$0xf]
    %v3204 = vld [vmem:[#allocation6 + $0x364] sm:$0xff]
    %v3205 = vld [vmem:[#allocation6 + $0x36c] sm:$0xff]
    %v3206 = vld [vmem:[#allocation6 + $0x374] sm:$0xff]
    %v3207 = vld [vmem:[#allocation6 + $0x37c] sm:$0xf]
    %v3208 = vld [vmem:[#allocation6 + $0x380] sm:$0xff]
    %v3209 = vld [vmem:[#allocation6 + $0x388] sm:$0xff]
    %v3210 = vld [vmem:[#allocation6 + $0x390] sm:$0xff]
    %v3211 = vld [vmem:[#allocation6 + $0x398] sm:$0xf]
    %v3212 = vld [vmem:[#allocation6 + $0x39c] sm:$0xff]
    %v3213 = vld [vmem:[#allocation6 + $0x3a4] sm:$0xff]
    %v3214 = vld [vmem:[#allocation6 + $0x3ac] sm:$0xff]
    %v3215 = vld [vmem:[#allocation6 + $0x3b4] sm:$0xf]
    %v3216 = vld [vmem:[#allocation6 + $0x3b8] sm:$0xff]
    %v3217 = vld [vmem:[#allocation6 + $0x3c0] sm:$0xff]
    %v3218 = vld [vmem:[#allocation6 + $0x3c8] sm:$0xff]
    %v3219 = vld [vmem:[#allocation6 + $0x3d0] sm:$0xf]
    %v3220 = vld [vmem:[#allocation6 + $0x3d4] sm:$0xff]
    %v3221 = vld [vmem:[#allocation6 + $0x3dc] sm:$0xff]
    %v3222 = vld [vmem:[#allocation6 + $0x3e4] sm:$0xff]
    %v3223 = vld [vmem:[#allocation6 + $0x3ec] sm:$0xf]
    %v3224 = vld [vmem:[#allocation6 + $0x3f0] sm:$0xff]
    %v3225 = vld [vmem:[#allocation6 + $0x3f8] sm:$0xff]
    %v3226 = vld [vmem:[#allocation6 + $0x400] sm:$0xff]
    %v3227 = vld [vmem:[#allocation6 + $0x408] sm:$0xf]
    %v3228 = vld [vmem:[#allocation6 + $0x40c] sm:$0xff]
    %v3229 = vld [vmem:[#allocation6 + $0x414] sm:$0xff]
    %v3230 = vld [vmem:[#allocation6 + $0x41c] sm:$0xff]
    %v3231 = vld [vmem:[#allocation6 + $0x424] sm:$0xf]
    %v3232 = vld [vmem:[#allocation6 + $0x428] sm:$0xff]
    %v3233 = vld [vmem:[#allocation6 + $0x430] sm:$0xff]
    %v3234 = vld [vmem:[#allocation6 + $0x438] sm:$0xff]
    %v3235 = vld [vmem:[#allocation6 + $0x440] sm:$0xf]
    %v3236 = vld [vmem:[#allocation6 + $0x444] sm:$0xff]
    %v3237 = vld [vmem:[#allocation6 + $0x44c] sm:$0xff]
    %v3238 = vld [vmem:[#allocation6 + $0x454] sm:$0xff]
    %v3239 = vld [vmem:[#allocation6 + $0x45c] sm:$0xf]
    %v3240 = vld [vmem:[#allocation6 + $0x460] sm:$0xff]
    %v3241 = vld [vmem:[#allocation6 + $0x468] sm:$0xff]
    %v3242 = vld [vmem:[#allocation6 + $0x470] sm:$0xff]
    %v3243 = vld [vmem:[#allocation6 + $0x478] sm:$0xf]
    %v3244 = vld [vmem:[#allocation6 + $0x47c] sm:$0xff]
    %v3245 = vld [vmem:[#allocation6 + $0x484] sm:$0xff]
    %v3246 = vld [vmem:[#allocation6 + $0x48c] sm:$0xff]
    %v3247 = vld [vmem:[#allocation6 + $0x494] sm:$0xf]
    %v3248 = vld [vmem:[#allocation6 + $0x498] sm:$0xff]
    %v3249 = vld [vmem:[#allocation6 + $0x4a0] sm:$0xff]
    %v3250 = vld [vmem:[#allocation6 + $0x4a8] sm:$0xff]
    %v3251 = vld [vmem:[#allocation6 + $0x4b0] sm:$0xf]
    %v3252 = vld [vmem:[#allocation6 + $0x4b4] sm:$0xff]
    %v3253 = vld [vmem:[#allocation6 + $0x4bc] sm:$0xff]
    %v3254 = vld [vmem:[#allocation6 + $0x4c4] sm:$0xff]
    %v3255 = vld [vmem:[#allocation6 + $0x4cc] sm:$0xf]
    %v3256 = vld [vmem:[#allocation6 + $0x4d0] sm:$0xff]
    %v3257 = vld [vmem:[#allocation6 + $0x4d8] sm:$0xff]
    %v3258 = vld [vmem:[#allocation6 + $0x4e0] sm:$0xff]
    %v3259 = vld [vmem:[#allocation6 + $0x4e8] sm:$0xf]
    %v3260 = vld [vmem:[#allocation6 + $0x4ec] sm:$0xff]
    %v3261 = vld [vmem:[#allocation6 + $0x4f4] sm:$0xff]
    %v3262 = vld [vmem:[#allocation6 + $0x4fc] sm:$0xff]
    %v3263 = vld [vmem:[#allocation6 + $0x504] sm:$0xf]
    %v3264 = vld [vmem:[#allocation6 + $0x508] sm:$0xff]
    %v3265 = vld [vmem:[#allocation6 + $0x510] sm:$0xff]
    %v3266 = vld [vmem:[#allocation6 + $0x518] sm:$0xff]
    %v3267 = vld [vmem:[#allocation6 + $0x520] sm:$0xf]
    %v3268 = vld [vmem:[#allocation6 + $0x524] sm:$0xff]
    %v3269 = vld [vmem:[#allocation6 + $0x52c] sm:$0xff]
    %v3270 = vld [vmem:[#allocation6 + $0x534] sm:$0xff]
    %v3271 = vld [vmem:[#allocation6 + $0x53c] sm:$0xf]
    %v3272 = vld [vmem:[#allocation6 + $0x540] sm:$0xff]
    %v3273 = vld [vmem:[#allocation6 + $0x548] sm:$0xff]
    %v3274 = vld [vmem:[#allocation6 + $0x550] sm:$0xff]
    %v3275 = vld [vmem:[#allocation6 + $0x558] sm:$0xf]
    %v3276 = vld [vmem:[#allocation6 + $0x55c] sm:$0xff]
    %v3277 = vld [vmem:[#allocation6 + $0x564] sm:$0xff]
    %v3278 = vld [vmem:[#allocation6 + $0x56c] sm:$0xff]
    %v3279 = vld [vmem:[#allocation6 + $0x574] sm:$0xf]
    %v3280 = vld [vmem:[#allocation6 + $0x578] sm:$0xff]
    %v3281 = vld [vmem:[#allocation6 + $0x580] sm:$0xff]
    %v3282 = vld [vmem:[#allocation6 + $0x588] sm:$0xff]
    %v3283 = vld [vmem:[#allocation6 + $0x590] sm:$0xf]
    %v3284 = vld [vmem:[#allocation6 + $0x594] sm:$0xff]
    %v3285 = vld [vmem:[#allocation6 + $0x59c] sm:$0xff]
    %v3286 = vld [vmem:[#allocation6 + $0x5a4] sm:$0xff]
    %v3287 = vld [vmem:[#allocation6 + $0x5ac] sm:$0xf]
    %v3288 = vld [vmem:[#allocation6 + $0x5b0] sm:$0xff]
    %v3289 = vld [vmem:[#allocation6 + $0x5b8] sm:$0xff]
    %v3290 = vld [vmem:[#allocation6 + $0x5c0] sm:$0xff]
    %v3291 = vld [vmem:[#allocation6 + $0x5c8] sm:$0xf]
    %v3292 = vld [vmem:[#allocation6 + $0x5cc] sm:$0xff]
    %v3293 = vld [vmem:[#allocation6 + $0x5d4] sm:$0xff]
    %v3294 = vld [vmem:[#allocation6 + $0x5dc] sm:$0xff]
    %v3295 = vld [vmem:[#allocation6 + $0x5e4] sm:$0xf]
    %v3296 = vld [vmem:[#allocation6 + $0x5e8] sm:$0xff]
    %v3297 = vld [vmem:[#allocation6 + $0x5f0] sm:$0xff]
    %v3298 = vld [vmem:[#allocation6 + $0x5f8] sm:$0xff]
    %v3299 = vld [vmem:[#allocation6 + $0x600] sm:$0xf]
    %v3300 = vld [vmem:[#allocation6 + $0x604] sm:$0xff]
    %v3301 = vld [vmem:[#allocation6 + $0x60c] sm:$0xff]
    %v3302 = vld [vmem:[#allocation6 + $0x614] sm:$0xff]
    %v3303 = vld [vmem:[#allocation6 + $0x61c] sm:$0xf]
    %v3304 = vld [vmem:[#allocation6 + $0x620] sm:$0xff]
    %v3305 = vld [vmem:[#allocation6 + $0x628] sm:$0xff]
    %v3306 = vld [vmem:[#allocation6 + $0x630] sm:$0xff]
    %v3307 = vld [vmem:[#allocation6 + $0x638] sm:$0xf]
    %v3308 = vld [vmem:[#allocation6 + $0x63c] sm:$0xff]
    %v3309 = vld [vmem:[#allocation6 + $0x644] sm:$0xff]
    %v3310 = vld [vmem:[#allocation6 + $0x64c] sm:$0xff]
    %v3311 = vld [vmem:[#allocation6 + $0x654] sm:$0xf]
    %v3312 = vld [vmem:[#allocation6 + $0x658] sm:$0xff]
    %v3313 = vld [vmem:[#allocation6 + $0x660] sm:$0xff]
    %v3314 = vld [vmem:[#allocation6 + $0x668] sm:$0xff]
    %v3315 = vld [vmem:[#allocation6 + $0x670] sm:$0xf]
    %v3316 = vld [vmem:[#allocation6 + $0x674] sm:$0xff]
    %v3317 = vld [vmem:[#allocation6 + $0x67c] sm:$0xff]
    %v3318 = vld [vmem:[#allocation6 + $0x684] sm:$0xff]
    %v3319 = vld [vmem:[#allocation6 + $0x68c] sm:$0xf]
    %v3320 = vld [vmem:[#allocation6 + $0x690] sm:$0xff]
    %v3321 = vld [vmem:[#allocation6 + $0x698] sm:$0xff]
    %v3322 = vld [vmem:[#allocation6 + $0x6a0] sm:$0xff]
    %v3323 = vld [vmem:[#allocation6 + $0x6a8] sm:$0xf]
    %v3324 = vld [vmem:[#allocation6 + $0x6ac] sm:$0xff]
    %v3325 = vld [vmem:[#allocation6 + $0x6b4] sm:$0xff]
    %v3326 = vld [vmem:[#allocation6 + $0x6bc] sm:$0xff]
    %v3327 = vld [vmem:[#allocation6 + $0x6c4] sm:$0xf]
    %v3328 = vld [vmem:[#allocation6 + $0x6c8] sm:$0xff]
    %v3329 = vld [vmem:[#allocation6 + $0x6d0] sm:$0xff]
    %v3330 = vld [vmem:[#allocation6 + $0x6d8] sm:$0xff]
    %v3331 = vld [vmem:[#allocation6 + $0x6e0] sm:$0xf]
    %v3332 = vld [vmem:[#allocation6 + $0x6e4] sm:$0xff]
    %v3333 = vld [vmem:[#allocation6 + $0x6ec] sm:$0xff]
    %v3334 = vld [vmem:[#allocation6 + $0x6f4] sm:$0xff]
    %v3335 = vld [vmem:[#allocation6 + $0x6fc] sm:$0xf]
    %v3336 = vld [vmem:[%s13] sm:$0xff]
    %v3338 = vlaneseq
    %v3339 = vshrl.u32 %v3338, 7
    %v3340 = vsub.s32 0, %v3339
    %v3341 = vrot.slane %v3336, %v3340
    %v3342 = vlaneseq
    %v3343 = vshrl.u32 %v3342, 7
    %v3344 = vsub.s32 1, %v3343
    %v3345 = vrot.slane %v3336, %v3344
    %v3346 = vlaneseq
    %v3347 = vshrl.u32 %v3346, 7
    %v3348 = vsub.s32 2, %v3347
    %v3349 = vrot.slane %v3336, %v3348
    %v3350 = vlaneseq
    %v3351 = vshrl.u32 %v3350, 7
    %v3352 = vsub.s32 3, %v3351
    %v3353 = vrot.slane %v3336, %v3352
    %v3354 = vlaneseq
    %v3355 = vshrl.u32 %v3354, 7
    %v3356 = vsub.s32 4, %v3355
    %v3357 = vrot.slane %v3336, %v3356
    %v3358 = vlaneseq
    %v3359 = vshrl.u32 %v3358, 7
    %v3360 = vsub.s32 5, %v3359
    %v3361 = vrot.slane %v3336, %v3360
    %v3362 = vlaneseq
    %v3363 = vshrl.u32 %v3362, 7
    %v3364 = vsub.s32 6, %v3363
    %v3365 = vrot.slane %v3336, %v3364
    %v3629 = vunpack.c.l.b16 %v3080
    %v3630 = vunpack.c.h.b16 %v3080
    %v3631 = vunpack.c.l.b16 %v3081
    %v3632 = vunpack.c.h.b16 %v3081
    %v3633 = vunpack.c.l.b16 %v3082
    %v3634 = vunpack.c.h.b16 %v3082
    %v3635 = vunpack.c.l.b16 %v3083
    %v3636 = vunpack.c.l.b16 %v3084
    %v3637 = vunpack.c.h.b16 %v3084
    %v3638 = vunpack.c.l.b16 %v3085
    %v3639 = vunpack.c.h.b16 %v3085
    %v3640 = vunpack.c.l.b16 %v3086
    %v3641 = vunpack.c.h.b16 %v3086
    %v3642 = vunpack.c.l.b16 %v3087
    %v3643 = vunpack.c.l.b16 %v3088
    %v3644 = vunpack.c.h.b16 %v3088
    %v3645 = vunpack.c.l.b16 %v3089
    %v3646 = vunpack.c.h.b16 %v3089
    %v3647 = vunpack.c.l.b16 %v3090
    %v3648 = vunpack.c.h.b16 %v3090
    %v3649 = vunpack.c.l.b16 %v3091
    %v3650 = vunpack.c.l.b16 %v3092
    %v3651 = vunpack.c.h.b16 %v3092
    %v3652 = vunpack.c.l.b16 %v3093
    %v3653 = vunpack.c.h.b16 %v3093
    %v3654 = vunpack.c.l.b16 %v3094
    %v3655 = vunpack.c.h.b16 %v3094
    %v3656 = vunpack.c.l.b16 %v3095
    %v3657 = vunpack.c.l.b16 %v3096
    %v3658 = vunpack.c.h.b16 %v3096
    %v3659 = vunpack.c.l.b16 %v3097
    %v3660 = vunpack.c.h.b16 %v3097
    %v3661 = vunpack.c.l.b16 %v3098
    %v3662 = vunpack.c.h.b16 %v3098
    %v3663 = vunpack.c.l.b16 %v3099
    %v3664 = vunpack.c.l.b16 %v3100
    %v3665 = vunpack.c.h.b16 %v3100
    %v3666 = vunpack.c.l.b16 %v3101
    %v3667 = vunpack.c.h.b16 %v3101
    %v3668 = vunpack.c.l.b16 %v3102
    %v3669 = vunpack.c.h.b16 %v3102
    %v3670 = vunpack.c.l.b16 %v3103
    %v3671 = vunpack.c.l.b16 %v3104
    %v3672 = vunpack.c.h.b16 %v3104
    %v3673 = vunpack.c.l.b16 %v3105
    %v3674 = vunpack.c.h.b16 %v3105
    %v3675 = vunpack.c.l.b16 %v3106
    %v3676 = vunpack.c.h.b16 %v3106
    %v3677 = vunpack.c.l.b16 %v3107
    %v3678 = vunpack.c.l.b16 %v3108
    %v3679 = vunpack.c.h.b16 %v3108
    %v3680 = vunpack.c.l.b16 %v3109
    %v3681 = vunpack.c.h.b16 %v3109
    %v3682 = vunpack.c.l.b16 %v3110
    %v3683 = vunpack.c.h.b16 %v3110
    %v3684 = vunpack.c.l.b16 %v3111
    %v3685 = vunpack.c.l.b16 %v3112
    %v3686 = vunpack.c.h.b16 %v3112
    %v3687 = vunpack.c.l.b16 %v3113
    %v3688 = vunpack.c.h.b16 %v3113
    %v3689 = vunpack.c.l.b16 %v3114
    %v3690 = vunpack.c.h.b16 %v3114
    %v3691 = vunpack.c.l.b16 %v3115
    %v3692 = vunpack.c.l.b16 %v3116
    %v3693 = vunpack.c.h.b16 %v3116
    %v3694 = vunpack.c.l.b16 %v3117
    %v3695 = vunpack.c.h.b16 %v3117
    %v3696 = vunpack.c.l.b16 %v3118
    %v3697 = vunpack.c.h.b16 %v3118
    %v3698 = vunpack.c.l.b16 %v3119
    %v3699 = vunpack.c.l.b16 %v3120
    %v3700 = vunpack.c.h.b16 %v3120
    %v3701 = vunpack.c.l.b16 %v3121
    %v3702 = vunpack.c.h.b16 %v3121
    %v3703 = vunpack.c.l.b16 %v3122
    %v3704 = vunpack.c.h.b16 %v3122
    %v3705 = vunpack.c.l.b16 %v3123
    %v3706 = vunpack.c.l.b16 %v3124
    %v3707 = vunpack.c.h.b16 %v3124
    %v3708 = vunpack.c.l.b16 %v3125
    %v3709 = vunpack.c.h.b16 %v3125
    %v3710 = vunpack.c.l.b16 %v3126
    %v3711 = vunpack.c.h.b16 %v3126
    %v3712 = vunpack.c.l.b16 %v3127
    %v3713 = vunpack.c.l.b16 %v3128
    %v3714 = vunpack.c.h.b16 %v3128
    %v3715 = vunpack.c.l.b16 %v3129
    %v3716 = vunpack.c.h.b16 %v3129
    %v3717 = vunpack.c.l.b16 %v3130
    %v3718 = vunpack.c.h.b16 %v3130
    %v3719 = vunpack.c.l.b16 %v3131
    %v3720 = vunpack.c.l.b16 %v3132
    %v3721 = vunpack.c.h.b16 %v3132
    %v3722 = vunpack.c.l.b16 %v3133
    %v3723 = vunpack.c.h.b16 %v3133
    %v3724 = vunpack.c.l.b16 %v3134
    %v3725 = vunpack.c.h.b16 %v3134
    %v3726 = vunpack.c.l.b16 %v3135
    %v3727 = vunpack.c.l.b16 %v3136
    %v3728 = vunpack.c.h.b16 %v3136
    %v3729 = vunpack.c.l.b16 %v3137
    %v3730 = vunpack.c.h.b16 %v3137
    %v3731 = vunpack.c.l.b16 %v3138
    %v3732 = vunpack.c.h.b16 %v3138
    %v3733 = vunpack.c.l.b16 %v3139
    %v3734 = vunpack.c.l.b16 %v3140
    %v3735 = vunpack.c.h.b16 %v3140
    %v3736 = vunpack.c.l.b16 %v3141
    %v3737 = vunpack.c.h.b16 %v3141
    %v3738 = vunpack.c.l.b16 %v3142
    %v3739 = vunpack.c.h.b16 %v3142
    %v3740 = vunpack.c.l.b16 %v3143
    %v3741 = vunpack.c.l.b16 %v3144
    %v3742 = vunpack.c.h.b16 %v3144
    %v3743 = vunpack.c.l.b16 %v3145
    %v3744 = vunpack.c.h.b16 %v3145
    %v3745 = vunpack.c.l.b16 %v3146
    %v3746 = vunpack.c.h.b16 %v3146
    %v3747 = vunpack.c.l.b16 %v3147
    %v3748 = vunpack.c.l.b16 %v3148
    %v3749 = vunpack.c.h.b16 %v3148
    %v3750 = vunpack.c.l.b16 %v3149
    %v3751 = vunpack.c.h.b16 %v3149
    %v3752 = vunpack.c.l.b16 %v3150
    %v3753 = vunpack.c.h.b16 %v3150
    %v3754 = vunpack.c.l.b16 %v3151
    %v3755 = vunpack.c.l.b16 %v3152
    %v3756 = vunpack.c.h.b16 %v3152
    %v3757 = vunpack.c.l.b16 %v3153
    %v3758 = vunpack.c.h.b16 %v3153
    %v3759 = vunpack.c.l.b16 %v3154
    %v3760 = vunpack.c.h.b16 %v3154
    %v3761 = vunpack.c.l.b16 %v3155
    %v3762 = vunpack.c.l.b16 %v3156
    %v3763 = vunpack.c.h.b16 %v3156
    %v3764 = vunpack.c.l.b16 %v3157
    %v3765 = vunpack.c.h.b16 %v3157
    %v3766 = vunpack.c.l.b16 %v3158
    %v3767 = vunpack.c.h.b16 %v3158
    %v3768 = vunpack.c.l.b16 %v3159
    %v3769 = vunpack.c.l.b16 %v3160
    %v3770 = vunpack.c.h.b16 %v3160
    %v3771 = vunpack.c.l.b16 %v3161
    %v3772 = vunpack.c.h.b16 %v3161
    %v3773 = vunpack.c.l.b16 %v3162
    %v3774 = vunpack.c.h.b16 %v3162
    %v3775 = vunpack.c.l.b16 %v3163
    %v3776 = vunpack.c.l.b16 %v3164
    %v3777 = vunpack.c.h.b16 %v3164
    %v3778 = vunpack.c.l.b16 %v3165
    %v3779 = vunpack.c.h.b16 %v3165
    %v3780 = vunpack.c.l.b16 %v3166
    %v3781 = vunpack.c.h.b16 %v3166
    %v3782 = vunpack.c.l.b16 %v3167
    %v3783 = vunpack.c.l.b16 %v3168
    %v3784 = vunpack.c.h.b16 %v3168
    %v3785 = vunpack.c.l.b16 %v3169
    %v3786 = vunpack.c.h.b16 %v3169
    %v3787 = vunpack.c.l.b16 %v3170
    %v3788 = vunpack.c.h.b16 %v3170
    %v3789 = vunpack.c.l.b16 %v3171
    %v3790 = vunpack.c.l.b16 %v3172
    %v3791 = vunpack.c.h.b16 %v3172
    %v3792 = vunpack.c.l.b16 %v3173
    %v3793 = vunpack.c.h.b16 %v3173
    %v3794 = vunpack.c.l.b16 %v3174
    %v3795 = vunpack.c.h.b16 %v3174
    %v3796 = vunpack.c.l.b16 %v3175
    %v3797 = vunpack.c.l.b16 %v3176
    %v3798 = vunpack.c.h.b16 %v3176
    %v3799 = vunpack.c.l.b16 %v3177
    %v3800 = vunpack.c.h.b16 %v3177
    %v3801 = vunpack.c.l.b16 %v3178
    %v3802 = vunpack.c.h.b16 %v3178
    %v3803 = vunpack.c.l.b16 %v3179
    %v3804 = vunpack.c.l.b16 %v3180
    %v3805 = vunpack.c.h.b16 %v3180
    %v3806 = vunpack.c.l.b16 %v3181
    %v3807 = vunpack.c.h.b16 %v3181
    %v3808 = vunpack.c.l.b16 %v3182
    %v3809 = vunpack.c.h.b16 %v3182
    %v3810 = vunpack.c.l.b16 %v3183
    %v3811 = vunpack.c.l.b16 %v3184
    %v3812 = vunpack.c.h.b16 %v3184
    %v3813 = vunpack.c.l.b16 %v3185
    %v3814 = vunpack.c.h.b16 %v3185
    %v3815 = vunpack.c.l.b16 %v3186
    %v3816 = vunpack.c.h.b16 %v3186
    %v3817 = vunpack.c.l.b16 %v3187
    %v3818 = vunpack.c.l.b16 %v3188
    %v3819 = vunpack.c.h.b16 %v3188
    %v3820 = vunpack.c.l.b16 %v3189
    %v3821 = vunpack.c.h.b16 %v3189
    %v3822 = vunpack.c.l.b16 %v3190
    %v3823 = vunpack.c.h.b16 %v3190
    %v3824 = vunpack.c.l.b16 %v3191
    %v3825 = vunpack.c.l.b16 %v3192
    %v3826 = vunpack.c.h.b16 %v3192
    %v3827 = vunpack.c.l.b16 %v3193
    %v3828 = vunpack.c.h.b16 %v3193
    %v3829 = vunpack.c.l.b16 %v3194
    %v3830 = vunpack.c.h.b16 %v3194
    %v3831 = vunpack.c.l.b16 %v3195
    %v3832 = vunpack.c.l.b16 %v3196
    %v3833 = vunpack.c.h.b16 %v3196
    %v3834 = vunpack.c.l.b16 %v3197
    %v3835 = vunpack.c.h.b16 %v3197
    %v3836 = vunpack.c.l.b16 %v3198
    %v3837 = vunpack.c.h.b16 %v3198
    %v3838 = vunpack.c.l.b16 %v3199
    %v3839 = vunpack.c.l.b16 %v3200
    %v3840 = vunpack.c.h.b16 %v3200
    %v3841 = vunpack.c.l.b16 %v3201
    %v3842 = vunpack.c.h.b16 %v3201
    %v3843 = vunpack.c.l.b16 %v3202
    %v3844 = vunpack.c.h.b16 %v3202
    %v3845 = vunpack.c.l.b16 %v3203
    %v3846 = vunpack.c.l.b16 %v3204
    %v3847 = vunpack.c.h.b16 %v3204
    %v3848 = vunpack.c.l.b16 %v3205
    %v3849 = vunpack.c.h.b16 %v3205
    %v3850 = vunpack.c.l.b16 %v3206
    %v3851 = vunpack.c.h.b16 %v3206
    %v3852 = vunpack.c.l.b16 %v3207
    %v3853 = vunpack.c.l.b16 %v3208
    %v3854 = vunpack.c.h.b16 %v3208
    %v3855 = vunpack.c.l.b16 %v3209
    %v3856 = vunpack.c.h.b16 %v3209
    %v3857 = vunpack.c.l.b16 %v3210
    %v3858 = vunpack.c.h.b16 %v3210
    %v3859 = vunpack.c.l.b16 %v3211
    %v3860 = vunpack.c.l.b16 %v3212
    %v3861 = vunpack.c.h.b16 %v3212
    %v3862 = vunpack.c.l.b16 %v3213
    %v3863 = vunpack.c.h.b16 %v3213
    %v3864 = vunpack.c.l.b16 %v3214
    %v3865 = vunpack.c.h.b16 %v3214
    %v3866 = vunpack.c.l.b16 %v3215
    %v3867 = vunpack.c.l.b16 %v3216
    %v3868 = vunpack.c.h.b16 %v3216
    %v3869 = vunpack.c.l.b16 %v3217
    %v3870 = vunpack.c.h.b16 %v3217
    %v3871 = vunpack.c.l.b16 %v3218
    %v3872 = vunpack.c.h.b16 %v3218
    %v3873 = vunpack.c.l.b16 %v3219
    %v3874 = vunpack.c.l.b16 %v3220
    %v3875 = vunpack.c.h.b16 %v3220
    %v3876 = vunpack.c.l.b16 %v3221
    %v3877 = vunpack.c.h.b16 %v3221
    %v3878 = vunpack.c.l.b16 %v3222
    %v3879 = vunpack.c.h.b16 %v3222
    %v3880 = vunpack.c.l.b16 %v3223
    %v3881 = vunpack.c.l.b16 %v3224
    %v3882 = vunpack.c.h.b16 %v3224
    %v3883 = vunpack.c.l.b16 %v3225
    %v3884 = vunpack.c.h.b16 %v3225
    %v3885 = vunpack.c.l.b16 %v3226
    %v3886 = vunpack.c.h.b16 %v3226
    %v3887 = vunpack.c.l.b16 %v3227
    %v3888 = vunpack.c.l.b16 %v3228
    %v3889 = vunpack.c.h.b16 %v3228
    %v3890 = vunpack.c.l.b16 %v3229
    %v3891 = vunpack.c.h.b16 %v3229
    %v3892 = vunpack.c.l.b16 %v3230
    %v3893 = vunpack.c.h.b16 %v3230
    %v3894 = vunpack.c.l.b16 %v3231
    %v3895 = vunpack.c.l.b16 %v3232
    %v3896 = vunpack.c.h.b16 %v3232
    %v3897 = vunpack.c.l.b16 %v3233
    %v3898 = vunpack.c.h.b16 %v3233
    %v3899 = vunpack.c.l.b16 %v3234
    %v3900 = vunpack.c.h.b16 %v3234
    %v3901 = vunpack.c.l.b16 %v3235
    %v3902 = vunpack.c.l.b16 %v3236
    %v3903 = vunpack.c.h.b16 %v3236
    %v3904 = vunpack.c.l.b16 %v3237
    %v3905 = vunpack.c.h.b16 %v3237
    %v3906 = vunpack.c.l.b16 %v3238
    %v3907 = vunpack.c.h.b16 %v3238
    %v3908 = vunpack.c.l.b16 %v3239
    %v3909 = vunpack.c.l.b16 %v3240
    %v3910 = vunpack.c.h.b16 %v3240
    %v3911 = vunpack.c.l.b16 %v3241
    %v3912 = vunpack.c.h.b16 %v3241
    %v3913 = vunpack.c.l.b16 %v3242
    %v3914 = vunpack.c.h.b16 %v3242
    %v3915 = vunpack.c.l.b16 %v3243
    %v3916 = vunpack.c.l.b16 %v3244
    %v3917 = vunpack.c.h.b16 %v3244
    %v3918 = vunpack.c.l.b16 %v3245
    %v3919 = vunpack.c.h.b16 %v3245
    %v3920 = vunpack.c.l.b16 %v3246
    %v3921 = vunpack.c.h.b16 %v3246
    %v3922 = vunpack.c.l.b16 %v3247
    %v3923 = vunpack.c.l.b16 %v3248
    %v3924 = vunpack.c.h.b16 %v3248
    %v3925 = vunpack.c.l.b16 %v3249
    %v3926 = vunpack.c.h.b16 %v3249
    %v3927 = vunpack.c.l.b16 %v3250
    %v3928 = vunpack.c.h.b16 %v3250
    %v3929 = vunpack.c.l.b16 %v3251
    %v3930 = vunpack.c.l.b16 %v3252
    %v3931 = vunpack.c.h.b16 %v3252
    %v3932 = vunpack.c.l.b16 %v3253
    %v3933 = vunpack.c.h.b16 %v3253
    %v3934 = vunpack.c.l.b16 %v3254
    %v3935 = vunpack.c.h.b16 %v3254
    %v3936 = vunpack.c.l.b16 %v3255
    %v3937 = vunpack.c.l.b16 %v3256
    %v3938 = vunpack.c.h.b16 %v3256
    %v3939 = vunpack.c.l.b16 %v3257
    %v3940 = vunpack.c.h.b16 %v3257
    %v3941 = vunpack.c.l.b16 %v3258
    %v3942 = vunpack.c.h.b16 %v3258
    %v3943 = vunpack.c.l.b16 %v3259
    %v3944 = vunpack.c.l.b16 %v3260
    %v3945 = vunpack.c.h.b16 %v3260
    %v3946 = vunpack.c.l.b16 %v3261
    %v3947 = vunpack.c.h.b16 %v3261
    %v3948 = vunpack.c.l.b16 %v3262
    %v3949 = vunpack.c.h.b16 %v3262
    %v3950 = vunpack.c.l.b16 %v3263
    %v3951 = vunpack.c.l.b16 %v3264
    %v3952 = vunpack.c.h.b16 %v3264
    %v3953 = vunpack.c.l.b16 %v3265
    %v3954 = vunpack.c.h.b16 %v3265
    %v3955 = vunpack.c.l.b16 %v3266
    %v3956 = vunpack.c.h.b16 %v3266
    %v3957 = vunpack.c.l.b16 %v3267
    %v3958 = vunpack.c.l.b16 %v3268
    %v3959 = vunpack.c.h.b16 %v3268
    %v3960 = vunpack.c.l.b16 %v3269
    %v3961 = vunpack.c.h.b16 %v3269
    %v3962 = vunpack.c.l.b16 %v3270
    %v3963 = vunpack.c.h.b16 %v3270
    %v3964 = vunpack.c.l.b16 %v3271
    %v3965 = vunpack.c.l.b16 %v3272
    %v3966 = vunpack.c.h.b16 %v3272
    %v3967 = vunpack.c.l.b16 %v3273
    %v3968 = vunpack.c.h.b16 %v3273
    %v3969 = vunpack.c.l.b16 %v3274
    %v3970 = vunpack.c.h.b16 %v3274
    %v3971 = vunpack.c.l.b16 %v3275
    %v3972 = vunpack.c.l.b16 %v3276
    %v3973 = vunpack.c.h.b16 %v3276
    %v3974 = vunpack.c.l.b16 %v3277
    %v3975 = vunpack.c.h.b16 %v3277
    %v3976 = vunpack.c.l.b16 %v3278
    %v3977 = vunpack.c.h.b16 %v3278
    %v3978 = vunpack.c.l.b16 %v3279
    %v3979 = vunpack.c.l.b16 %v3280
    %v3980 = vunpack.c.h.b16 %v3280
    %v3981 = vunpack.c.l.b16 %v3281
    %v3982 = vunpack.c.h.b16 %v3281
    %v3983 = vunpack.c.l.b16 %v3282
    %v3984 = vunpack.c.h.b16 %v3282
    %v3985 = vunpack.c.l.b16 %v3283
    %v3986 = vunpack.c.l.b16 %v3284
    %v3987 = vunpack.c.h.b16 %v3284
    %v3988 = vunpack.c.l.b16 %v3285
    %v3989 = vunpack.c.h.b16 %v3285
    %v3990 = vunpack.c.l.b16 %v3286
    %v3991 = vunpack.c.h.b16 %v3286
    %v3992 = vunpack.c.l.b16 %v3287
    %v3993 = vunpack.c.l.b16 %v3288
    %v3994 = vunpack.c.h.b16 %v3288
    %v3995 = vunpack.c.l.b16 %v3289
    %v3996 = vunpack.c.h.b16 %v3289
    %v3997 = vunpack.c.l.b16 %v3290
    %v3998 = vunpack.c.h.b16 %v3290
    %v3999 = vunpack.c.l.b16 %v3291
    %v4000 = vunpack.c.l.b16 %v3292
    %v4001 = vunpack.c.h.b16 %v3292
    %v4002 = vunpack.c.l.b16 %v3293
    %v4003 = vunpack.c.h.b16 %v3293
    %v4004 = vunpack.c.l.b16 %v3294
    %v4005 = vunpack.c.h.b16 %v3294
    %v4006 = vunpack.c.l.b16 %v3295
    %v4007 = vunpack.c.l.b16 %v3296
    %v4008 = vunpack.c.h.b16 %v3296
    %v4009 = vunpack.c.l.b16 %v3297
    %v4010 = vunpack.c.h.b16 %v3297
    %v4011 = vunpack.c.l.b16 %v3298
    %v4012 = vunpack.c.h.b16 %v3298
    %v4013 = vunpack.c.l.b16 %v3299
    %v4014 = vunpack.c.l.b16 %v3300
    %v4015 = vunpack.c.h.b16 %v3300
    %v4016 = vunpack.c.l.b16 %v3301
    %v4017 = vunpack.c.h.b16 %v3301
    %v4018 = vunpack.c.l.b16 %v3302
    %v4019 = vunpack.c.h.b16 %v3302
    %v4020 = vunpack.c.l.b16 %v3303
    %v4021 = vunpack.c.l.b16 %v3304
    %v4022 = vunpack.c.h.b16 %v3304
    %v4023 = vunpack.c.l.b16 %v3305
    %v4024 = vunpack.c.h.b16 %v3305
    %v4025 = vunpack.c.l.b16 %v3306
    %v4026 = vunpack.c.h.b16 %v3306
    %v4027 = vunpack.c.l.b16 %v3307
    %v4028 = vunpack.c.l.b16 %v3308
    %v4029 = vunpack.c.h.b16 %v3308
    %v4030 = vunpack.c.l.b16 %v3309
    %v4031 = vunpack.c.h.b16 %v3309
    %v4032 = vunpack.c.l.b16 %v3310
    %v4033 = vunpack.c.h.b16 %v3310
    %v4034 = vunpack.c.l.b16 %v3311
    %v4035 = vunpack.c.l.b16 %v3312
    %v4036 = vunpack.c.h.b16 %v3312
    %v4037 = vunpack.c.l.b16 %v3313
    %v4038 = vunpack.c.h.b16 %v3313
    %v4039 = vunpack.c.l.b16 %v3314
    %v4040 = vunpack.c.h.b16 %v3314
    %v4041 = vunpack.c.l.b16 %v3315
    %v4042 = vunpack.c.l.b16 %v3316
    %v4043 = vunpack.c.h.b16 %v3316
    %v4044 = vunpack.c.l.b16 %v3317
    %v4045 = vunpack.c.h.b16 %v3317
    %v4046 = vunpack.c.l.b16 %v3318
    %v4047 = vunpack.c.h.b16 %v3318
    %v4048 = vunpack.c.l.b16 %v3319
    %v4049 = vunpack.c.l.b16 %v3320
    %v4050 = vunpack.c.h.b16 %v3320
    %v4051 = vunpack.c.l.b16 %v3321
    %v4052 = vunpack.c.h.b16 %v3321
    %v4053 = vunpack.c.l.b16 %v3322
    %v4054 = vunpack.c.h.b16 %v3322
    %v4055 = vunpack.c.l.b16 %v3323
    %v4056 = vunpack.c.l.b16 %v3324
    %v4057 = vunpack.c.h.b16 %v3324
    %v4058 = vunpack.c.l.b16 %v3325
    %v4059 = vunpack.c.h.b16 %v3325
    %v4060 = vunpack.c.l.b16 %v3326
    %v4061 = vunpack.c.h.b16 %v3326
    %v4062 = vunpack.c.l.b16 %v3327
    %v4063 = vunpack.c.l.b16 %v3328
    %v4064 = vunpack.c.h.b16 %v3328
    %v4065 = vunpack.c.l.b16 %v3329
    %v4066 = vunpack.c.h.b16 %v3329
    %v4067 = vunpack.c.l.b16 %v3330
    %v4068 = vunpack.c.h.b16 %v3330
    %v4069 = vunpack.c.l.b16 %v3331
    %v4070 = vunpack.c.l.b16 %v3332
    %v4071 = vunpack.c.h.b16 %v3332
    %v4072 = vunpack.c.l.b16 %v3333
    %v4073 = vunpack.c.h.b16 %v3333
    %v4074 = vunpack.c.l.b16 %v3334
    %v4075 = vunpack.c.h.b16 %v3334
    %v4076 = vunpack.c.l.b16 %v3335
    %v4077 = vpack.c.b16 %v3636, %v3629
    %v4078 = vpack.c.b16 %v3637, %v3630
    %v4079 = vpack.c.b16 %v3638, %v3631
    %v4080 = vpack.c.b16 %v3639, %v3632
    %v4081 = vpack.c.b16 %v3640, %v3633
    %v4082 = vpack.c.b16 %v3641, %v3634
    %v4083 = vpack.c.b16 %v3642, %v3635
    %v4084 = vpack.c.b16 %v3650, %v3643
    %v4085 = vpack.c.b16 %v3651, %v3644
    %v4086 = vpack.c.b16 %v3652, %v3645
    %v4087 = vpack.c.b16 %v3653, %v3646
    %v4088 = vpack.c.b16 %v3654, %v3647
    %v4089 = vpack.c.b16 %v3655, %v3648
    %v4090 = vpack.c.b16 %v3656, %v3649
    %v4091 = vpack.c.b16 %v3664, %v3657
    %v4092 = vpack.c.b16 %v3665, %v3658
    %v4093 = vpack.c.b16 %v3666, %v3659
    %v4094 = vpack.c.b16 %v3667, %v3660
    %v4095 = vpack.c.b16 %v3668, %v3661
    %v4096 = vpack.c.b16 %v3669, %v3662
    %v4097 = vpack.c.b16 %v3670, %v3663
    %v4098 = vpack.c.b16 %v3678, %v3671
    %v4099 = vpack.c.b16 %v3679, %v3672
    %v4100 = vpack.c.b16 %v3680, %v3673
    %v4101 = vpack.c.b16 %v3681, %v3674
    %v4102 = vpack.c.b16 %v3682, %v3675
    %v4103 = vpack.c.b16 %v3683, %v3676
    %v4104 = vpack.c.b16 %v3684, %v3677
    %v4105 = vpack.c.b16 %v3692, %v3685
    %v4106 = vpack.c.b16 %v3693, %v3686
    %v4107 = vpack.c.b16 %v3694, %v3687
    %v4108 = vpack.c.b16 %v3695, %v3688
    %v4109 = vpack.c.b16 %v3696, %v3689
    %v4110 = vpack.c.b16 %v3697, %v3690
    %v4111 = vpack.c.b16 %v3698, %v3691
    %v4112 = vpack.c.b16 %v3706, %v3699
    %v4113 = vpack.c.b16 %v3707, %v3700
    %v4114 = vpack.c.b16 %v3708, %v3701
    %v4115 = vpack.c.b16 %v3709, %v3702
    %v4116 = vpack.c.b16 %v3710, %v3703
    %v4117 = vpack.c.b16 %v3711, %v3704
    %v4118 = vpack.c.b16 %v3712, %v3705
    %v4119 = vpack.c.b16 %v3720, %v3713
    %v4120 = vpack.c.b16 %v3721, %v3714
    %v4121 = vpack.c.b16 %v3722, %v3715
    %v4122 = vpack.c.b16 %v3723, %v3716
    %v4123 = vpack.c.b16 %v3724, %v3717
    %v4124 = vpack.c.b16 %v3725, %v3718
    %v4125 = vpack.c.b16 %v3726, %v3719
    %v4126 = vpack.c.b16 %v3734, %v3727
    %v4127 = vpack.c.b16 %v3735, %v3728
    %v4128 = vpack.c.b16 %v3736, %v3729
    %v4129 = vpack.c.b16 %v3737, %v3730
    %v4130 = vpack.c.b16 %v3738, %v3731
    %v4131 = vpack.c.b16 %v3739, %v3732
    %v4132 = vpack.c.b16 %v3740, %v3733
    %v4133 = vpack.c.b16 %v3748, %v3741
    %v4134 = vpack.c.b16 %v3749, %v3742
    %v4135 = vpack.c.b16 %v3750, %v3743
    %v4136 = vpack.c.b16 %v3751, %v3744
    %v4137 = vpack.c.b16 %v3752, %v3745
    %v4138 = vpack.c.b16 %v3753, %v3746
    %v4139 = vpack.c.b16 %v3754, %v3747
    %v4140 = vpack.c.b16 %v3762, %v3755
    %v4141 = vpack.c.b16 %v3763, %v3756
    %v4142 = vpack.c.b16 %v3764, %v3757
    %v4143 = vpack.c.b16 %v3765, %v3758
    %v4144 = vpack.c.b16 %v3766, %v3759
    %v4145 = vpack.c.b16 %v3767, %v3760
    %v4146 = vpack.c.b16 %v3768, %v3761
    %v4147 = vpack.c.b16 %v3776, %v3769
    %v4148 = vpack.c.b16 %v3777, %v3770
    %v4149 = vpack.c.b16 %v3778, %v3771
    %v4150 = vpack.c.b16 %v3779, %v3772
    %v4151 = vpack.c.b16 %v3780, %v3773
    %v4152 = vpack.c.b16 %v3781, %v3774
    %v4153 = vpack.c.b16 %v3782, %v3775
    %v4154 = vpack.c.b16 %v3790, %v3783
    %v4155 = vpack.c.b16 %v3791, %v3784
    %v4156 = vpack.c.b16 %v3792, %v3785
    %v4157 = vpack.c.b16 %v3793, %v3786
    %v4158 = vpack.c.b16 %v3794, %v3787
    %v4159 = vpack.c.b16 %v3795, %v3788
    %v4160 = vpack.c.b16 %v3796, %v3789
    %v4161 = vpack.c.b16 %v3804, %v3797
    %v4162 = vpack.c.b16 %v3805, %v3798
    %v4163 = vpack.c.b16 %v3806, %v3799
    %v4164 = vpack.c.b16 %v3807, %v3800
    %v4165 = vpack.c.b16 %v3808, %v3801
    %v4166 = vpack.c.b16 %v3809, %v3802
    %v4167 = vpack.c.b16 %v3810, %v3803
    %v4168 = vpack.c.b16 %v3818, %v3811
    %v4169 = vpack.c.b16 %v3819, %v3812
    %v4170 = vpack.c.b16 %v3820, %v3813
    %v4171 = vpack.c.b16 %v3821, %v3814
    %v4172 = vpack.c.b16 %v3822, %v3815
    %v4173 = vpack.c.b16 %v3823, %v3816
    %v4174 = vpack.c.b16 %v3824, %v3817
    %v4175 = vpack.c.b16 %v3832, %v3825
    %v4176 = vpack.c.b16 %v3833, %v3826
    %v4177 = vpack.c.b16 %v3834, %v3827
    %v4178 = vpack.c.b16 %v3835, %v3828
    %v4179 = vpack.c.b16 %v3836, %v3829
    %v4180 = vpack.c.b16 %v3837, %v3830
    %v4181 = vpack.c.b16 %v3838, %v3831
    %v4182 = vpack.c.b16 %v3846, %v3839
    %v4183 = vpack.c.b16 %v3847, %v3840
    %v4184 = vpack.c.b16 %v3848, %v3841
    %v4185 = vpack.c.b16 %v3849, %v3842
    %v4186 = vpack.c.b16 %v3850, %v3843
    %v4187 = vpack.c.b16 %v3851, %v3844
    %v4188 = vpack.c.b16 %v3852, %v3845
    %v4189 = vpack.c.b16 %v3860, %v3853
    %v4190 = vpack.c.b16 %v3861, %v3854
    %v4191 = vpack.c.b16 %v3862, %v3855
    %v4192 = vpack.c.b16 %v3863, %v3856
    %v4193 = vpack.c.b16 %v3864, %v3857
    %v4194 = vpack.c.b16 %v3865, %v3858
    %v4195 = vpack.c.b16 %v3866, %v3859
    %v4196 = vpack.c.b16 %v3874, %v3867
    %v4197 = vpack.c.b16 %v3875, %v3868
    %v4198 = vpack.c.b16 %v3876, %v3869
    %v4199 = vpack.c.b16 %v3877, %v3870
    %v4200 = vpack.c.b16 %v3878, %v3871
    %v4201 = vpack.c.b16 %v3879, %v3872
    %v4202 = vpack.c.b16 %v3880, %v3873
    %v4203 = vpack.c.b16 %v3888, %v3881
    %v4204 = vpack.c.b16 %v3889, %v3882
    %v4205 = vpack.c.b16 %v3890, %v3883
    %v4206 = vpack.c.b16 %v3891, %v3884
    %v4207 = vpack.c.b16 %v3892, %v3885
    %v4208 = vpack.c.b16 %v3893, %v3886
    %v4209 = vpack.c.b16 %v3894, %v3887
    %v4210 = vpack.c.b16 %v3902, %v3895
    %v4211 = vpack.c.b16 %v3903, %v3896
    %v4212 = vpack.c.b16 %v3904, %v3897
    %v4213 = vpack.c.b16 %v3905, %v3898
    %v4214 = vpack.c.b16 %v3906, %v3899
    %v4215 = vpack.c.b16 %v3907, %v3900
    %v4216 = vpack.c.b16 %v3908, %v3901
    %v4217 = vpack.c.b16 %v3916, %v3909
    %v4218 = vpack.c.b16 %v3917, %v3910
    %v4219 = vpack.c.b16 %v3918, %v3911
    %v4220 = vpack.c.b16 %v3919, %v3912
    %v4221 = vpack.c.b16 %v3920, %v3913
    %v4222 = vpack.c.b16 %v3921, %v3914
    %v4223 = vpack.c.b16 %v3922, %v3915
    %v4224 = vpack.c.b16 %v3930, %v3923
    %v4225 = vpack.c.b16 %v3931, %v3924
    %v4226 = vpack.c.b16 %v3932, %v3925
    %v4227 = vpack.c.b16 %v3933, %v3926
    %v4228 = vpack.c.b16 %v3934, %v3927
    %v4229 = vpack.c.b16 %v3935, %v3928
    %v4230 = vpack.c.b16 %v3936, %v3929
    %v4231 = vpack.c.b16 %v3944, %v3937
    %v4232 = vpack.c.b16 %v3945, %v3938
    %v4233 = vpack.c.b16 %v3946, %v3939
    %v4234 = vpack.c.b16 %v3947, %v3940
    %v4235 = vpack.c.b16 %v3948, %v3941
    %v4236 = vpack.c.b16 %v3949, %v3942
    %v4237 = vpack.c.b16 %v3950, %v3943
    %v4238 = vpack.c.b16 %v3958, %v3951
    %v4239 = vpack.c.b16 %v3959, %v3952
    %v4240 = vpack.c.b16 %v3960, %v3953
    %v4241 = vpack.c.b16 %v3961, %v3954
    %v4242 = vpack.c.b16 %v3962, %v3955
    %v4243 = vpack.c.b16 %v3963, %v3956
    %v4244 = vpack.c.b16 %v3964, %v3957
    %v4245 = vpack.c.b16 %v3972, %v3965
    %v4246 = vpack.c.b16 %v3973, %v3966
    %v4247 = vpack.c.b16 %v3974, %v3967
    %v4248 = vpack.c.b16 %v3975, %v3968
    %v4249 = vpack.c.b16 %v3976, %v3969
    %v4250 = vpack.c.b16 %v3977, %v3970
    %v4251 = vpack.c.b16 %v3978, %v3971
    %v4252 = vpack.c.b16 %v3986, %v3979
    %v4253 = vpack.c.b16 %v3987, %v3980
    %v4254 = vpack.c.b16 %v3988, %v3981
    %v4255 = vpack.c.b16 %v3989, %v3982
    %v4256 = vpack.c.b16 %v3990, %v3983
    %v4257 = vpack.c.b16 %v3991, %v3984
    %v4258 = vpack.c.b16 %v3992, %v3985
    %v4259 = vpack.c.b16 %v4000, %v3993
    %v4260 = vpack.c.b16 %v4001, %v3994
    %v4261 = vpack.c.b16 %v4002, %v3995
    %v4262 = vpack.c.b16 %v4003, %v3996
    %v4263 = vpack.c.b16 %v4004, %v3997
    %v4264 = vpack.c.b16 %v4005, %v3998
    %v4265 = vpack.c.b16 %v4006, %v3999
    %v4266 = vpack.c.b16 %v4014, %v4007
    %v4267 = vpack.c.b16 %v4015, %v4008
    %v4268 = vpack.c.b16 %v4016, %v4009
    %v4269 = vpack.c.b16 %v4017, %v4010
    %v4270 = vpack.c.b16 %v4018, %v4011
    %v4271 = vpack.c.b16 %v4019, %v4012
    %v4272 = vpack.c.b16 %v4020, %v4013
    %v4273 = vpack.c.b16 %v4028, %v4021
    %v4274 = vpack.c.b16 %v4029, %v4022
    %v4275 = vpack.c.b16 %v4030, %v4023
    %v4276 = vpack.c.b16 %v4031, %v4024
    %v4277 = vpack.c.b16 %v4032, %v4025
    %v4278 = vpack.c.b16 %v4033, %v4026
    %v4279 = vpack.c.b16 %v4034, %v4027
    %v4280 = vpack.c.b16 %v4042, %v4035
    %v4281 = vpack.c.b16 %v4043, %v4036
    %v4282 = vpack.c.b16 %v4044, %v4037
    %v4283 = vpack.c.b16 %v4045, %v4038
    %v4284 = vpack.c.b16 %v4046, %v4039
    %v4285 = vpack.c.b16 %v4047, %v4040
    %v4286 = vpack.c.b16 %v4048, %v4041
    %v4287 = vpack.c.b16 %v4056, %v4049
    %v4288 = vpack.c.b16 %v4057, %v4050
    %v4289 = vpack.c.b16 %v4058, %v4051
    %v4290 = vpack.c.b16 %v4059, %v4052
    %v4291 = vpack.c.b16 %v4060, %v4053
    %v4292 = vpack.c.b16 %v4061, %v4054
    %v4293 = vpack.c.b16 %v4062, %v4055
    %v4294 = vpack.c.b16 %v4070, %v4063
    %v4295 = vpack.c.b16 %v4071, %v4064
    %v4296 = vpack.c.b16 %v4072, %v4065
    %v4297 = vpack.c.b16 %v4073, %v4066
    %v4298 = vpack.c.b16 %v4074, %v4067
    %v4299 = vpack.c.b16 %v4075, %v4068
    %v4300 = vpack.c.b16 %v4076, %v4069
    %4525 = vmatprep.subr.bf16.mxu0 %v4078
    %4526 = vmatpush1.bf16.msra.mxu0 %v4077
    %4527 = vmatprep.subr.bf16.mxu0 %v4085
    %4528 = vmatpush1.bf16.msra.mxu0 %v4084
    %4529 = vmatprep.subr.bf16.mxu0 %v4092
    %4530 = vmatpush1.bf16.msra.mxu0 %v4091
    %4531 = vmatprep.subr.bf16.mxu0 %v4099
    %4532 = vmatpush1.bf16.msra.mxu0 %v4098
    %4533 = vmatprep.subr.bf16.mxu0 %v4106
    %4534 = vmatpush1.bf16.msra.mxu0 %v4105
    %4535 = vmatprep.subr.bf16.mxu0 %v4113
    %4536 = vmatpush1.bf16.msra.mxu0 %v4112
    %4537 = vmatprep.subr.bf16.mxu0 %v4120
    %4538 = vmatpush1.bf16.msra.mxu0 %v4119
    %4539 = vmatprep.subr.bf16.mxu0 %v4127
    %4540 = vmatpush1.bf16.msra.mxu0 %v4126
    %4541 = vmatprep.subr.bf16.mxu0 %v4134
    %4542 = vmatpush1.bf16.msra.mxu0 %v4133
    %4543 = vmatprep.subr.bf16.mxu0 %v4141
    %4544 = vmatpush1.bf16.msra.mxu0 %v4140
    %4545 = vmatprep.subr.bf16.mxu0 %v4148
    %4546 = vmatpush1.bf16.msra.mxu0 %v4147
    %4547 = vmatprep.subr.bf16.mxu0 %v4155
    %4548 = vmatpush1.bf16.msra.mxu0 %v4154
    %4549 = vmatprep.subr.bf16.mxu0 %v4162
    %4550 = vmatpush1.bf16.msra.mxu0 %v4161
    %4551 = vmatprep.subr.bf16.mxu0 %v4169
    %4552 = vmatpush1.bf16.msra.mxu0 %v4168
    %4553 = vmatprep.subr.bf16.mxu0 %v4176
    %4554 = vmatpush1.bf16.msra.mxu0 %v4175
    %4555 = vmatprep.subr.bf16.mxu0 %v4183
    %4556 = vmatpush1.bf16.msra.mxu0 %v4182
    %4557 = vmatprep.mubr.bf16.mxu0 %v3077
    %4558 = vmatmul.mubr.bf16.gmra.mrb[0].mxu0 %v3076
    %v4559 = vpop.f32.mrb[0].mxu0
    %v4560 = vadd.f32 %v3341, %v4559
    %v4561 = vpop.f32.mrb[0].mxu0
    %v4562 = vadd.f32 %v3345, %v4561
    %v4563 = vpop.f32.mrb[0].mxu0
    %v4564 = vpop.f32.mrb[0].mxu0
    %4565 = vdwg.mxu0
    %4566 = vmatprep.subr.bf16.mxu0 %v4190
    %4567 = vmatpush1.bf16.msra.mxu0 %v4189
    %4568 = vmatprep.subr.bf16.mxu0 %v4197
    %4569 = vmatpush1.bf16.msra.mxu0 %v4196
    %4570 = vmatprep.subr.bf16.mxu0 %v4204
    %4571 = vmatpush1.bf16.msra.mxu0 %v4203
    %4572 = vmatprep.subr.bf16.mxu0 %v4211
    %4573 = vmatpush1.bf16.msra.mxu0 %v4210
    %4574 = vmatprep.subr.bf16.mxu0 %v4218
    %4575 = vmatpush1.bf16.msra.mxu0 %v4217
    %4576 = vmatprep.subr.bf16.mxu0 %v4225
    %4577 = vmatpush1.bf16.msra.mxu0 %v4224
    %4578 = vmatprep.subr.bf16.mxu0 %v4232
    %4579 = vmatpush1.bf16.msra.mxu0 %v4231
    %4580 = vmatprep.subr.bf16.mxu0 %v4239
    %4581 = vmatpush1.bf16.msra.mxu0 %v4238
    %4582 = vmatprep.subr.bf16.mxu0 %v4246
    %4583 = vmatpush1.bf16.msra.mxu0 %v4245
    %4584 = vmatprep.subr.bf16.mxu0 %v4253
    %4585 = vmatpush1.bf16.msra.mxu0 %v4252
    %4586 = vmatprep.subr.bf16.mxu0 %v4260
    %4587 = vmatpush1.bf16.msra.mxu0 %v4259
    %4588 = vmatprep.subr.bf16.mxu0 %v4267
    %4589 = vmatpush1.bf16.msra.mxu0 %v4266
    %4590 = vmatprep.subr.bf16.mxu0 %v4274
    %4591 = vmatpush1.bf16.msra.mxu0 %v4273
    %4592 = vmatprep.subr.bf16.mxu0 %v4281
    %4593 = vmatpush1.bf16.msra.mxu0 %v4280
    %4594 = vmatprep.subr.bf16.mxu0 %v4288
    %4595 = vmatpush1.bf16.msra.mxu0 %v4287
    %4596 = vmatprep.subr.bf16.mxu0 %v4295
    %4597 = vmatpush1.bf16.msra.mxu0 %v4294
    %4598 = vmatprep.mubr.bf16.mxu0 %v3079
    %4599 = vmatmul.mubr.bf16.gmra.mrb[0].mxu0 %v3078
    %v4600 = vpop.f32.mrb[0].mxu0
    %v4601 = vadd.f32 %v4560, %v4600
    %v4602 = vpop.f32.mrb[0].mxu0
    %v4603 = vadd.f32 %v4562, %v4602
    %v4604 = vpop.f32.mrb[0].mxu0
    %v4605 = vpop.f32.mrb[0].mxu0
    %4606 = vdwg.mxu0
    %4607 = vmatprep.subr.bf16.mxu0 %v4080
    %4608 = vmatpush1.bf16.msra.mxu0 %v4079
    %4609 = vmatprep.subr.bf16.mxu0 %v4087
    %4610 = vmatpush1.bf16.msra.mxu0 %v4086
    %4611 = vmatprep.subr.bf16.mxu0 %v4094
    %4612 = vmatpush1.bf16.msra.mxu0 %v4093
    %4613 = vmatprep.subr.bf16.mxu0 %v4101
    %4614 = vmatpush1.bf16.msra.mxu0 %v4100
    %4615 = vmatprep.subr.bf16.mxu0 %v4108
    %4616 = vmatpush1.bf16.msra.mxu0 %v4107
    %4617 = vmatprep.subr.bf16.mxu0 %v4115
    %4618 = vmatpush1.bf16.msra.mxu0 %v4114
    %4619 = vmatprep.subr.bf16.mxu0 %v4122
    %4620 = vmatpush1.bf16.msra.mxu0 %v4121
    %4621 = vmatprep.subr.bf16.mxu0 %v4129
    %4622 = vmatpush1.bf16.msra.mxu0 %v4128
    %4623 = vmatprep.subr.bf16.mxu0 %v4136
    %4624 = vmatpush1.bf16.msra.mxu0 %v4135
    %4625 = vmatprep.subr.bf16.mxu0 %v4143
    %4626 = vmatpush1.bf16.msra.mxu0 %v4142
    %4627 = vmatprep.subr.bf16.mxu0 %v4150
    %4628 = vmatpush1.bf16.msra.mxu0 %v4149
    %4629 = vmatprep.subr.bf16.mxu0 %v4157
    %4630 = vmatpush1.bf16.msra.mxu0 %v4156
    %4631 = vmatprep.subr.bf16.mxu0 %v4164
    %4632 = vmatpush1.bf16.msra.mxu0 %v4163
    %4633 = vmatprep.subr.bf16.mxu0 %v4171
    %4634 = vmatpush1.bf16.msra.mxu0 %v4170
    %4635 = vmatprep.subr.bf16.mxu0 %v4178
    %4636 = vmatpush1.bf16.msra.mxu0 %v4177
    %4637 = vmatprep.subr.bf16.mxu0 %v4185
    %4638 = vmatpush1.bf16.msra.mxu0 %v4184
    %4639 = vmatprep.mubr.bf16.mxu0 %v3077
    %4640 = vmatmul.mubr.bf16.gmra.mrb[0].mxu0 %v3076
    %v4641 = vpop.f32.mrb[0].mxu0
    %v4642 = vadd.f32 %v3349, %v4641
    %v4643 = vpop.f32.mrb[0].mxu0
    %v4644 = vadd.f32 %v3353, %v4643
    %v4645 = vpop.f32.mrb[0].mxu0
    %v4646 = vpop.f32.mrb[0].mxu0
    %4647 = vdwg.mxu0
    %4648 = vmatprep.subr.bf16.mxu0 %v4192
    %4649 = vmatpush1.bf16.msra.mxu0 %v4191
    %4650 = vmatprep.subr.bf16.mxu0 %v4199
    %4651 = vmatpush1.bf16.msra.mxu0 %v4198
    %4652 = vmatprep.subr.bf16.mxu0 %v4206
    %4653 = vmatpush1.bf16.msra.mxu0 %v4205
    %4654 = vmatprep.subr.bf16.mxu0 %v4213
    %4655 = vmatpush1.bf16.msra.mxu0 %v4212
    %4656 = vmatprep.subr.bf16.mxu0 %v4220
    %4657 = vmatpush1.bf16.msra.mxu0 %v4219
    %4658 = vmatprep.subr.bf16.mxu0 %v4227
    %4659 = vmatpush1.bf16.msra.mxu0 %v4226
    %4660 = vmatprep.subr.bf16.mxu0 %v4234
    %4661 = vmatpush1.bf16.msra.mxu0 %v4233
    %4662 = vmatprep.subr.bf16.mxu0 %v4241
    %4663 = vmatpush1.bf16.msra.mxu0 %v4240
    %4664 = vmatprep.subr.bf16.mxu0 %v4248
    %4665 = vmatpush1.bf16.msra.mxu0 %v4247
    %4666 = vmatprep.subr.bf16.mxu0 %v4255
    %4667 = vmatpush1.bf16.msra.mxu0 %v4254
    %4668 = vmatprep.subr.bf16.mxu0 %v4262
    %4669 = vmatpush1.bf16.msra.mxu0 %v4261
    %4670 = vmatprep.subr.bf16.mxu0 %v4269
    %4671 = vmatpush1.bf16.msra.mxu0 %v4268
    %4672 = vmatprep.subr.bf16.mxu0 %v4276
    %4673 = vmatpush1.bf16.msra.mxu0 %v4275
    %4674 = vmatprep.subr.bf16.mxu0 %v4283
    %4675 = vmatpush1.bf16.msra.mxu0 %v4282
    %4676 = vmatprep.subr.bf16.mxu0 %v4290
    %4677 = vmatpush1.bf16.msra.mxu0 %v4289
    %4678 = vmatprep.subr.bf16.mxu0 %v4297
    %4679 = vmatpush1.bf16.msra.mxu0 %v4296
    %4680 = vmatprep.mubr.bf16.mxu0 %v3079
    %4681 = vmatmul.mubr.bf16.gmra.mrb[0].mxu0 %v3078
    %v4682 = vpop.f32.mrb[0].mxu0
    %v4683 = vadd.f32 %v4642, %v4682
    %v4684 = vpop.f32.mrb[0].mxu0
    %v4685 = vadd.f32 %v4644, %v4684
    %v4686 = vpop.f32.mrb[0].mxu0
    %v4687 = vpop.f32.mrb[0].mxu0
    %4688 = vdwg.mxu0
    %4689 = vmatprep.subr.bf16.mxu0 %v4082
    %4690 = vmatpush1.bf16.msra.mxu0 %v4081
    %4691 = vmatprep.subr.bf16.mxu0 %v4089
    %4692 = vmatpush1.bf16.msra.mxu0 %v4088
    %4693 = vmatprep.subr.bf16.mxu0 %v4096
    %4694 = vmatpush1.bf16.msra.mxu0 %v4095
    %4695 = vmatprep.subr.bf16.mxu0 %v4103
    %4696 = vmatpush1.bf16.msra.mxu0 %v4102
    %4697 = vmatprep.subr.bf16.mxu0 %v4110
    %4698 = vmatpush1.bf16.msra.mxu0 %v4109
    %4699 = vmatprep.subr.bf16.mxu0 %v4117
    %4700 = vmatpush1.bf16.msra.mxu0 %v4116
    %4701 = vmatprep.subr.bf16.mxu0 %v4124
    %4702 = vmatpush1.bf16.msra.mxu0 %v4123
    %4703 = vmatprep.subr.bf16.mxu0 %v4131
    %4704 = vmatpush1.bf16.msra.mxu0 %v4130
    %4705 = vmatprep.subr.bf16.mxu0 %v4138
    %4706 = vmatpush1.bf16.msra.mxu0 %v4137
    %4707 = vmatprep.subr.bf16.mxu0 %v4145
    %4708 = vmatpush1.bf16.msra.mxu0 %v4144
    %4709 = vmatprep.subr.bf16.mxu0 %v4152
    %4710 = vmatpush1.bf16.msra.mxu0 %v4151
    %4711 = vmatprep.subr.bf16.mxu0 %v4159
    %4712 = vmatpush1.bf16.msra.mxu0 %v4158
    %4713 = vmatprep.subr.bf16.mxu0 %v4166
    %4714 = vmatpush1.bf16.msra.mxu0 %v4165
    %4715 = vmatprep.subr.bf16.mxu0 %v4173
    %4716 = vmatpush1.bf16.msra.mxu0 %v4172
    %4717 = vmatprep.subr.bf16.mxu0 %v4180
    %4718 = vmatpush1.bf16.msra.mxu0 %v4179
    %4719 = vmatprep.subr.bf16.mxu0 %v4187
    %4720 = vmatpush1.bf16.msra.mxu0 %v4186
    %4721 = vmatprep.mubr.bf16.mxu0 %v3077
    %4722 = vmatmul.mubr.bf16.gmra.mrb[0].mxu0 %v3076
    %v4723 = vpop.f32.mrb[0].mxu0
    %v4724 = vadd.f32 %v3357, %v4723
    %v4725 = vpop.f32.mrb[0].mxu0
    %v4726 = vadd.f32 %v3361, %v4725
    %v4727 = vpop.f32.mrb[0].mxu0
    %v4728 = vpop.f32.mrb[0].mxu0
    %4729 = vdwg.mxu0
    %4730 = vmatprep.subr.bf16.mxu0 %v4194
    %4731 = vmatpush1.bf16.msra.mxu0 %v4193
    %4732 = vmatprep.subr.bf16.mxu0 %v4201
    %4733 = vmatpush1.bf16.msra.mxu0 %v4200
    %4734 = vmatprep.subr.bf16.mxu0 %v4208
    %4735 = vmatpush1.bf16.msra.mxu0 %v4207
    %4736 = vmatprep.subr.bf16.mxu0 %v4215
    %4737 = vmatpush1.bf16.msra.mxu0 %v4214
    %4738 = vmatprep.subr.bf16.mxu0 %v4222
    %4739 = vmatpush1.bf16.msra.mxu0 %v4221
    %4740 = vmatprep.subr.bf16.mxu0 %v4229
    %4741 = vmatpush1.bf16.msra.mxu0 %v4228
    %4742 = vmatprep.subr.bf16.mxu0 %v4236
    %4743 = vmatpush1.bf16.msra.mxu0 %v4235
    %4744 = vmatprep.subr.bf16.mxu0 %v4243
    %4745 = vmatpush1.bf16.msra.mxu0 %v4242
    %4746 = vmatprep.subr.bf16.mxu0 %v4250
    %4747 = vmatpush1.bf16.msra.mxu0 %v4249
    %4748 = vmatprep.subr.bf16.mxu0 %v4257
    %4749 = vmatpush1.bf16.msra.mxu0 %v4256
    %4750 = vmatprep.subr.bf16.mxu0 %v4264
    %4751 = vmatpush1.bf16.msra.mxu0 %v4263
    %4752 = vmatprep.subr.bf16.mxu0 %v4271
    %4753 = vmatpush1.bf16.msra.mxu0 %v4270
    %4754 = vmatprep.subr.bf16.mxu0 %v4278
    %4755 = vmatpush1.bf16.msra.mxu0 %v4277
    %4756 = vmatprep.subr.bf16.mxu0 %v4285
    %4757 = vmatpush1.bf16.msra.mxu0 %v4284
    %4758 = vmatprep.subr.bf16.mxu0 %v4292
    %4759 = vmatpush1.bf16.msra.mxu0 %v4291
    %4760 = vmatprep.subr.bf16.mxu0 %v4299
    %4761 = vmatpush1.bf16.msra.mxu0 %v4298
    %4762 = vmatprep.mubr.bf16.mxu0 %v3079
    %4763 = vmatmul.mubr.bf16.gmra.mrb[0].mxu0 %v3078
    %v4764 = vpop.f32.mrb[0].mxu0
    %v4765 = vadd.f32 %v4724, %v4764
    %v4766 = vpop.f32.mrb[0].mxu0
    %v4767 = vadd.f32 %v4726, %v4766
    %v4768 = vpop.f32.mrb[0].mxu0
    %v4769 = vpop.f32.mrb[0].mxu0
    %4770 = vdwg.mxu0
    %4771 = vmatprep.subr.bf16.mxu0 0
    %4772 = vmatpush1.bf16.msra.mxu0 %v4083
    %4773 = vmatprep.subr.bf16.mxu0 0
    %4774 = vmatpush1.bf16.msra.mxu0 %v4090
    %4775 = vmatprep.subr.bf16.mxu0 0
    %4776 = vmatpush1.bf16.msra.mxu0 %v4097
    %4777 = vmatprep.subr.bf16.mxu0 0
    %4778 = vmatpush1.bf16.msra.mxu0 %v4104
    %4779 = vmatprep.subr.bf16.mxu0 0
    %4780 = vmatpush1.bf16.msra.mxu0 %v4111
    %4781 = vmatprep.subr.bf16.mxu0 0
    %4782 = vmatpush1.bf16.msra.mxu0 %v4118
    %4783 = vmatprep.subr.bf16.mxu0 0
    %4784 = vmatpush1.bf16.msra.mxu0 %v4125
    %4785 = vmatprep.subr.bf16.mxu0 0
    %4786 = vmatpush1.bf16.msra.mxu0 %v4132
    %4787 = vmatprep.subr.bf16.mxu0 0
    %4788 = vmatpush1.bf16.msra.mxu0 %v4139
    %4789 = vmatprep.subr.bf16.mxu0 0
    %4790 = vmatpush1.bf16.msra.mxu0 %v4146
    %4791 = vmatprep.subr.bf16.mxu0 0
    %4792 = vmatpush1.bf16.msra.mxu0 %v4153
    %4793 = vmatprep.subr.bf16.mxu0 0
    %4794 = vmatpush1.bf16.msra.mxu0 %v4160
    %4795 = vmatprep.subr.bf16.mxu0 0
    %4796 = vmatpush1.bf16.msra.mxu0 %v4167
    %4797 = vmatprep.subr.bf16.mxu0 0
    %4798 = vmatpush1.bf16.msra.mxu0 %v4174
    %4799 = vmatprep.subr.bf16.mxu0 0
    %4800 = vmatpush1.bf16.msra.mxu0 %v4181
    %4801 = vmatprep.subr.bf16.mxu0 0
    %4802 = vmatpush1.bf16.msra.mxu0 %v4188
    %4803 = vmatprep.mubr.bf16.mxu0 %v3077
    %4804 = vmatmul.mubr.bf16.gmra.mrb[0].mxu0 %v3076
    %v4805 = vpop.f32.mrb[0].mxu0
    %v4806 = vadd.f32 %v3365, %v4805
    %v4807 = vpop.f32.mrb[0].mxu0
    %v4808 = vpop.f32.mrb[0].mxu0
    %v4809 = vpop.f32.mrb[0].mxu0
    %4810 = vdwg.mxu0
    %4811 = vmatprep.subr.bf16.mxu0 0
    %4812 = vmatpush1.bf16.msra.mxu0 %v4195
    %4813 = vmatprep.subr.bf16.mxu0 0
    %4814 = vmatpush1.bf16.msra.mxu0 %v4202
    %4815 = vmatprep.subr.bf16.mxu0 0
    %4816 = vmatpush1.bf16.msra.mxu0 %v4209
    %4817 = vmatprep.subr.bf16.mxu0 0
    %4818 = vmatpush1.bf16.msra.mxu0 %v4216
    %4819 = vmatprep.subr.bf16.mxu0 0
    %4820 = vmatpush1.bf16.msra.mxu0 %v4223
    %4821 = vmatprep.subr.bf16.mxu0 0
    %4822 = vmatpush1.bf16.msra.mxu0 %v4230
    %4823 = vmatprep.subr.bf16.mxu0 0
    %4824 = vmatpush1.bf16.msra.mxu0 %v4237
    %4825 = vmatprep.subr.bf16.mxu0 0
    %4826 = vmatpush1.bf16.msra.mxu0 %v4244
    %4827 = vmatprep.subr.bf16.mxu0 0
    %4828 = vmatpush1.bf16.msra.mxu0 %v4251
    %4829 = vmatprep.subr.bf16.mxu0 0
    %4830 = vmatpush1.bf16.msra.mxu0 %v4258
    %4831 = vmatprep.subr.bf16.mxu0 0
    %4832 = vmatpush1.bf16.msra.mxu0 %v4265
    %4833 = vmatprep.subr.bf16.mxu0 0
    %4834 = vmatpush1.bf16.msra.mxu0 %v4272
    %4835 = vmatprep.subr.bf16.mxu0 0
    %4836 = vmatpush1.bf16.msra.mxu0 %v4279
    %4837 = vmatprep.subr.bf16.mxu0 0
    %4838 = vmatpush1.bf16.msra.mxu0 %v4286
    %4839 = vmatprep.subr.bf16.mxu0 0
    %4840 = vmatpush1.bf16.msra.mxu0 %v4293
    %4841 = vmatprep.subr.bf16.mxu0 0
    %4842 = vmatpush1.bf16.msra.mxu0 %v4300
    %4843 = vmatprep.mubr.bf16.mxu0 %v3079
    %4844 = vmatmul.mubr.bf16.gmra.mrb[0].mxu0 %v3078
    %v4845 = vpop.f32.mrb[0].mxu0
    %v4846 = vadd.f32 %v4806, %v4845
    %v4847 = vpop.f32.mrb[0].mxu0
    %v4848 = vpop.f32.mrb[0].mxu0
    %v4849 = vpop.f32.mrb[0].mxu0
    %4850 = vdwg.mxu0
    %v4851 = vxor.u32 %v4601, 2147483648
    %v4852 = vxor.u32 %v4603, 2147483648
    %v4853 = vxor.u32 %v4683, 2147483648
    %v4854 = vxor.u32 %v4685, 2147483648
    %v4855 = vxor.u32 %v4765, 2147483648
    %v4856 = vxor.u32 %v4767, 2147483648
    %v4857 = vxor.u32 %v4846, 2147483648
    %v4858 = vmul.f32 %v4851, 1.442695
    %v4859 = vpow.pop %v4858
    %v4860 = vmul.f32 %v4852, 1.442695
    %v4861 = vpow.pop %v4860
    %v4862 = vmul.f32 %v4853, 1.442695
    %v4863 = vpow.pop %v4862
    %v4864 = vmul.f32 %v4854, 1.442695
    %v4865 = vpow.pop %v4864
    %v4866 = vmul.f32 %v4855, 1.442695
    %v4867 = vpow.pop %v4866
    %v4868 = vmul.f32 %v4856, 1.442695
    %v4869 = vpow.pop %v4868
    %v4870 = vmul.f32 %v4857, 1.442695
    %v4871 = vpow.pop %v4870
    %v4872 = vadd.f32 %v4859, 1.0
    %v4873 = vadd.f32 %v4861, 1.0
    %v4874 = vadd.f32 %v4863, 1.0
    %v4875 = vadd.f32 %v4865, 1.0
    %v4876 = vadd.f32 %v4867, 1.0
    %v4877 = vadd.f32 %v4869, 1.0
    %v4878 = vadd.f32 %v4871, 1.0
    %v4879 = vrcp.pop %v4872
    %v4880 = vmul.f32 1.0, %v4879
    %v4881 = vrcp.pop %v4873
    %v4882 = vmul.f32 1.0, %v4881
    %v4883 = vrcp.pop %v4874
    %v4884 = vmul.f32 1.0, %v4883
    %v4885 = vrcp.pop %v4875
    %v4886 = vmul.f32 1.0, %v4885
    %v4887 = vrcp.pop %v4876
    %v4888 = vmul.f32 1.0, %v4887
    %v4889 = vrcp.pop %v4877
    %v4890 = vmul.f32 1.0, %v4889
    %v4891 = vrcp.pop %v4878
    %v4892 = vmul.f32 1.0, %v4891
    %4893 = vst [vmem:[%s14] sm:$0xff] %v4880
    %4894 = vst [vmem:[%s14 + $0x8] sm:$0xff] %v4882
    %4895 = vst [vmem:[%s14 + $0x10] sm:$0xff] %v4884
    %4896 = vst [vmem:[%s14 + $0x18] sm:$0xff] %v4886
    %4897 = vst [vmem:[%s14 + $0x20] sm:$0xff] %v4888
    %4898 = vst [vmem:[%s14 + $0x28] sm:$0xff] %v4890
    %4899 = vst [vmem:[%s14 + $0x30] sm:$0xff] %v4892
    %4900 = vst [vmem:[%s15] sm:$0xff] %v2459
    // Predicated region
    $region70: #{vae_forward.1} parent=1 // pred_check
      _
    $region71: #{vae_forward.1} parent=1 // pred_check_branch
      %4902 = sbr.rel (0) target = $region73
    $region72: #{vae_forward.1} parent=1 // pred_region
      _
    $region73: #{vae_forward.1} parent=1 // pred_fallthru
      _
    // Predicated region
    $region74: #{vae_forward.1} parent=1 // pred_check
      _
    $region75: #{vae_forward.1} parent=1 // pred_check_branch
      %4904 = sbr.rel (0) target = $region77
    $region76: #{vae_forward.1} parent=1 // pred_region
      _
    $region77: #{vae_forward.1} parent=1 // pred_fallthru
      _
    // Predicated region
    $region78: #{vae_forward.1} parent=1 // pred_check
      _
    $region79: #{vae_forward.1} parent=1 // pred_check_branch
      %4906 = sbr.rel (0) target = $region81
    $region80: #{vae_forward.1} parent=1 // pred_region
      _
    $region81: #{vae_forward.1} parent=1 // pred_fallthru
      _
    // Predicated region
    $region82: #{vae_forward.1} parent=1 // pred_check
      _
    $region83: #{vae_forward.1} parent=1 // pred_check_branch
      %4908 = sbr.rel (0) target = $region85
    $region84: #{vae_forward.1} parent=1 // pred_region
      _
    $region85: #{vae_forward.1} parent=1 // pred_fallthru
      _
    %4909 = vsyncpa [#allocation3], 1
    %4910 = vsyncpa [#allocation5], 1

</llo_original>
